<compile_context>
chip_gen: v6e
topology: v6e:2x2x1
jax: 0.10.0
libtpu: 0.0.40
codegen_flags: <defaults>
</compile_context>

<pallas_src>
import numpy as np

import jax
import jax.numpy as jnp
from jax.experimental import pallas as pl
from jax.experimental.pallas import tpu as pltpu

# ----------------------------- small synthetic config -----------------------------
VOCAB = 256          # config.vocab_size
NUM_LAYERS = 2       # config.num_layers
MAX_SEQ = 16         # config.max_seq_len (== kv_cache_max)
D = 64               # config.embedding_dim
H = 4                # attn_config.num_heads
HD = 16              # attn_config.head_dim   (H * HD == D)
F = 128              # ff_config.intermediate_size
NUM_BUCKETS = 8      # relative_attention_num_buckets
MAX_DIST = 16        # relative_attention_max_distance
EPS = 1e-6           # RMSNorm epsilon
# lm_head_use_bias = False  (T5 default: no bias on lm_head)


# ----------------------------------- kernel helpers -----------------------------------


def _rms(x, w):
    """T5 RMSNorm: x * rsqrt(mean(x^2, -1) + eps) * weight.  w has shape (1, D)."""
    var = jnp.mean(x * x, axis=-1, keepdims=True)
    return x * jax.lax.rsqrt(var + EPS) * w


def _pack_heads(x):
    """(T, H*HD) -> (H*T, HD): head-major rows via sublane concatenation (no reshape)."""
    return jnp.concatenate([x[:, h * HD:(h + 1) * HD] for h in range(H)], axis=0)


def _unpack_heads(x, tq):
    """(H*T, HD) -> (T, H*HD): inverse of _pack_heads."""
    return jnp.concatenate([x[h * tq:(h + 1) * tq, :] for h in range(H)], axis=1)


def _mha_packed(q, k, v, bias):
    """All-head attention with heads packed into sublanes (T5 scale = 1.0).

    q:    (Tq, H*HD) f32        k, v: (Tk, H*HD) f32
    bias: (H*Tq, H*Tk) f32 with -inf on cross-head blocks and mask + position bias on the
          per-head diagonal blocks (precomputed in glue, lane-dense).
    Returns a lane-dense (Tq, H*HD) context.
    """
    tq = q.shape[0]
    qp = _pack_heads(q).astype(jnp.bfloat16)            # (H*Tq, HD)
    kp = _pack_heads(k).astype(jnp.bfloat16)            # (H*Tk, HD)
    vp = _pack_heads(v).astype(jnp.bfloat16)            # (H*Tk, HD)
    # One scores matmul for all heads; cross-head entries get killed by the -inf bias.
    s = jax.lax.dot_general(qp, kp, (((1,), (1,)), ((), ())),
                            preferred_element_type=jnp.float32)        # (H*Tq, H*Tk)
    s = s + bias
    m = jnp.max(s, axis=-1, keepdims=True)               # finite: every row has valid keys
    p = jnp.exp(s - m)                                    # cross-head -> exp(-inf) = 0
    denom = jnp.sum(p, axis=-1, keepdims=True)
    p = p * pl.reciprocal(denom, approx=True)
    ctx = jnp.dot(p.astype(jnp.bfloat16), vp, preferred_element_type=jnp.float32)  # (H*Tq, HD)
    return _unpack_heads(ctx, tq)                         # (Tq, H*HD)


# ----------------------------------- fused stack kernels -----------------------------------


def _enc_stack_kernel(x_ref, bias_ref, norms_ref, wa_ref, wff2_ref, fnorm_ref, o_ref):
    """One encoder layer per (b, l) grid step; hidden state carried in the resident output block."""
    l = pl.program_id(1)
    nl = pl.num_programs(1)

    @pl.when(l == 0)
    def _():
        o_ref[...] = x_ref[...]

    h = o_ref[0]                                          # (T, D) f32 residual stream
    norms = norms_ref[0]                                  # (2, D) f32: [attn_norm, ff_norm]
    wa = wa_ref[0]                                        # (D, 3D + D + F) bf16
    wqkv = wa[:, 0:3 * D]
    wo = wa[:, 3 * D:4 * D]
    wff1 = wa[:, 4 * D:4 * D + F]

    # --- self attention ---
    xn = _rms(h, norms[0:1, :]).astype(jnp.bfloat16)
    qkv = jnp.dot(xn, wqkv, preferred_element_type=jnp.float32)          # (T, 3D)
    ctx = _mha_packed(qkv[:, :D], qkv[:, D:2 * D], qkv[:, 2 * D:], bias_ref[0])
    h = h + jnp.dot(ctx.astype(jnp.bfloat16), wo, preferred_element_type=jnp.float32)

    # --- feed forward (ReLU MLP) ---
    fn = _rms(h, norms[1:2, :]).astype(jnp.bfloat16)
    mid = jnp.maximum(jnp.dot(fn, wff1, preferred_element_type=jnp.float32), 0.0)
    h = h + jnp.dot(mid.astype(jnp.bfloat16), wff2_ref[0], preferred_element_type=jnp.float32)

    @pl.when(l == nl - 1)
    def _():
        o_ref[0] = _rms(h, fnorm_ref[...])                # encoder final RMSNorm folded in

    @pl.when(l < nl - 1)
    def _():
        o_ref[0] = h


def _dec_stack_kernel(x_ref, sbias_ref, enc_ref, cbias_ref,
                      norms_ref, wa_ref, wff2_ref, fnorm_ref, head_ref,
                      h_ref, logits_ref):
    """One decoder layer per (b, l) grid step; final norm + scaled lm_head on the last layer."""
    l = pl.program_id(1)
    nl = pl.num_programs(1)

    @pl.when(l == 0)
    def _():
        h_ref[...] = x_ref[...]

    h = h_ref[0]                                          # (T, D) f32 residual stream
    norms = norms_ref[0]                                  # (3, D): [attn_norm, cross_norm, ff_norm]
    wa = wa_ref[0]                                        # (D, 8D + F) bf16
    wqkv = wa[:, 0:3 * D]
    wo = wa[:, 3 * D:4 * D]
    cwq = wa[:, 4 * D:5 * D]
    cwkv = wa[:, 5 * D:7 * D]
    cwo = wa[:, 7 * D:8 * D]
    wff1 = wa[:, 8 * D:8 * D + F]

    # --- self attention (causal mask + rel-pos bias already folded into sbias) ---
    xn = _rms(h, norms[0:1, :]).astype(jnp.bfloat16)
    qkv = jnp.dot(xn, wqkv, preferred_element_type=jnp.float32)          # (T, 3D)
    ctx = _mha_packed(qkv[:, :D], qkv[:, D:2 * D], qkv[:, 2 * D:], sbias_ref[0])
    h = h + jnp.dot(ctx.astype(jnp.bfloat16), wo, preferred_element_type=jnp.float32)

    # --- cross attention over encoder hidden states ---
    hn = _rms(h, norms[1:2, :]).astype(jnp.bfloat16)
    q = jnp.dot(hn, cwq, preferred_element_type=jnp.float32)             # (T, D)
    kv = jnp.dot(enc_ref[0].astype(jnp.bfloat16), cwkv,
                 preferred_element_type=jnp.float32)                     # (Tk, 2D)
    cctx = _mha_packed(q, kv[:, :D], kv[:, D:], cbias_ref[0])
    h = h + jnp.dot(cctx.astype(jnp.bfloat16), cwo, preferred_element_type=jnp.float32)

    # --- feed forward (ReLU MLP) ---
    fn = _rms(h, norms[2:3, :]).astype(jnp.bfloat16)
    mid = jnp.maximum(jnp.dot(fn, wff1, preferred_element_type=jnp.float32), 0.0)
    h = h + jnp.dot(mid.astype(jnp.bfloat16), wff2_ref[0], preferred_element_type=jnp.float32)

    h_ref[0] = h

    @pl.when(l == nl - 1)
    def _():
        # decoder final RMSNorm + (D**-0.5)-scaled lm_head (scale folded into weights at init)
        z = _rms(h, fnorm_ref[...]).astype(jnp.bfloat16)
        logits_ref[0] = jnp.dot(z, head_ref[...], preferred_element_type=jnp.float32)


# ----------------------------------- pallas_call wrappers -----------------------------------


def _bcast3(n_batch):
    """Index map for a (Bm, R, C) bias slab: per-batch if Bm>1 else broadcast block 0."""
    if n_batch == 1:
        return lambda b, l: (0, 0, 0)
    return lambda b, l: (b, 0, 0)


def encoder_stack_pallas(x, bias, p):
    B, T, Dm = x.shape
    L = p["norms"].shape[0]
    return pl.pallas_call(
        _enc_stack_kernel,
        out_shape=jax.ShapeDtypeStruct((B, T, Dm), jnp.float32),
        grid=(B, L),
        in_specs=[
            pl.BlockSpec((1, T, Dm), lambda b, l: (b, 0, 0)),                 # embeddings
            pl.BlockSpec((1,) + bias.shape[1:], _bcast3(bias.shape[0])),      # packed bias slab
            pl.BlockSpec((1,) + p["norms"].shape[1:], lambda b, l: (l, 0, 0)),
            pl.BlockSpec((1,) + p["wa"].shape[1:], lambda b, l: (l, 0, 0)),   # [wqkv|wo|wff1]
            pl.BlockSpec((1,) + p["wff2"].shape[1:], lambda b, l: (l, 0, 0)),
            pl.BlockSpec(p["final_norm"].shape, lambda b, l: (0, 0)),
        ],
        out_specs=pl.BlockSpec((1, T, Dm), lambda b, l: (b, 0, 0)),
        compiler_params=pltpu.CompilerParams(
            dimension_semantics=("parallel", "arbitrary")),
    )(x, bias, p["norms"], p["wa"], p["wff2"], p["final_norm"])


def decoder_stack_pallas(x, self_bias, enc_hidden, cross_bias, p, lm_head):
    B, T, Dm = x.shape
    Tk = enc_hidden.shape[1]
    L = p["norms"].shape[0]
    V = lm_head.shape[-1]
    hidden, logits = pl.pallas_call(
        _dec_stack_kernel,
        out_shape=(jax.ShapeDtypeStruct((B, T, Dm), jnp.float32),
                   jax.ShapeDtypeStruct((B, T, V), jnp.float32)),
        grid=(B, L),
        in_specs=[
            pl.BlockSpec((1, T, Dm), lambda b, l: (b, 0, 0)),                 # embeddings
            pl.BlockSpec((1,) + self_bias.shape[1:], _bcast3(self_bias.shape[0])),
            pl.BlockSpec((1, Tk, Dm), lambda b, l: (b, 0, 0)),                # encoder hidden
            pl.BlockSpec((1,) + cross_bias.shape[1:], _bcast3(cross_bias.shape[0])),
            pl.BlockSpec((1,) + p["norms"].shape[1:], lambda b, l: (l, 0, 0)),
            pl.BlockSpec((1,) + p["wa"].shape[1:], lambda b, l: (l, 0, 0)),   # packed weight slab
            pl.BlockSpec((1,) + p["wff2"].shape[1:], lambda b, l: (l, 0, 0)),
            pl.BlockSpec(p["final_norm"].shape, lambda b, l: (0, 0)),
            pl.BlockSpec(lm_head.shape, lambda b, l: (0, 0)),
        ],
        out_specs=(pl.BlockSpec((1, T, Dm), lambda b, l: (b, 0, 0)),
                   pl.BlockSpec((1, T, V), lambda b, l: (b, 0, 0))),
        compiler_params=pltpu.CompilerParams(
            dimension_semantics=("parallel", "arbitrary")),
    )(x, self_bias, enc_hidden, cross_bias,
      p["norms"], p["wa"], p["wff2"], p["final_norm"], lm_head)
    del hidden   # residual carrier; only the logits are needed
    return logits


# --------------------------------- model glue (plain JAX) ---------------------------------


def make_packed_bias(mask, rel_buckets, rel_bias):
    """Combine attention mask + relative-position bias into a lane-dense head-packed slab.

    mask:        (Bm, 1, Tq, Tk) additive mask (0 / -inf)
    rel_buckets: (1, 1, Tq, Tk) int32 or None
    rel_bias:    (NUM_BUCKETS, H) or None (layer-0 relative_attention_bias table)
    Returns (Bm, H*Tq, H*Tk) f32 where the (h, h) diagonal blocks hold mask + per-head bias and
    all cross-head blocks are -inf (so one softmax over the packed lane axis is exact per-head).
    Reused by every layer of the stack.
    """
    Bm, _, Tq, Tk = mask.shape
    if rel_bias is not None:
        pb = rel_bias[rel_buckets[0, 0]]                 # (Tq, Tk, H) embedding gather (glue)
        pb = jnp.transpose(pb, (2, 0, 1))                # (H, Tq, Tk)
    else:
        pb = jnp.zeros((H, Tq, Tk), jnp.float32)
    full = mask[:, 0][:, None, :, :] + pb[None]          # (Bm, H, Tq, Tk)
    eye = jnp.eye(H, dtype=bool)                         # (H, H')
    big = jnp.where(eye[None, :, None, :, None],         # (1, H, 1, H', 1)
                    full[:, :, :, None, :],              # (Bm, H, Tq, 1, Tk)
                    -jnp.inf)                            # (Bm, H, Tq, H', Tk)
    return big.reshape(Bm, H * Tq, H * Tk).astype(jnp.float32)


def t5_encoder(params, input_ids, mask, rel_buckets):
    h = params["tok_embedding"][input_ids]               # embedding gather (glue)
    enc_p = params["encoder"]
    bias = make_packed_bias(mask, rel_buckets, enc_p["rel_bias"])
    return encoder_stack_pallas(h, bias, enc_p)          # final RMSNorm folded into last layer


def t5_decoder(params, input_ids, mask, rel_buckets, enc_hidden, enc_mask):
    h = params["tok_embedding"][input_ids]               # embedding gather (glue)
    dec_p = params["decoder"]
    self_bias = make_packed_bias(mask, rel_buckets, dec_p["rel_bias"])
    cross_bias = make_packed_bias(enc_mask, None, None)  # encdec position bias stays zero
    return decoder_stack_pallas(h, self_bias, enc_hidden, cross_bias,
                                dec_p, params["lm_head_scaled"])


def t5_forward(params, consts, input_ids, input_pos,
               decoder_input_ids, decoder_input_pos, pad_mask):
    enc_cache = consts["enc_attn_mask_cache"]   # (1,1,MAX,MAX) zeros
    dec_cache = consts["dec_attn_mask_cache"]   # (1,1,MAX,MAX) causal (-inf above diag)
    enc_rel = consts["enc_rel_pos_mask"]        # (1,1,MAX,MAX) int32 buckets (bidirectional)

    enc_mask = enc_cache[:, :, input_pos, :][:, :, :, :MAX_SEQ] + pad_mask
    dec_mask = dec_cache[:, :, decoder_input_pos, :][:, :, :, :MAX_SEQ]
    enc_rel_pos = enc_rel[:, :, input_pos, :][:, :, :, :MAX_SEQ]
    # NOTE: reference code uses the *encoder* (bidirectional) bucket table for the decoder too.
    dec_rel_pos = enc_rel[:, :, decoder_input_pos, :][:, :, :, :MAX_SEQ]
    enc_attention_mask = enc_cache[:, :, decoder_input_pos, :] + pad_mask

    # TODO(synk): decoder KV-cache update is a no-op for full-length prefill (input_pos = arange),
    #             so it is elided rather than emulated.
    encoder_hidden_states = t5_encoder(params, input_ids, enc_mask, enc_rel_pos)
    lm_logits = t5_decoder(params, decoder_input_ids, dec_mask, dec_rel_pos,
                           encoder_hidden_states, enc_attention_mask)
    return lm_logits


# --------------------------------- params / constants ---------------------------------


def build_relative_position_buckets(query_length, key_length, bidirectional,
                                    num_buckets, max_distance):
    context_position = np.arange(query_length, dtype=np.int64)[:, None]
    memory_position = np.arange(key_length, dtype=np.int64)[None, :]
    relative_position = memory_position - context_position
    relative_buckets = np.zeros_like(relative_position)
    nb = num_buckets
    if bidirectional:
        nb = nb // 2
        relative_buckets += (relative_position > 0).astype(np.int64) * nb
        relative_position = np.abs(relative_position)
    else:
        relative_position = -np.minimum(relative_position, 0)
    max_exact = nb // 2
    is_small = relative_position < max_exact
    rp_large = max_exact + (
        np.log(np.maximum(relative_position, 1).astype(np.float32) / max_exact)
        / np.log(max_distance / max_exact) * (nb - max_exact)
    ).astype(np.int64)
    rp_large = np.minimum(rp_large, nb - 1)
    relative_buckets += np.where(is_small, relative_position, rp_large)
    return relative_buckets[None, None].astype(np.int32)   # (1,1,q,k)


def build_consts():
    causal = np.triu(np.full((MAX_SEQ, MAX_SEQ), -np.inf, dtype=np.float32), k=1)
    return {
        "enc_attn_mask_cache": jnp.zeros((1, 1, MAX_SEQ, MAX_SEQ), jnp.float32),
        "dec_attn_mask_cache": jnp.asarray(causal)[None, None],
        "enc_rel_pos_mask": jnp.asarray(build_relative_position_buckets(
            MAX_SEQ, MAX_SEQ, True, NUM_BUCKETS, MAX_DIST)),
        "dec_rel_pos_mask": jnp.asarray(build_relative_position_buckets(
            MAX_SEQ, MAX_SEQ, False, NUM_BUCKETS, MAX_DIST)),  # built but unused (matches ref)
    }


def init_params(key):
    keys = iter(jax.random.split(key, 64))

    def nrm(shape, scale=0.05):
        return scale * jax.random.normal(next(keys), shape, dtype=jnp.float32)

    def enc_layer():
        wa = jnp.concatenate([nrm((D, 3 * D)),      # wq | wk | wv fused
                              nrm((D, D)),          # wo
                              nrm((D, F))], axis=1)  # w_ff1
        return wa, nrm((F, D)), jnp.ones((2, D), jnp.float32)   # wa, w_ff2, [attn_norm; ff_norm]

    def dec_layer():
        wa = jnp.concatenate([nrm((D, 3 * D)),      # self wq | wk | wv
                              nrm((D, D)),          # self wo
                              nrm((D, D)),          # cross wq
                              nrm((D, 2 * D)),      # cross wk | wv fused
                              nrm((D, D)),          # cross wo
                              nrm((D, F))], axis=1)  # w_ff1
        return wa, nrm((F, D)), jnp.ones((3, D), jnp.float32)   # [attn; cross; ff] norms

    def stack(layer_fn):
        was, wff2s, norms = zip(*[layer_fn() for _ in range(NUM_LAYERS)])
        return {
            "wa": jnp.stack(was).astype(jnp.bfloat16),        # (L, D, .) per-layer weight slab
            "wff2": jnp.stack(wff2s).astype(jnp.bfloat16),    # (L, F, D)
            "norms": jnp.stack(norms),                        # (L, n_norms, D) f32
            "final_norm": jnp.ones((1, D), jnp.float32),
            "rel_bias": nrm((NUM_BUCKETS, H)),                # layer-0 relative_attention_bias
        }

    emb = nrm((VOCAB, D), scale=1.0)
    emb = emb.at[0].set(0.0)                                  # padding_idx = 0

    return {
        "tok_embedding": emb,                                 # shared by encoder and decoder
        "lm_head_scaled": (nrm((D, VOCAB)) * (D ** -0.5)).astype(jnp.bfloat16),  # no bias
        "encoder": stack(enc_layer),
        "decoder": stack(dec_layer),
    }


# ----------------------------------------- main -----------------------------------------

if __name__ == "__main__":
    root = jax.random.PRNGKey(0)
    k_params, k_enc_ids, k_dec_ids = jax.random.split(root, 3)

    params = init_params(k_params)
    consts = build_consts()

    B = 2
    input_ids = jax.random.randint(k_enc_ids, (B, MAX_SEQ), 1, VOCAB, dtype=jnp.int32)
    input_ids = input_ids.at[:, 12:].set(0)          # last 4 encoder positions are padding
    input_pos = jnp.arange(MAX_SEQ, dtype=jnp.int32)
    decoder_input_ids = jax.random.randint(k_dec_ids, (B, MAX_SEQ), 1, VOCAB, dtype=jnp.int32)
    decoder_input_pos = jnp.arange(MAX_SEQ, dtype=jnp.int32)
    pad_mask = jnp.zeros((1, 1, 1, MAX_SEQ), jnp.float32).at[..., 12:].set(-jnp.inf)

    fwd = jax.jit(t5_forward)
    logits = fwd(params, consts, input_ids, input_pos,
                 decoder_input_ids, decoder_input_pos, pad_mask)
    logits = jax.block_until_ready(logits)

    assert logits.shape == (B, MAX_SEQ, VOCAB), logits.shape
    assert bool(jnp.all(jnp.isfinite(logits)))
    print("KERNEL_OK")
</pallas_src>

<mosaic_0001>
module attributes {stable_mosaic.version = 11 : i64} {
  func.func @_enc_stack_kernel(%arg0: i32, %arg1: i32, %arg2: memref<1x16x64xf32, #tpu.memory_space<vmem>>, %arg3: memref<1x64x64xf32, #tpu.memory_space<vmem>>, %arg4: memref<1x2x64xf32, #tpu.memory_space<vmem>>, %arg5: memref<1x64x384xbf16, #tpu.memory_space<vmem>>, %arg6: memref<1x128x64xbf16, #tpu.memory_space<vmem>>, %arg7: memref<1x64xf32, #tpu.memory_space<vmem>>, %arg8: memref<1x16x64xf32, #tpu.memory_space<vmem>>) attributes {dimension_semantics = [#tpu.dimension_semantics<parallel>, #tpu.dimension_semantics<arbitrary>], iteration_bounds = array<i64: 2, 2>, scalar_prefetch = 0 : i64, scratch_operands = 0 : i64, tpu.core_type = #tpu.core_type<tc>, window_params = [{transform_indices = @transform_0, window_bounds = array<i64: 1, 16, 64>}, {pipeline_mode = #tpu.pipeline_mode<synchronous>, transform_indices = @transform_1, window_bounds = array<i64: 1, 64, 64>}, {transform_indices = @transform_2, window_bounds = array<i64: 1, 2, 64>}, {transform_indices = @transform_3, window_bounds = array<i64: 1, 64, 384>}, {transform_indices = @transform_4, window_bounds = array<i64: 1, 128, 64>}, {pipeline_mode = #tpu.pipeline_mode<synchronous>, transform_indices = @transform_5, window_bounds = array<i64: 1, 64>}, {transform_indices = @transform_6, window_bounds = array<i64: 1, 16, 64>}]} {
    %c0_i32 = arith.constant 0 : i32
    %0 = arith.cmpi eq, %arg1, %c0_i32 : i32
    %1 = arith.extui %0 : i1 to i32
    %c0_i32_0 = arith.constant 0 : i32
    %2 = arith.cmpi ne, %1, %c0_i32_0 : i32
    scf.if %2 {
      %c0_32 = arith.constant 0 : index
      %c0_33 = arith.constant 0 : index
      %c0_34 = arith.constant 0 : index
      %100 = vector.load %arg2[%c0_32, %c0_33, %c0_34] : memref<1x16x64xf32, #tpu.memory_space<vmem>>, vector<1x16x64xf32>
      %c0_35 = arith.constant 0 : index
      %c0_36 = arith.constant 0 : index
      %c0_37 = arith.constant 0 : index
      %101 = vector.load %arg8[%c0_35, %c0_36, %c0_37] : memref<1x16x64xf32, #tpu.memory_space<vmem>>, vector<1x16x64xf32>
      tpu.vector_store %arg8[%c0_35, %c0_36, %c0_37], %100 {strides = array<i32>} : memref<1x16x64xf32, #tpu.memory_space<vmem>>, vector<1x16x64xf32>,
    } else {
    }
    %c0 = arith.constant 0 : index
    %c0_1 = arith.constant 0 : index
    %c0_2 = arith.constant 0 : index
    %3 = vector.load %arg8[%c0, %c0_1, %c0_2] : memref<1x16x64xf32, #tpu.memory_space<vmem>>, vector<1x16x64xf32>
    %4 = vector.shape_cast %3 : vector<1x16x64xf32> to vector<16x64xf32>
    %c0_3 = arith.constant 0 : index
    %c0_4 = arith.constant 0 : index
    %c0_5 = arith.constant 0 : index
    %5 = vector.load %arg4[%c0_3, %c0_4, %c0_5] : memref<1x2x64xf32, #tpu.memory_space<vmem>>, vector<1x2x64xf32>
    %6 = vector.shape_cast %5 : vector<1x2x64xf32> to vector<2x64xf32>
    %c0_6 = arith.constant 0 : index
    %c0_7 = arith.constant 0 : index
    %c0_8 = arith.constant 0 : index
    %7 = vector.load %arg5[%c0_6, %c0_7, %c0_8] : memref<1x64x384xbf16, #tpu.memory_space<vmem>>, vector<1x64x384xbf16>
    %8 = vector.shape_cast %7 : vector<1x64x384xbf16> to vector<64x384xbf16>
    %9 = vector.extract_strided_slice %8 {offsets = [0, 0], sizes = [64, 192], strides = [1, 1]} : vector<64x384xbf16> to vector<64x192xbf16>
    %10 = vector.extract_strided_slice %8 {offsets = [0, 192], sizes = [64, 64], strides = [1, 1]} : vector<64x384xbf16> to vector<64x64xbf16>
    %11 = vector.extract_strided_slice %8 {offsets = [0, 256], sizes = [64, 128], strides = [1, 1]} : vector<64x384xbf16> to vector<64x128xbf16>
    %12 = vector.extract_strided_slice %6 {offsets = [0, 0], sizes = [1, 64], strides = [1, 1]} : vector<2x64xf32> to vector<1x64xf32>
    %13 = arith.mulf %4, %4 : vector<16x64xf32>
    %cst = arith.constant dense<0.000000e+00> : vector<16xf32>
    %14 = vector.multi_reduction <add>, %13, %cst [1] : vector<16x64xf32> to vector<16xf32>
    %15 = vector.shape_cast %14 : vector<16xf32> to vector<16x1xf32>
    %cst_9 = arith.constant 6.400000e+01 : f32
    %16 = vector.broadcast %cst_9 : f32 to vector<16x1xf32>
    %17 = arith.divf %15, %16 : vector<16x1xf32>
    %cst_10 = arith.constant 9.99999997E-7 : f32
    %18 = vector.broadcast %cst_10 : f32 to vector<16x1xf32>
    %19 = arith.addf %17, %18 : vector<16x1xf32>
    %20 = math.rsqrt %19 : vector<16x1xf32>
    %21 = vector.broadcast %20 : vector<16x1xf32> to vector<16x64xf32>
    %22 = arith.mulf %4, %21 : vector<16x64xf32>
    %23 = vector.broadcast %12 : vector<1x64xf32> to vector<16x64xf32>
    %24 = arith.mulf %22, %23 : vector<16x64xf32>
    %25 = arith.truncf %24 : vector<16x64xf32> to vector<16x64xbf16>
    %cst_11 = arith.constant dense<0.000000e+00> : vector<16x192xf32>
    %26 = tpu.matmul %25, %9, %cst_11 {dimension_numbers = #tpu.dot_dimension_numbers<[1], [0], [0], [1], [0, 0, 1, 1], [], []>} : vector<16x64xbf16>, vector<64x192xbf16>, vector<16x192xf32> -> vector<16x192xf32>
    %27 = vector.extract_strided_slice %26 {offsets = [0, 0], sizes = [16, 64], strides = [1, 1]} : vector<16x192xf32> to vector<16x64xf32>
    %28 = vector.extract_strided_slice %26 {offsets = [0, 64], sizes = [16, 64], strides = [1, 1]} : vector<16x192xf32> to vector<16x64xf32>
    %29 = vector.extract_strided_slice %26 {offsets = [0, 128], sizes = [16, 64], strides = [1, 1]} : vector<16x192xf32> to vector<16x64xf32>
    %c0_12 = arith.constant 0 : index
    %c0_13 = arith.constant 0 : index
    %c0_14 = arith.constant 0 : index
    %30 = vector.load %arg3[%c0_12, %c0_13, %c0_14] : memref<1x64x64xf32, #tpu.memory_space<vmem>>, vector<1x64x64xf32>
    %31 = vector.shape_cast %30 : vector<1x64x64xf32> to vector<64x64xf32>
    %32 = vector.extract_strided_slice %27 {offsets = [0, 0], sizes = [16, 16], strides = [1, 1]} : vector<16x64xf32> to vector<16x16xf32>
    %33 = vector.extract_strided_slice %27 {offsets = [0, 16], sizes = [16, 16], strides = [1, 1]} : vector<16x64xf32> to vector<16x16xf32>
    %34 = vector.extract_strided_slice %27 {offsets = [0, 32], sizes = [16, 16], strides = [1, 1]} : vector<16x64xf32> to vector<16x16xf32>
    %35 = vector.extract_strided_slice %27 {offsets = [0, 48], sizes = [16, 16], strides = [1, 1]} : vector<16x64xf32> to vector<16x16xf32>
    %36 = tpu.concatenate %32, %33, %34, %35 in 0 : vector<16x16xf32>, vector<16x16xf32>, vector<16x16xf32>, vector<16x16xf32> -> vector<64x16xf32>
    %37 = arith.truncf %36 : vector<64x16xf32> to vector<64x16xbf16>
    %38 = vector.extract_strided_slice %28 {offsets = [0, 0], sizes = [16, 16], strides = [1, 1]} : vector<16x64xf32> to vector<16x16xf32>
    %39 = vector.extract_strided_slice %28 {offsets = [0, 16], sizes = [16, 16], strides = [1, 1]} : vector<16x64xf32> to vector<16x16xf32>
    %40 = vector.extract_strided_slice %28 {offsets = [0, 32], sizes = [16, 16], strides = [1, 1]} : vector<16x64xf32> to vector<16x16xf32>
    %41 = vector.extract_strided_slice %28 {offsets = [0, 48], sizes = [16, 16], strides = [1, 1]} : vector<16x64xf32> to vector<16x16xf32>
    %42 = tpu.concatenate %38, %39, %40, %41 in 0 : vector<16x16xf32>, vector<16x16xf32>, vector<16x16xf32>, vector<16x16xf32> -> vector<64x16xf32>
    %43 = arith.truncf %42 : vector<64x16xf32> to vector<64x16xbf16>
    %44 = vector.extract_strided_slice %29 {offsets = [0, 0], sizes = [16, 16], strides = [1, 1]} : vector<16x64xf32> to vector<16x16xf32>
    %45 = vector.extract_strided_slice %29 {offsets = [0, 16], sizes = [16, 16], strides = [1, 1]} : vector<16x64xf32> to vector<16x16xf32>
    %46 = vector.extract_strided_slice %29 {offsets = [0, 32], sizes = [16, 16], strides = [1, 1]} : vector<16x64xf32> to vector<16x16xf32>
    %47 = vector.extract_strided_slice %29 {offsets = [0, 48], sizes = [16, 16], strides = [1, 1]} : vector<16x64xf32> to vector<16x16xf32>
    %48 = tpu.concatenate %44, %45, %46, %47 in 0 : vector<16x16xf32>, vector<16x16xf32>, vector<16x16xf32>, vector<16x16xf32> -> vector<64x16xf32>
    %49 = arith.truncf %48 : vector<64x16xf32> to vector<64x16xbf16>
    %cst_15 = arith.constant dense<0.000000e+00> : vector<64x64xf32>
    %50 = tpu.matmul %37, %43, %cst_15 {dimension_numbers = #tpu.dot_dimension_numbers<[1], [1], [0], [0], [0, 0, 1, 0], [], []>} : vector<64x16xbf16>, vector<64x16xbf16>, vector<64x64xf32> -> vector<64x64xf32>
    %51 = arith.addf %50, %31 : vector<64x64xf32>
    %cst_16 = arith.constant dense<0xFF800000> : vector<64xf32>
    %52 = vector.multi_reduction <maximumf>, %51, %cst_16 [1] : vector<64x64xf32> to vector<64xf32>
    %53 = vector.shape_cast %52 : vector<64xf32> to vector<64x1xf32>
    %54 = vector.broadcast %53 : vector<64x1xf32> to vector<64x64xf32>
    %55 = arith.subf %51, %54 : vector<64x64xf32>
    %56 = math.exp %55 : vector<64x64xf32>
    %cst_17 = arith.constant dense<0.000000e+00> : vector<64xf32>
    %57 = vector.multi_reduction <add>, %56, %cst_17 [1] : vector<64x64xf32> to vector<64xf32>
    %58 = vector.shape_cast %57 : vector<64xf32> to vector<64x1xf32>
    %59 = tpu.reciprocal %58 {approx = true} : vector<64x1xf32> -> vector<64x1xf32>
    %60 = vector.broadcast %59 : vector<64x1xf32> to vector<64x64xf32>
    %61 = arith.mulf %56, %60 : vector<64x64xf32>
    %62 = arith.truncf %61 : vector<64x64xf32> to vector<64x64xbf16>
    %cst_18 = arith.constant dense<0.000000e+00> : vector<64x16xf32>
    %63 = tpu.matmul %62, %49, %cst_18 {dimension_numbers = #tpu.dot_dimension_numbers<[1], [0], [0], [1], [0, 0, 1, 1], [], []>} : vector<64x64xbf16>, vector<64x16xbf16>, vector<64x16xf32> -> vector<64x16xf32>
    %64 = vector.extract_strided_slice %63 {offsets = [0, 0], sizes = [16, 16], strides = [1, 1]} : vector<64x16xf32> to vector<16x16xf32>
    %65 = vector.extract_strided_slice %63 {offsets = [16, 0], sizes = [16, 16], strides = [1, 1]} : vector<64x16xf32> to vector<16x16xf32>
    %66 = vector.extract_strided_slice %63 {offsets = [32, 0], sizes = [16, 16], strides = [1, 1]} : vector<64x16xf32> to vector<16x16xf32>
    %67 = vector.extract_strided_slice %63 {offsets = [48, 0], sizes = [16, 16], strides = [1, 1]} : vector<64x16xf32> to vector<16x16xf32>
    %68 = tpu.concatenate %64, %65, %66, %67 in 1 : vector<16x16xf32>, vector<16x16xf32>, vector<16x16xf32>, vector<16x16xf32> -> vector<16x64xf32>
    %69 = arith.truncf %68 : vector<16x64xf32> to vector<16x64xbf16>
    %cst_19 = arith.constant dense<0.000000e+00> : vector<16x64xf32>
    %70 = tpu.matmul %69, %10, %cst_19 {dimension_numbers = #tpu.dot_dimension_numbers<[1], [0], [0], [1], [0, 0, 1, 1], [], []>} : vector<16x64xbf16>, vector<64x64xbf16>, vector<16x64xf32> -> vector<16x64xf32>
    %71 = arith.addf %4, %70 : vector<16x64xf32>
    %72 = vector.extract_strided_slice %6 {offsets = [1, 0], sizes = [1, 64], strides = [1, 1]} : vector<2x64xf32> to vector<1x64xf32>
    %73 = arith.mulf %71, %71 : vector<16x64xf32>
    %cst_20 = arith.constant dense<0.000000e+00> : vector<16xf32>
    %74 = vector.multi_reduction <add>, %73, %cst_20 [1] : vector<16x64xf32> to vector<16xf32>
    %75 = vector.shape_cast %74 : vector<16xf32> to vector<16x1xf32>
    %cst_21 = arith.constant 6.400000e+01 : f32
    %76 = vector.broadcast %cst_21 : f32 to vector<16x1xf32>
    %77 = arith.divf %75, %76 : vector<16x1xf32>
    %cst_22 = arith.constant 9.99999997E-7 : f32
    %78 = vector.broadcast %cst_22 : f32 to vector<16x1xf32>
    %79 = arith.addf %77, %78 : vector<16x1xf32>
    %80 = math.rsqrt %79 : vector<16x1xf32>
    %81 = vector.broadcast %80 : vector<16x1xf32> to vector<16x64xf32>
    %82 = arith.mulf %71, %81 : vector<16x64xf32>
    %83 = vector.broadcast %72 : vector<1x64xf32> to vector<16x64xf32>
    %84 = arith.mulf %82, %83 : vector<16x64xf32>
    %85 = arith.truncf %84 : vector<16x64xf32> to vector<16x64xbf16>
    %cst_23 = arith.constant dense<0.000000e+00> : vector<16x128xf32>
    %86 = tpu.matmul %85, %11, %cst_23 {dimension_numbers = #tpu.dot_dimension_numbers<[1], [0], [0], [1], [0, 0, 1, 1], [], []>} : vector<16x64xbf16>, vector<64x128xbf16>, vector<16x128xf32> -> vector<16x128xf32>
    %cst_24 = arith.constant 0.000000e+00 : f32
    %87 = vector.broadcast %cst_24 : f32 to vector<16x128xf32>
    %88 = arith.maximumf %86, %87 : vector<16x128xf32>
    %89 = arith.truncf %88 : vector<16x128xf32> to vector<16x128xbf16>
    %c0_25 = arith.constant 0 : index
    %c0_26 = arith.constant 0 : index
    %c0_27 = arith.constant 0 : index
    %90 = vector.load %arg6[%c0_25, %c0_26, %c0_27] : memref<1x128x64xbf16, #tpu.memory_space<vmem>>, vector<1x128x64xbf16>
    %91 = vector.shape_cast %90 : vector<1x128x64xbf16> to vector<128x64xbf16>
    %cst_28 = arith.constant dense<0.000000e+00> : vector<16x64xf32>
    %92 = tpu.matmul %89, %91, %cst_28 {dimension_numbers = #tpu.dot_dimension_numbers<[1], [0], [0], [1], [0, 0, 1, 1], [], []>} : vector<16x128xbf16>, vector<128x64xbf16>, vector<16x64xf32> -> vector<16x64xf32>
    %93 = arith.addf %71, %92 : vector<16x64xf32>
    %c1_i32 = arith.constant 1 : i32
    %94 = arith.cmpi eq, %arg1, %c1_i32 : i32
    %95 = arith.extui %94 : i1 to i32
    %c0_i32_29 = arith.constant 0 : i32
    %96 = arith.cmpi ne, %95, %c0_i32_29 : i32
    scf.if %96 {
      %c0_32 = arith.constant 0 : index
      %c0_33 = arith.constant 0 : index
      %100 = vector.load %arg7[%c0_32, %c0_33] : memref<1x64xf32, #tpu.memory_space<vmem>>, vector<1x64xf32>
      %101 = arith.mulf %93, %93 : vector<16x64xf32>
      %cst_34 = arith.constant dense<0.000000e+00> : vector<16xf32>
      %102 = vector.multi_reduction <add>, %101, %cst_34 [1] : vector<16x64xf32> to vector<16xf32>
      %103 = vector.shape_cast %102 : vector<16xf32> to vector<16x1xf32>
      %cst_35 = arith.constant 6.400000e+01 : f32
      %104 = vector.broadcast %cst_35 : f32 to vector<16x1xf32>
      %105 = arith.divf %103, %104 : vector<16x1xf32>
      %cst_36 = arith.constant 9.99999997E-7 : f32
      %106 = vector.broadcast %cst_36 : f32 to vector<16x1xf32>
      %107 = arith.addf %105, %106 : vector<16x1xf32>
      %108 = math.rsqrt %107 : vector<16x1xf32>
      %109 = vector.broadcast %108 : vector<16x1xf32> to vector<16x64xf32>
      %110 = arith.mulf %93, %109 : vector<16x64xf32>
      %111 = vector.broadcast %100 : vector<1x64xf32> to vector<16x64xf32>
      %112 = arith.mulf %110, %111 : vector<16x64xf32>
      %c0_37 = arith.constant 0 : index
      %c0_38 = arith.constant 0 : index
      %c0_39 = arith.constant 0 : index
      %113 = vector.load %arg8[%c0_37, %c0_38, %c0_39] : memref<1x16x64xf32, #tpu.memory_space<vmem>>, vector<1x16x64xf32>
      %114 = vector.shape_cast %113 : vector<1x16x64xf32> to vector<16x64xf32>
      %115 = vector.shape_cast %112 : vector<16x64xf32> to vector<1x16x64xf32>
      tpu.vector_store %arg8[%c0_37, %c0_38, %c0_39], %115 {strides = array<i32>} : memref<1x16x64xf32, #tpu.memory_space<vmem>>, vector<1x16x64xf32>,
    } else {
    }
    %c1_i32_30 = arith.constant 1 : i32
    %97 = arith.cmpi slt, %arg1, %c1_i32_30 : i32
    %98 = arith.extui %97 : i1 to i32
    %c0_i32_31 = arith.constant 0 : i32
    %99 = arith.cmpi ne, %98, %c0_i32_31 : i32
    scf.if %99 {
      %c0_32 = arith.constant 0 : index
      %c0_33 = arith.constant 0 : index
      %c0_34 = arith.constant 0 : index
      %100 = vector.load %arg8[%c0_32, %c0_33, %c0_34] : memref<1x16x64xf32, #tpu.memory_space<vmem>>, vector<1x16x64xf32>
      %101 = vector.shape_cast %100 : vector<1x16x64xf32> to vector<16x64xf32>
      %102 = vector.shape_cast %93 : vector<16x64xf32> to vector<1x16x64xf32>
      tpu.vector_store %arg8[%c0_32, %c0_33, %c0_34], %102 {strides = array<i32>} : memref<1x16x64xf32, #tpu.memory_space<vmem>>, vector<1x16x64xf32>,
    } else {
    }
    return
  }
  func.func @transform_0(%arg0: i32, %arg1: i32) -> (i32, i32, i32) {
    %c0_i32 = arith.constant 0 : i32
    %c0_i32_0 = arith.constant 0 : i32
    %c0_i32_1 = arith.constant 0 : i32
    return %arg0, %c0_i32, %c0_i32_0 : i32, i32, i32
  }
  func.func @transform_1(%arg0: i32, %arg1: i32) -> (i32, i32, i32) {
    %c0_i32 = arith.constant 0 : i32
    %c0_i32_0 = arith.constant 0 : i32
    %c0_i32_1 = arith.constant 0 : i32
    %c0_i32_2 = arith.constant 0 : i32
    return %c0_i32, %c0_i32_0, %c0_i32_1 : i32, i32, i32
  }
  func.func @transform_2(%arg0: i32, %arg1: i32) -> (i32, i32, i32) {
    %c0_i32 = arith.constant 0 : i32
    %c0_i32_0 = arith.constant 0 : i32
    %c0_i32_1 = arith.constant 0 : i32
    return %arg1, %c0_i32, %c0_i32_0 : i32, i32, i32
  }
  func.func @transform_3(%arg0: i32, %arg1: i32) -> (i32, i32, i32) {
    %c0_i32 = arith.constant 0 : i32
    %c0_i32_0 = arith.constant 0 : i32
    %c0_i32_1 = arith.constant 0 : i32
    return %arg1, %c0_i32, %c0_i32_0 : i32, i32, i32
  }
  func.func @transform_4(%arg0: i32, %arg1: i32) -> (i32, i32, i32) {
    %c0_i32 = arith.constant 0 : i32
    %c0_i32_0 = arith.constant 0 : i32
    %c0_i32_1 = arith.constant 0 : i32
    return %arg1, %c0_i32, %c0_i32_0 : i32, i32, i32
  }
  func.func @transform_5(%arg0: i32, %arg1: i32) -> (i32, i32) {
    %c0_i32 = arith.constant 0 : i32
    %c0_i32_0 = arith.constant 0 : i32
    %c0_i32_1 = arith.constant 0 : i32
    return %c0_i32, %c0_i32_0 : i32, i32
  }
  func.func @transform_6(%arg0: i32, %arg1: i32) -> (i32, i32, i32) {
    %c0_i32 = arith.constant 0 : i32
    %c0_i32_0 = arith.constant 0 : i32
    %c0_i32_1 = arith.constant 0 : i32
    return %arg0, %c0_i32, %c0_i32_0 : i32, i32, i32
  }
}

module attributes {stable_mosaic.version = 11 : i64} {
  func.func @_dec_stack_kernel(%arg0: i32, %arg1: i32, %arg2: memref<1x16x64xf32, #tpu.memory_space<vmem>>, %arg3: memref<1x64x64xf32, #tpu.memory_space<vmem>>, %arg4: memref<1x16x64xf32, #tpu.memory_space<vmem>>, %arg5: memref<1x64x64xf32, #tpu.memory_space<vmem>>, %arg6: memref<1x3x64xf32, #tpu.memory_space<vmem>>, %arg7: memref<1x64x640xbf16, #tpu.memory_space<vmem>>, %arg8: memref<1x128x64xbf16, #tpu.memory_space<vmem>>, %arg9: memref<1x64xf32, #tpu.memory_space<vmem>>, %arg10: memref<64x256xbf16, #tpu.memory_space<vmem>>, %arg11: memref<1x16x64xf32, #tpu.memory_space<vmem>>, %arg12: memref<1x16x256xf32, #tpu.memory_space<vmem>>) attributes {dimension_semantics = [#tpu.dimension_semantics<parallel>, #tpu.dimension_semantics<arbitrary>], iteration_bounds = array<i64: 2, 2>, scalar_prefetch = 0 : i64, scratch_operands = 0 : i64, tpu.core_type = #tpu.core_type<tc>, window_params = [{transform_indices = @transform_0, window_bounds = array<i64: 1, 16, 64>}, {pipeline_mode = #tpu.pipeline_mode<synchronous>, transform_indices = @transform_1, window_bounds = array<i64: 1, 64, 64>}, {transform_indices = @transform_2, window_bounds = array<i64: 1, 16, 64>}, {pipeline_mode = #tpu.pipeline_mode<synchronous>, transform_indices = @transform_3, window_bounds = array<i64: 1, 64, 64>}, {transform_indices = @transform_4, window_bounds = array<i64: 1, 3, 64>}, {transform_indices = @transform_5, window_bounds = array<i64: 1, 64, 640>}, {transform_indices = @transform_6, window_bounds = array<i64: 1, 128, 64>}, {pipeline_mode = #tpu.pipeline_mode<synchronous>, transform_indices = @transform_7, window_bounds = array<i64: 1, 64>}, {pipeline_mode = #tpu.pipeline_mode<synchronous>, transform_indices = @transform_8, window_bounds = array<i64: 64, 256>}, {transform_indices = @transform_9, window_bounds = array<i64: 1, 16, 64>}, {transform_indices = @transform_10, window_bounds = array<i64: 1, 16, 256>}]} {
    %c0_i32 = arith.constant 0 : i32
    %0 = arith.cmpi eq, %arg1, %c0_i32 : i32
    %1 = arith.extui %0 : i1 to i32
    %c0_i32_0 = arith.constant 0 : i32
    %2 = arith.cmpi ne, %1, %c0_i32_0 : i32
    scf.if %2 {
      %c0_49 = arith.constant 0 : index
      %c0_50 = arith.constant 0 : index
      %c0_51 = arith.constant 0 : index
      %166 = vector.load %arg2[%c0_49, %c0_50, %c0_51] : memref<1x16x64xf32, #tpu.memory_space<vmem>>, vector<1x16x64xf32>
      %c0_52 = arith.constant 0 : index
      %c0_53 = arith.constant 0 : index
      %c0_54 = arith.constant 0 : index
      %167 = vector.load %arg11[%c0_52, %c0_53, %c0_54] : memref<1x16x64xf32, #tpu.memory_space<vmem>>, vector<1x16x64xf32>
      tpu.vector_store %arg11[%c0_52, %c0_53, %c0_54], %166 {strides = array<i32>} : memref<1x16x64xf32, #tpu.memory_space<vmem>>, vector<1x16x64xf32>,
    } else {
    }
    %c0 = arith.constant 0 : index
    %c0_1 = arith.constant 0 : index
    %c0_2 = arith.constant 0 : index
    %3 = vector.load %arg11[%c0, %c0_1, %c0_2] : memref<1x16x64xf32, #tpu.memory_space<vmem>>, vector<1x16x64xf32>
    %4 = vector.shape_cast %3 : vector<1x16x64xf32> to vector<16x64xf32>
    %c0_3 = arith.constant 0 : index
    %c0_4 = arith.constant 0 : index
    %c0_5 = arith.constant 0 : index
    %5 = vector.load %arg6[%c0_3, %c0_4, %c0_5] : memref<1x3x64xf32, #tpu.memory_space<vmem>>, vector<1x3x64xf32>
    %6 = vector.shape_cast %5 : vector<1x3x64xf32> to vector<3x64xf32>
    %c0_6 = arith.constant 0 : index
    %c0_7 = arith.constant 0 : index
    %c0_8 = arith.constant 0 : index
    %7 = vector.load %arg7[%c0_6, %c0_7, %c0_8] : memref<1x64x640xbf16, #tpu.memory_space<vmem>>, vector<1x64x640xbf16>
    %8 = vector.shape_cast %7 : vector<1x64x640xbf16> to vector<64x640xbf16>
    %9 = vector.extract_strided_slice %8 {offsets = [0, 0], sizes = [64, 192], strides = [1, 1]} : vector<64x640xbf16> to vector<64x192xbf16>
    %10 = vector.extract_strided_slice %8 {offsets = [0, 192], sizes = [64, 64], strides = [1, 1]} : vector<64x640xbf16> to vector<64x64xbf16>
    %11 = vector.extract_strided_slice %8 {offsets = [0, 256], sizes = [64, 64], strides = [1, 1]} : vector<64x640xbf16> to vector<64x64xbf16>
    %12 = vector.extract_strided_slice %8 {offsets = [0, 320], sizes = [64, 128], strides = [1, 1]} : vector<64x640xbf16> to vector<64x128xbf16>
    %13 = vector.extract_strided_slice %8 {offsets = [0, 448], sizes = [64, 64], strides = [1, 1]} : vector<64x640xbf16> to vector<64x64xbf16>
    %14 = vector.extract_strided_slice %8 {offsets = [0, 512], sizes = [64, 128], strides = [1, 1]} : vector<64x640xbf16> to vector<64x128xbf16>
    %15 = vector.extract_strided_slice %6 {offsets = [0, 0], sizes = [1, 64], strides = [1, 1]} : vector<3x64xf32> to vector<1x64xf32>
    %16 = arith.mulf %4, %4 : vector<16x64xf32>
    %cst = arith.constant dense<0.000000e+00> : vector<16xf32>
    %17 = vector.multi_reduction <add>, %16, %cst [1] : vector<16x64xf32> to vector<16xf32>
    %18 = vector.shape_cast %17 : vector<16xf32> to vector<16x1xf32>
    %cst_9 = arith.constant 6.400000e+01 : f32
    %19 = vector.broadcast %cst_9 : f32 to vector<16x1xf32>
    %20 = arith.divf %18, %19 : vector<16x1xf32>
    %cst_10 = arith.constant 9.99999997E-7 : f32
    %21 = vector.broadcast %cst_10 : f32 to vector<16x1xf32>
    %22 = arith.addf %20, %21 : vector<16x1xf32>
    %23 = math.rsqrt %22 : vector<16x1xf32>
    %24 = vector.broadcast %23 : vector<16x1xf32> to vector<16x64xf32>
    %25 = arith.mulf %4, %24 : vector<16x64xf32>
    %26 = vector.broadcast %15 : vector<1x64xf32> to vector<16x64xf32>
    %27 = arith.mulf %25, %26 : vector<16x64xf32>
    %28 = arith.truncf %27 : vector<16x64xf32> to vector<16x64xbf16>
    %cst_11 = arith.constant dense<0.000000e+00> : vector<16x192xf32>
    %29 = tpu.matmul %28, %9, %cst_11 {dimension_numbers = #tpu.dot_dimension_numbers<[1], [0], [0], [1], [0, 0, 1, 1], [], []>} : vector<16x64xbf16>, vector<64x192xbf16>, vector<16x192xf32> -> vector<16x192xf32>
    %30 = vector.extract_strided_slice %29 {offsets = [0, 0], sizes = [16, 64], strides = [1, 1]} : vector<16x192xf32> to vector<16x64xf32>
    %31 = vector.extract_strided_slice %29 {offsets = [0, 64], sizes = [16, 64], strides = [1, 1]} : vector<16x192xf32> to vector<16x64xf32>
    %32 = vector.extract_strided_slice %29 {offsets = [0, 128], sizes = [16, 64], strides = [1, 1]} : vector<16x192xf32> to vector<16x64xf32>
    %c0_12 = arith.constant 0 : index
    %c0_13 = arith.constant 0 : index
    %c0_14 = arith.constant 0 : index
    %33 = vector.load %arg3[%c0_12, %c0_13, %c0_14] : memref<1x64x64xf32, #tpu.memory_space<vmem>>, vector<1x64x64xf32>
    %34 = vector.shape_cast %33 : vector<1x64x64xf32> to vector<64x64xf32>
    %35 = vector.extract_strided_slice %30 {offsets = [0, 0], sizes = [16, 16], strides = [1, 1]} : vector<16x64xf32> to vector<16x16xf32>
    %36 = vector.extract_strided_slice %30 {offsets = [0, 16], sizes = [16, 16], strides = [1, 1]} : vector<16x64xf32> to vector<16x16xf32>
    %37 = vector.extract_strided_slice %30 {offsets = [0, 32], sizes = [16, 16], strides = [1, 1]} : vector<16x64xf32> to vector<16x16xf32>
    %38 = vector.extract_strided_slice %30 {offsets = [0, 48], sizes = [16, 16], strides = [1, 1]} : vector<16x64xf32> to vector<16x16xf32>
    %39 = tpu.concatenate %35, %36, %37, %38 in 0 : vector<16x16xf32>, vector<16x16xf32>, vector<16x16xf32>, vector<16x16xf32> -> vector<64x16xf32>
    %40 = arith.truncf %39 : vector<64x16xf32> to vector<64x16xbf16>
    %41 = vector.extract_strided_slice %31 {offsets = [0, 0], sizes = [16, 16], strides = [1, 1]} : vector<16x64xf32> to vector<16x16xf32>
    %42 = vector.extract_strided_slice %31 {offsets = [0, 16], sizes = [16, 16], strides = [1, 1]} : vector<16x64xf32> to vector<16x16xf32>
    %43 = vector.extract_strided_slice %31 {offsets = [0, 32], sizes = [16, 16], strides = [1, 1]} : vector<16x64xf32> to vector<16x16xf32>
    %44 = vector.extract_strided_slice %31 {offsets = [0, 48], sizes = [16, 16], strides = [1, 1]} : vector<16x64xf32> to vector<16x16xf32>
    %45 = tpu.concatenate %41, %42, %43, %44 in 0 : vector<16x16xf32>, vector<16x16xf32>, vector<16x16xf32>, vector<16x16xf32> -> vector<64x16xf32>
    %46 = arith.truncf %45 : vector<64x16xf32> to vector<64x16xbf16>
    %47 = vector.extract_strided_slice %32 {offsets = [0, 0], sizes = [16, 16], strides = [1, 1]} : vector<16x64xf32> to vector<16x16xf32>
    %48 = vector.extract_strided_slice %32 {offsets = [0, 16], sizes = [16, 16], strides = [1, 1]} : vector<16x64xf32> to vector<16x16xf32>
    %49 = vector.extract_strided_slice %32 {offsets = [0, 32], sizes = [16, 16], strides = [1, 1]} : vector<16x64xf32> to vector<16x16xf32>
    %50 = vector.extract_strided_slice %32 {offsets = [0, 48], sizes = [16, 16], strides = [1, 1]} : vector<16x64xf32> to vector<16x16xf32>
    %51 = tpu.concatenate %47, %48, %49, %50 in 0 : vector<16x16xf32>, vector<16x16xf32>, vector<16x16xf32>, vector<16x16xf32> -> vector<64x16xf32>
    %52 = arith.truncf %51 : vector<64x16xf32> to vector<64x16xbf16>
    %cst_15 = arith.constant dense<0.000000e+00> : vector<64x64xf32>
    %53 = tpu.matmul %40, %46, %cst_15 {dimension_numbers = #tpu.dot_dimension_numbers<[1], [1], [0], [0], [0, 0, 1, 0], [], []>} : vector<64x16xbf16>, vector<64x16xbf16>, vector<64x64xf32> -> vector<64x64xf32>
    %54 = arith.addf %53, %34 : vector<64x64xf32>
    %cst_16 = arith.constant dense<0xFF800000> : vector<64xf32>
    %55 = vector.multi_reduction <maximumf>, %54, %cst_16 [1] : vector<64x64xf32> to vector<64xf32>
    %56 = vector.shape_cast %55 : vector<64xf32> to vector<64x1xf32>
    %57 = vector.broadcast %56 : vector<64x1xf32> to vector<64x64xf32>
    %58 = arith.subf %54, %57 : vector<64x64xf32>
    %59 = math.exp %58 : vector<64x64xf32>
    %cst_17 = arith.constant dense<0.000000e+00> : vector<64xf32>
    %60 = vector.multi_reduction <add>, %59, %cst_17 [1] : vector<64x64xf32> to vector<64xf32>
    %61 = vector.shape_cast %60 : vector<64xf32> to vector<64x1xf32>
    %62 = tpu.reciprocal %61 {approx = true} : vector<64x1xf32> -> vector<64x1xf32>
    %63 = vector.broadcast %62 : vector<64x1xf32> to vector<64x64xf32>
    %64 = arith.mulf %59, %63 : vector<64x64xf32>
    %65 = arith.truncf %64 : vector<64x64xf32> to vector<64x64xbf16>
    %cst_18 = arith.constant dense<0.000000e+00> : vector<64x16xf32>
    %66 = tpu.matmul %65, %52, %cst_18 {dimension_numbers = #tpu.dot_dimension_numbers<[1], [0], [0], [1], [0, 0, 1, 1], [], []>} : vector<64x64xbf16>, vector<64x16xbf16>, vector<64x16xf32> -> vector<64x16xf32>
    %67 = vector.extract_strided_slice %66 {offsets = [0, 0], sizes = [16, 16], strides = [1, 1]} : vector<64x16xf32> to vector<16x16xf32>
    %68 = vector.extract_strided_slice %66 {offsets = [16, 0], sizes = [16, 16], strides = [1, 1]} : vector<64x16xf32> to vector<16x16xf32>
    %69 = vector.extract_strided_slice %66 {offsets = [32, 0], sizes = [16, 16], strides = [1, 1]} : vector<64x16xf32> to vector<16x16xf32>
    %70 = vector.extract_strided_slice %66 {offsets = [48, 0], sizes = [16, 16], strides = [1, 1]} : vector<64x16xf32> to vector<16x16xf32>
    %71 = tpu.concatenate %67, %68, %69, %70 in 1 : vector<16x16xf32>, vector<16x16xf32>, vector<16x16xf32>, vector<16x16xf32> -> vector<16x64xf32>
    %72 = arith.truncf %71 : vector<16x64xf32> to vector<16x64xbf16>
    %cst_19 = arith.constant dense<0.000000e+00> : vector<16x64xf32>
    %73 = tpu.matmul %72, %10, %cst_19 {dimension_numbers = #tpu.dot_dimension_numbers<[1], [0], [0], [1], [0, 0, 1, 1], [], []>} : vector<16x64xbf16>, vector<64x64xbf16>, vector<16x64xf32> -> vector<16x64xf32>
    %74 = arith.addf %4, %73 : vector<16x64xf32>
    %75 = vector.extract_strided_slice %6 {offsets = [1, 0], sizes = [1, 64], strides = [1, 1]} : vector<3x64xf32> to vector<1x64xf32>
    %76 = arith.mulf %74, %74 : vector<16x64xf32>
    %cst_20 = arith.constant dense<0.000000e+00> : vector<16xf32>
    %77 = vector.multi_reduction <add>, %76, %cst_20 [1] : vector<16x64xf32> to vector<16xf32>
    %78 = vector.shape_cast %77 : vector<16xf32> to vector<16x1xf32>
    %cst_21 = arith.constant 6.400000e+01 : f32
    %79 = vector.broadcast %cst_21 : f32 to vector<16x1xf32>
    %80 = arith.divf %78, %79 : vector<16x1xf32>
    %cst_22 = arith.constant 9.99999997E-7 : f32
    %81 = vector.broadcast %cst_22 : f32 to vector<16x1xf32>
    %82 = arith.addf %80, %81 : vector<16x1xf32>
    %83 = math.rsqrt %82 : vector<16x1xf32>
    %84 = vector.broadcast %83 : vector<16x1xf32> to vector<16x64xf32>
    %85 = arith.mulf %74, %84 : vector<16x64xf32>
    %86 = vector.broadcast %75 : vector<1x64xf32> to vector<16x64xf32>
    %87 = arith.mulf %85, %86 : vector<16x64xf32>
    %88 = arith.truncf %87 : vector<16x64xf32> to vector<16x64xbf16>
    %cst_23 = arith.constant dense<0.000000e+00> : vector<16x64xf32>
    %89 = tpu.matmul %88, %11, %cst_23 {dimension_numbers = #tpu.dot_dimension_numbers<[1], [0], [0], [1], [0, 0, 1, 1], [], []>} : vector<16x64xbf16>, vector<64x64xbf16>, vector<16x64xf32> -> vector<16x64xf32>
    %c0_24 = arith.constant 0 : index
    %c0_25 = arith.constant 0 : index
    %c0_26 = arith.constant 0 : index
    %90 = vector.load %arg4[%c0_24, %c0_25, %c0_26] : memref<1x16x64xf32, #tpu.memory_space<vmem>>, vector<1x16x64xf32>
    %91 = vector.shape_cast %90 : vector<1x16x64xf32> to vector<16x64xf32>
    %92 = arith.truncf %91 : vector<16x64xf32> to vector<16x64xbf16>
    %cst_27 = arith.constant dense<0.000000e+00> : vector<16x128xf32>
    %93 = tpu.matmul %92, %12, %cst_27 {dimension_numbers = #tpu.dot_dimension_numbers<[1], [0], [0], [1], [0, 0, 1, 1], [], []>} : vector<16x64xbf16>, vector<64x128xbf16>, vector<16x128xf32> -> vector<16x128xf32>
    %94 = vector.extract_strided_slice %93 {offsets = [0, 0], sizes = [16, 64], strides = [1, 1]} : vector<16x128xf32> to vector<16x64xf32>
    %95 = vector.extract_strided_slice %93 {offsets = [0, 64], sizes = [16, 64], strides = [1, 1]} : vector<16x128xf32> to vector<16x64xf32>
    %c0_28 = arith.constant 0 : index
    %c0_29 = arith.constant 0 : index
    %c0_30 = arith.constant 0 : index
    %96 = vector.load %arg5[%c0_28, %c0_29, %c0_30] : memref<1x64x64xf32, #tpu.memory_space<vmem>>, vector<1x64x64xf32>
    %97 = vector.shape_cast %96 : vector<1x64x64xf32> to vector<64x64xf32>
    %98 = vector.extract_strided_slice %89 {offsets = [0, 0], sizes = [16, 16], strides = [1, 1]} : vector<16x64xf32> to vector<16x16xf32>
    %99 = vector.extract_strided_slice %89 {offsets = [0, 16], sizes = [16, 16], strides = [1, 1]} : vector<16x64xf32> to vector<16x16xf32>
    %100 = vector.extract_strided_slice %89 {offsets = [0, 32], sizes = [16, 16], strides = [1, 1]} : vector<16x64xf32> to vector<16x16xf32>
    %101 = vector.extract_strided_slice %89 {offsets = [0, 48], sizes = [16, 16], strides = [1, 1]} : vector<16x64xf32> to vector<16x16xf32>
    %102 = tpu.concatenate %98, %99, %100, %101 in 0 : vector<16x16xf32>, vector<16x16xf32>, vector<16x16xf32>, vector<16x16xf32> -> vector<64x16xf32>
    %103 = arith.truncf %102 : vector<64x16xf32> to vector<64x16xbf16>
    %104 = vector.extract_strided_slice %94 {offsets = [0, 0], sizes = [16, 16], strides = [1, 1]} : vector<16x64xf32> to vector<16x16xf32>
    %105 = vector.extract_strided_slice %94 {offsets = [0, 16], sizes = [16, 16], strides = [1, 1]} : vector<16x64xf32> to vector<16x16xf32>
    %106 = vector.extract_strided_slice %94 {offsets = [0, 32], sizes = [16, 16], strides = [1, 1]} : vector<16x64xf32> to vector<16x16xf32>
    %107 = vector.extract_strided_slice %94 {offsets = [0, 48], sizes = [16, 16], strides = [1, 1]} : vector<16x64xf32> to vector<16x16xf32>
    %108 = tpu.concatenate %104, %105, %106, %107 in 0 : vector<16x16xf32>, vector<16x16xf32>, vector<16x16xf32>, vector<16x16xf32> -> vector<64x16xf32>
    %109 = arith.truncf %108 : vector<64x16xf32> to vector<64x16xbf16>
    %110 = vector.extract_strided_slice %95 {offsets = [0, 0], sizes = [16, 16], strides = [1, 1]} : vector<16x64xf32> to vector<16x16xf32>
    %111 = vector.extract_strided_slice %95 {offsets = [0, 16], sizes = [16, 16], strides = [1, 1]} : vector<16x64xf32> to vector<16x16xf32>
    %112 = vector.extract_strided_slice %95 {offsets = [0, 32], sizes = [16, 16], strides = [1, 1]} : vector<16x64xf32> to vector<16x16xf32>
    %113 = vector.extract_strided_slice %95 {offsets = [0, 48], sizes = [16, 16], strides = [1, 1]} : vector<16x64xf32> to vector<16x16xf32>
    %114 = tpu.concatenate %110, %111, %112, %113 in 0 : vector<16x16xf32>, vector<16x16xf32>, vector<16x16xf32>, vector<16x16xf32> -> vector<64x16xf32>
    %115 = arith.truncf %114 : vector<64x16xf32> to vector<64x16xbf16>
    %cst_31 = arith.constant dense<0.000000e+00> : vector<64x64xf32>
    %116 = tpu.matmul %103, %109, %cst_31 {dimension_numbers = #tpu.dot_dimension_numbers<[1], [1], [0], [0], [0, 0, 1, 0], [], []>} : vector<64x16xbf16>, vector<64x16xbf16>, vector<64x64xf32> -> vector<64x64xf32>
    %117 = arith.addf %116, %97 : vector<64x64xf32>
    %cst_32 = arith.constant dense<0xFF800000> : vector<64xf32>
    %118 = vector.multi_reduction <maximumf>, %117, %cst_32 [1] : vector<64x64xf32> to vector<64xf32>
    %119 = vector.shape_cast %118 : vector<64xf32> to vector<64x1xf32>
    %120 = vector.broadcast %119 : vector<64x1xf32> to vector<64x64xf32>
    %121 = arith.subf %117, %120 : vector<64x64xf32>
    %122 = math.exp %121 : vector<64x64xf32>
    %cst_33 = arith.constant dense<0.000000e+00> : vector<64xf32>
    %123 = vector.multi_reduction <add>, %122, %cst_33 [1] : vector<64x64xf32> to vector<64xf32>
    %124 = vector.shape_cast %123 : vector<64xf32> to vector<64x1xf32>
    %125 = tpu.reciprocal %124 {approx = true} : vector<64x1xf32> -> vector<64x1xf32>
    %126 = vector.broadcast %125 : vector<64x1xf32> to vector<64x64xf32>
    %127 = arith.mulf %122, %126 : vector<64x64xf32>
    %128 = arith.truncf %127 : vector<64x64xf32> to vector<64x64xbf16>
    %cst_34 = arith.constant dense<0.000000e+00> : vector<64x16xf32>
    %129 = tpu.matmul %128, %115, %cst_34 {dimension_numbers = #tpu.dot_dimension_numbers<[1], [0], [0], [1], [0, 0, 1, 1], [], []>} : vector<64x64xbf16>, vector<64x16xbf16>, vector<64x16xf32> -> vector<64x16xf32>
    %130 = vector.extract_strided_slice %129 {offsets = [0, 0], sizes = [16, 16], strides = [1, 1]} : vector<64x16xf32> to vector<16x16xf32>
    %131 = vector.extract_strided_slice %129 {offsets = [16, 0], sizes = [16, 16], strides = [1, 1]} : vector<64x16xf32> to vector<16x16xf32>
    %132 = vector.extract_strided_slice %129 {offsets = [32, 0], sizes = [16, 16], strides = [1, 1]} : vector<64x16xf32> to vector<16x16xf32>
    %133 = vector.extract_strided_slice %129 {offsets = [48, 0], sizes = [16, 16], strides = [1, 1]} : vector<64x16xf32> to vector<16x16xf32>
    %134 = tpu.concatenate %130, %131, %132, %133 in 1 : vector<16x16xf32>, vector<16x16xf32>, vector<16x16xf32>, vector<16x16xf32> -> vector<16x64xf32>
    %135 = arith.truncf %134 : vector<16x64xf32> to vector<16x64xbf16>
    %cst_35 = arith.constant dense<0.000000e+00> : vector<16x64xf32>
    %136 = tpu.matmul %135, %13, %cst_35 {dimension_numbers = #tpu.dot_dimension_numbers<[1], [0], [0], [1], [0, 0, 1, 1], [], []>} : vector<16x64xbf16>, vector<64x64xbf16>, vector<16x64xf32> -> vector<16x64xf32>
    %137 = arith.addf %74, %136 : vector<16x64xf32>
    %138 = vector.extract_strided_slice %6 {offsets = [2, 0], sizes = [1, 64], strides = [1, 1]} : vector<3x64xf32> to vector<1x64xf32>
    %139 = arith.mulf %137, %137 : vector<16x64xf32>
    %cst_36 = arith.constant dense<0.000000e+00> : vector<16xf32>
    %140 = vector.multi_reduction <add>, %139, %cst_36 [1] : vector<16x64xf32> to vector<16xf32>
    %141 = vector.shape_cast %140 : vector<16xf32> to vector<16x1xf32>
    %cst_37 = arith.constant 6.400000e+01 : f32
    %142 = vector.broadcast %cst_37 : f32 to vector<16x1xf32>
    %143 = arith.divf %141, %142 : vector<16x1xf32>
    %cst_38 = arith.constant 9.99999997E-7 : f32
    %144 = vector.broadcast %cst_38 : f32 to vector<16x1xf32>
    %145 = arith.addf %143, %144 : vector<16x1xf32>
    %146 = math.rsqrt %145 : vector<16x1xf32>
    %147 = vector.broadcast %146 : vector<16x1xf32> to vector<16x64xf32>
    %148 = arith.mulf %137, %147 : vector<16x64xf32>
    %149 = vector.broadcast %138 : vector<1x64xf32> to vector<16x64xf32>
    %150 = arith.mulf %148, %149 : vector<16x64xf32>
    %151 = arith.truncf %150 : vector<16x64xf32> to vector<16x64xbf16>
    %cst_39 = arith.constant dense<0.000000e+00> : vector<16x128xf32>
    %152 = tpu.matmul %151, %14, %cst_39 {dimension_numbers = #tpu.dot_dimension_numbers<[1], [0], [0], [1], [0, 0, 1, 1], [], []>} : vector<16x64xbf16>, vector<64x128xbf16>, vector<16x128xf32> -> vector<16x128xf32>
    %cst_40 = arith.constant 0.000000e+00 : f32
    %153 = vector.broadcast %cst_40 : f32 to vector<16x128xf32>
    %154 = arith.maximumf %152, %153 : vector<16x128xf32>
    %155 = arith.truncf %154 : vector<16x128xf32> to vector<16x128xbf16>
    %c0_41 = arith.constant 0 : index
    %c0_42 = arith.constant 0 : index
    %c0_43 = arith.constant 0 : index
    %156 = vector.load %arg8[%c0_41, %c0_42, %c0_43] : memref<1x128x64xbf16, #tpu.memory_space<vmem>>, vector<1x128x64xbf16>
    %157 = vector.shape_cast %156 : vector<1x128x64xbf16> to vector<128x64xbf16>
    %cst_44 = arith.constant dense<0.000000e+00> : vector<16x64xf32>
    %158 = tpu.matmul %155, %157, %cst_44 {dimension_numbers = #tpu.dot_dimension_numbers<[1], [0], [0], [1], [0, 0, 1, 1], [], []>} : vector<16x128xbf16>, vector<128x64xbf16>, vector<16x64xf32> -> vector<16x64xf32>
    %159 = arith.addf %137, %158 : vector<16x64xf32>
    %c0_45 = arith.constant 0 : index
    %c0_46 = arith.constant 0 : index
    %c0_47 = arith.constant 0 : index
    %160 = vector.load %arg11[%c0_45, %c0_46, %c0_47] : memref<1x16x64xf32, #tpu.memory_space<vmem>>, vector<1x16x64xf32>
    %161 = vector.shape_cast %160 : vector<1x16x64xf32> to vector<16x64xf32>
    %162 = vector.shape_cast %159 : vector<16x64xf32> to vector<1x16x64xf32>
    tpu.vector_store %arg11[%c0_45, %c0_46, %c0_47], %162 {strides = array<i32>} : memref<1x16x64xf32, #tpu.memory_space<vmem>>, vector<1x16x64xf32>,
    %c1_i32 = arith.constant 1 : i32
    %163 = arith.cmpi eq, %arg1, %c1_i32 : i32
    %164 = arith.extui %163 : i1 to i32
    %c0_i32_48 = arith.constant 0 : i32
    %165 = arith.cmpi ne, %164, %c0_i32_48 : i32
    scf.if %165 {
      %c0_49 = arith.constant 0 : index
      %c0_50 = arith.constant 0 : index
      %166 = vector.load %arg9[%c0_49, %c0_50] : memref<1x64xf32, #tpu.memory_space<vmem>>, vector<1x64xf32>
      %167 = arith.mulf %159, %159 : vector<16x64xf32>
      %cst_51 = arith.constant dense<0.000000e+00> : vector<16xf32>
      %168 = vector.multi_reduction <add>, %167, %cst_51 [1] : vector<16x64xf32> to vector<16xf32>
      %169 = vector.shape_cast %168 : vector<16xf32> to vector<16x1xf32>
      %cst_52 = arith.constant 6.400000e+01 : f32
      %170 = vector.broadcast %cst_52 : f32 to vector<16x1xf32>
      %171 = arith.divf %169, %170 : vector<16x1xf32>
      %cst_53 = arith.constant 9.99999997E-7 : f32
      %172 = vector.broadcast %cst_53 : f32 to vector<16x1xf32>
      %173 = arith.addf %171, %172 : vector<16x1xf32>
      %174 = math.rsqrt %173 : vector<16x1xf32>
      %175 = vector.broadcast %174 : vector<16x1xf32> to vector<16x64xf32>
      %176 = arith.mulf %159, %175 : vector<16x64xf32>
      %177 = vector.broadcast %166 : vector<1x64xf32> to vector<16x64xf32>
      %178 = arith.mulf %176, %177 : vector<16x64xf32>
      %179 = arith.truncf %178 : vector<16x64xf32> to vector<16x64xbf16>
      %c0_54 = arith.constant 0 : index
      %c0_55 = arith.constant 0 : index
      %180 = vector.load %arg10[%c0_54, %c0_55] : memref<64x256xbf16, #tpu.memory_space<vmem>>, vector<64x256xbf16>
      %cst_56 = arith.constant dense<0.000000e+00> : vector<16x256xf32>
      %181 = tpu.matmul %179, %180, %cst_56 {dimension_numbers = #tpu.dot_dimension_numbers<[1], [0], [0], [1], [0, 0, 1, 1], [], []>} : vector<16x64xbf16>, vector<64x256xbf16>, vector<16x256xf32> -> vector<16x256xf32>
      %c0_57 = arith.constant 0 : index
      %c0_58 = arith.constant 0 : index
      %c0_59 = arith.constant 0 : index
      %182 = vector.load %arg12[%c0_57, %c0_58, %c0_59] : memref<1x16x256xf32, #tpu.memory_space<vmem>>, vector<1x16x256xf32>
      %183 = vector.shape_cast %182 : vector<1x16x256xf32> to vector<16x256xf32>
      %184 = vector.shape_cast %181 : vector<16x256xf32> to vector<1x16x256xf32>
      tpu.vector_store %arg12[%c0_57, %c0_58, %c0_59], %184 {strides = array<i32>} : memref<1x16x256xf32, #tpu.memory_space<vmem>>, vector<1x16x256xf32>,
    } else {
    }
    return
  }
  func.func @transform_0(%arg0: i32, %arg1: i32) -> (i32, i32, i32) {
    %c0_i32 = arith.constant 0 : i32
    %c0_i32_0 = arith.constant 0 : i32
    %c0_i32_1 = arith.constant 0 : i32
    return %arg0, %c0_i32, %c0_i32_0 : i32, i32, i32
  }
  func.func @transform_1(%arg0: i32, %arg1: i32) -> (i32, i32, i32) {
    %c0_i32 = arith.constant 0 : i32
    %c0_i32_0 = arith.constant 0 : i32
    %c0_i32_1 = arith.constant 0 : i32
    %c0_i32_2 = arith.constant 0 : i32
    return %c0_i32, %c0_i32_0, %c0_i32_1 : i32, i32, i32
  }
  func.func @transform_2(%arg0: i32, %arg1: i32) -> (i32, i32, i32) {
    %c0_i32 = arith.constant 0 : i32
    %c0_i32_0 = arith.constant 0 : i32
    %c0_i32_1 = arith.constant 0 : i32
    return %arg0, %c0_i32, %c0_i32_0 : i32, i32, i32
  }
  func.func @transform_3(%arg0: i32, %arg1: i32) -> (i32, i32, i32) {
    %c0_i32 = arith.constant 0 : i32
    %c0_i32_0 = arith.constant 0 : i32
    %c0_i32_1 = arith.constant 0 : i32
    %c0_i32_2 = arith.constant 0 : i32
    return %c0_i32, %c0_i32_0, %c0_i32_1 : i32, i32, i32
  }
  func.func @transform_4(%arg0: i32, %arg1: i32) -> (i32, i32, i32) {
    %c0_i32 = arith.constant 0 : i32
    %c0_i32_0 = arith.constant 0 : i32
    %c0_i32_1 = arith.constant 0 : i32
    return %arg1, %c0_i32, %c0_i32_0 : i32, i32, i32
  }
  func.func @transform_5(%arg0: i32, %arg1: i32) -> (i32, i32, i32) {
    %c0_i32 = arith.constant 0 : i32
    %c0_i32_0 = arith.constant 0 : i32
    %c0_i32_1 = arith.constant 0 : i32
    return %arg1, %c0_i32, %c0_i32_0 : i32, i32, i32
  }
  func.func @transform_6(%arg0: i32, %arg1: i32) -> (i32, i32, i32) {
    %c0_i32 = arith.constant 0 : i32
    %c0_i32_0 = arith.constant 0 : i32
    %c0_i32_1 = arith.constant 0 : i32
    return %arg1, %c0_i32, %c0_i32_0 : i32, i32, i32
  }
  func.func @transform_7(%arg0: i32, %arg1: i32) -> (i32, i32) {
    %c0_i32 = arith.constant 0 : i32
    %c0_i32_0 = arith.constant 0 : i32
    %c0_i32_1 = arith.constant 0 : i32
    return %c0_i32, %c0_i32_0 : i32, i32
  }
  func.func @transform_8(%arg0: i32, %arg1: i32) -> (i32, i32) {
    %c0_i32 = arith.constant 0 : i32
    %c0_i32_0 = arith.constant 0 : i32
    %c0_i32_1 = arith.constant 0 : i32
    return %c0_i32, %c0_i32_0 : i32, i32
  }
  func.func @transform_9(%arg0: i32, %arg1: i32) -> (i32, i32, i32) {
    %c0_i32 = arith.constant 0 : i32
    %c0_i32_0 = arith.constant 0 : i32
    %c0_i32_1 = arith.constant 0 : i32
    return %arg0, %c0_i32, %c0_i32_0 : i32, i32, i32
  }
  func.func @transform_10(%arg0: i32, %arg1: i32) -> (i32, i32, i32) {
    %c0_i32 = arith.constant 0 : i32
    %c0_i32_0 = arith.constant 0 : i32
    %c0_i32_1 = arith.constant 0 : i32
    return %arg0, %c0_i32, %c0_i32_0 : i32, i32, i32
  }
}

</mosaic_0001>

<llo_original>
// kernel: t5_forward.2
$region0: #{t5_forward.2}
  #allocation0 [shape = 'u32[]', space=smem, size = 0x4, offset = 0x4, fixed_abs, tag = 'smem constant byte address 0x4 - core index']
  #allocation1 [shape = 'u32[144,128]{1,0:T(1,128)}', space=vmem, size = 0x12000, scoped, tag = 'internal scratch']
  %s0 = inlined_call_operand.vmem [shape: f32[2,16,64], index: 0, kind: input, shape index: {}]
  %s1 = inlined_call_operand.vmem [shape: f32[1,64,64], index: 1, kind: input, shape index: {}]
  %s2 = inlined_call_operand.vmem [shape: f32[2,2,64], index: 2, kind: input, shape index: {}]
  %s3 = inlined_call_operand.vmem [shape: bf16[2,64,384], index: 3, kind: input, shape index: {}]
  %s4 = inlined_call_operand.vmem [shape: bf16[2,128,64], index: 4, kind: input, shape index: {}]
  %s5 = inlined_call_operand.vmem [shape: f32[1,64], index: 5, kind: input, shape index: {}]
  %s6 = inlined_call_operand.vmem [shape: f32[2,16,64], index: 6, kind: output, shape index: {}]
  %s7 = sld [smem:[#allocation0]]
  $region69: #{t5_forward.2} parent=0
    _
  %s9 = ssub.s32 1, %s7
  %s10 = scalar_select 0, %s9, %s7
  loop: start=0, step=1, limit=6
  $region2: #{t5_forward.2} parent=0 // loop_pre_header
    _
  $region3: #{t5_forward.2} parent=0 // loop_header
    %s12 = sphi 0, %s16
    %p13 = scmp.ge.s32.totalorder %s12, 6
    %s19 = sphi 0, %s31
    %s20 = sphi 0, %s27
    %s21 = sphi 0, %s19
    %s22 = sphi 0, %s20
    %s23 = sphi 0, %s21
    %s24 = sphi 0, %s22
    %s34 = sphi 0, %s36
    %s37 = sphi 0, %s34
    %s38 = sphi 0, %s37
    %s54 = sphi 0, %s38
    %s58 = sphi 0, %s58
    %s60 = sphi 0, %s58
    %s61 = sphi 0, %s60
    %s75 = sphi 0, %s61
    %s81 = sphi 0, %s83
    %s84 = sphi 0, %s81
    %s85 = sphi 0, %s84
    %s101 = sphi 0, %s85
    %s107 = sphi 0, %s109
    %s110 = sphi 0, %s107
    %s111 = sphi 0, %s110
    %s127 = sphi 0, %s111
    %s133 = sphi 0, %s135
    %s136 = sphi 0, %s133
    %s137 = sphi 0, %s136
    %s153 = sphi 0, %s137
    %s157 = sphi 0, %s157
    %s159 = sphi 0, %s157
    %s160 = sphi 0, %s159
    %s174 = sphi 0, %s160
    %s180 = sphi 0, %s182
    %s183 = sphi 0, %s180
    %s184 = sphi 0, %s183
    %s200 = sphi 0, %s184
  $region4: #{t5_forward.2} parent=0 // loop_header_branch
    %15 = sbr.rel (%p13) target = $region8
  $region5: #{t5_forward.2} parent=0 // loop_body
    %s17 = ssub.s32 %s12, 1
    %s18 = ssub.s32 %s12, 2
    %s25 = sadd.s32 1, %s20
    %p26 = scmp.ge.s32.totalorder %s25, 2
    %s27 = scalar_select %p26, 0, %s25
    %s28 = sadd.s32 1, %s19
    %s29 = scalar_select %p26, %s28, %s19
    %p30 = scmp.ge.s32.totalorder %s29, 2
    %s31 = scalar_select %p30, 0, %s29
    %s32 = ssub.s32 %s19, %s31
    %p33 = scmp.eq.s32.totalorder %s32, 0
    %s35 = sadd.s32 %s34, 1
    %s36 = scalar_select %p33, %s34, %s35
    %p39 = pneg %p33
    %p40 = scmp.eq.s32.totalorder %s12, 3
    %p41 = por %p39, %p40
    %p42 = scmp.ne.s32.totalorder %s34, %s37
    %p43 = scmp.eq.s32.totalorder %s12, 0
    %p44 = por %p42, %p43
    %p45 = scmp.ne.s32.totalorder %s34, %s37
    %p46 = scmp.eq.s32.totalorder %s17, 3
    %p47 = por %p45, %p46
    %p48 = scmp.ne.s32.totalorder %s37, %s38
    %p49 = scmp.eq.s32.totalorder %s17, 0
    %p50 = por %p48, %p49
    %p51 = scmp.ne.s32.totalorder %s37, %s38
    %p52 = scmp.eq.s32.totalorder %s18, 3
    %p53 = por %p51, %p52
    %p55 = scmp.ne.s32.totalorder %s38, %s54
    %p56 = scmp.eq.s32.totalorder %s18, 0
    %p57 = por %p55, %p56
    %s59 = sadd.s32 %s58, 1
    %p62 = scmp.eq.s32.totalorder %s12, 3
    %p63 = scmp.ne.s32.totalorder %s58, %s60
    %p64 = scmp.eq.s32.totalorder %s12, 0
    %p65 = por %p63, %p64
    %p66 = scmp.ne.s32.totalorder %s58, %s60
    %p67 = scmp.eq.s32.totalorder %s17, 3
    %p68 = por %p66, %p67
    %p69 = scmp.ne.s32.totalorder %s60, %s61
    %p70 = scmp.eq.s32.totalorder %s17, 0
    %p71 = por %p69, %p70
    %p72 = scmp.ne.s32.totalorder %s60, %s61
    %p73 = scmp.eq.s32.totalorder %s18, 3
    %p74 = por %p72, %p73
    %p76 = scmp.ne.s32.totalorder %s61, %s75
    %p77 = scmp.eq.s32.totalorder %s18, 0
    %p78 = por %p76, %p77
    %s79 = ssub.s32 %s20, %s27
    %p80 = scmp.eq.s32.totalorder %s79, 0
    %s82 = sadd.s32 %s81, 1
    %s83 = scalar_select %p80, %s81, %s82
    %p86 = pneg %p80
    %p87 = scmp.eq.s32.totalorder %s12, 3
    %p88 = por %p86, %p87
    %p89 = scmp.ne.s32.totalorder %s81, %s84
    %p90 = scmp.eq.s32.totalorder %s12, 0
    %p91 = por %p89, %p90
    %p92 = scmp.ne.s32.totalorder %s81, %s84
    %p93 = scmp.eq.s32.totalorder %s17, 3
    %p94 = por %p92, %p93
    %p95 = scmp.ne.s32.totalorder %s84, %s85
    %p96 = scmp.eq.s32.totalorder %s17, 0
    %p97 = por %p95, %p96
    %p98 = scmp.ne.s32.totalorder %s84, %s85
    %p99 = scmp.eq.s32.totalorder %s18, 3
    %p100 = por %p98, %p99
    %p102 = scmp.ne.s32.totalorder %s85, %s101
    %p103 = scmp.eq.s32.totalorder %s18, 0
    %p104 = por %p102, %p103
    %s105 = ssub.s32 %s20, %s27
    %p106 = scmp.eq.s32.totalorder %s105, 0
    %s108 = sadd.s32 %s107, 1
    %s109 = scalar_select %p106, %s107, %s108
    %p112 = pneg %p106
    %p113 = scmp.eq.s32.totalorder %s12, 3
    %p114 = por %p112, %p113
    %p115 = scmp.ne.s32.totalorder %s107, %s110
    %p116 = scmp.eq.s32.totalorder %s12, 0
    %p117 = por %p115, %p116
    %p118 = scmp.ne.s32.totalorder %s107, %s110
    %p119 = scmp.eq.s32.totalorder %s17, 3
    %p120 = por %p118, %p119
    %p121 = scmp.ne.s32.totalorder %s110, %s111
    %p122 = scmp.eq.s32.totalorder %s17, 0
    %p123 = por %p121, %p122
    %p124 = scmp.ne.s32.totalorder %s110, %s111
    %p125 = scmp.eq.s32.totalorder %s18, 3
    %p126 = por %p124, %p125
    %p128 = scmp.ne.s32.totalorder %s111, %s127
    %p129 = scmp.eq.s32.totalorder %s18, 0
    %p130 = por %p128, %p129
    %s131 = ssub.s32 %s20, %s27
    %p132 = scmp.eq.s32.totalorder %s131, 0
    %s134 = sadd.s32 %s133, 1
    %s135 = scalar_select %p132, %s133, %s134
    %p138 = pneg %p132
    %p139 = scmp.eq.s32.totalorder %s12, 3
    %p140 = por %p138, %p139
    %p141 = scmp.ne.s32.totalorder %s133, %s136
    %p142 = scmp.eq.s32.totalorder %s12, 0
    %p143 = por %p141, %p142
    %p144 = scmp.ne.s32.totalorder %s133, %s136
    %p145 = scmp.eq.s32.totalorder %s17, 3
    %p146 = por %p144, %p145
    %p147 = scmp.ne.s32.totalorder %s136, %s137
    %p148 = scmp.eq.s32.totalorder %s17, 0
    %p149 = por %p147, %p148
    %p150 = scmp.ne.s32.totalorder %s136, %s137
    %p151 = scmp.eq.s32.totalorder %s18, 3
    %p152 = por %p150, %p151
    %p154 = scmp.ne.s32.totalorder %s137, %s153
    %p155 = scmp.eq.s32.totalorder %s18, 0
    %p156 = por %p154, %p155
    %s158 = sadd.s32 %s157, 1
    %p161 = scmp.eq.s32.totalorder %s12, 3
    %p162 = scmp.ne.s32.totalorder %s157, %s159
    %p163 = scmp.eq.s32.totalorder %s12, 0
    %p164 = por %p162, %p163
    %p165 = scmp.ne.s32.totalorder %s157, %s159
    %p166 = scmp.eq.s32.totalorder %s17, 3
    %p167 = por %p165, %p166
    %p168 = scmp.ne.s32.totalorder %s159, %s160
    %p169 = scmp.eq.s32.totalorder %s17, 0
    %p170 = por %p168, %p169
    %p171 = scmp.ne.s32.totalorder %s159, %s160
    %p172 = scmp.eq.s32.totalorder %s18, 3
    %p173 = por %p171, %p172
    %p175 = scmp.ne.s32.totalorder %s160, %s174
    %p176 = scmp.eq.s32.totalorder %s18, 0
    %p177 = por %p175, %p176
    %s178 = ssub.s32 %s19, %s31
    %p179 = scmp.eq.s32.totalorder %s178, 0
    %s181 = sadd.s32 %s180, 1
    %s182 = scalar_select %p179, %s180, %s181
    %p185 = pneg %p179
    %p186 = scmp.eq.s32.totalorder %s12, 3
    %p187 = por %p185, %p186
    %p188 = scmp.ne.s32.totalorder %s180, %s183
    %p189 = scmp.eq.s32.totalorder %s12, 0
    %p190 = por %p188, %p189
    %p191 = scmp.ne.s32.totalorder %s180, %s183
    %p192 = scmp.eq.s32.totalorder %s17, 3
    %p193 = por %p191, %p192
    %p194 = scmp.ne.s32.totalorder %s183, %s184
    %p195 = scmp.eq.s32.totalorder %s17, 0
    %p196 = por %p194, %p195
    %p197 = scmp.ne.s32.totalorder %s183, %s184
    %p198 = scmp.eq.s32.totalorder %s18, 3
    %p199 = por %p197, %p198
    %p201 = scmp.ne.s32.totalorder %s184, %s200
    %p202 = scmp.eq.s32.totalorder %s18, 0
    %p203 = por %p201, %p202
    %p204 = scmp.le.s32.totalorder 1, %s12
    %p205 = scmp.lt.s32.totalorder %s12, 5
    %p206 = pnand %p204, %p205
    %p207 = pneg %p206
    // Predicated region
    $region9: #{t5_forward.2} parent=5 // pred_check
      _
    $region10: #{t5_forward.2} parent=5 // pred_check_branch
      %209 = sbr.rel (%p206) target = $region12
    $region11: #{t5_forward.2} parent=5 // pred_region
      %s210 = ssub.s32 %s12, 1
      // Predicated region
      $region13: #{t5_forward.2} parent=11 // pred_check
        %p211 = pneg %p71
      $region14: #{t5_forward.2} parent=11 // pred_check_branch
        %213 = sbr.rel (%p211) target = $region16
      $region15: #{t5_forward.2} parent=11 // pred_region
        _
      $region16: #{t5_forward.2} parent=11 // pred_fallthru
        _
      // Predicated region
      $region17: #{t5_forward.2} parent=11 // pred_check
        %p214 = pneg %p170
      $region18: #{t5_forward.2} parent=11 // pred_check_branch
        %216 = sbr.rel (%p214) target = $region20
      $region19: #{t5_forward.2} parent=11 // pred_region
        _
      $region20: #{t5_forward.2} parent=11 // pred_fallthru
        _
    $region12: #{t5_forward.2} parent=5 // pred_fallthru
      _
    %p217 = scmp.lt.s32.totalorder %s12, 4
    // Predicated region
    $region21: #{t5_forward.2} parent=5 // pred_check
      %p218 = pneg %p217
    $region22: #{t5_forward.2} parent=5 // pred_check_branch
      %220 = sbr.rel (%p218) target = $region24
    $region23: #{t5_forward.2} parent=5 // pred_region
      // Predicated region
      $region25: #{t5_forward.2} parent=23 // pred_check
        %p221 = pneg %p44
      $region26: #{t5_forward.2} parent=23 // pred_check_branch
        %223 = sbr.rel (%p221) target = $region28
      $region27: #{t5_forward.2} parent=23 // pred_region
        %p224 = scmp.lt.s32.totalorder %s19, 1
        %s225 = scalar_select %p224, %s19, 1
        %s226 = smul.addr %s225, 2
        %s227 = smul.addr %s226, 8
        %s228 = scalar_lea.vmem %s0, %s227
      $region28: #{t5_forward.2} parent=23 // pred_fallthru
        _
      // Predicated region
      $region29: #{t5_forward.2} parent=23 // pred_check
        %p229 = pneg %p91
      $region30: #{t5_forward.2} parent=23 // pred_check_branch
        %231 = sbr.rel (%p229) target = $region32
      $region31: #{t5_forward.2} parent=23 // pred_region
        %p232 = scmp.lt.s32.totalorder %s20, 1
        %s233 = scalar_select %p232, %s20, 1
        %s234 = smul.addr %s233, 2
        %s235 = scalar_lea.vmem %s2, %s234
      $region32: #{t5_forward.2} parent=23 // pred_fallthru
        _
      // Predicated region
      $region33: #{t5_forward.2} parent=23 // pred_check
        %p236 = pneg %p117
      $region34: #{t5_forward.2} parent=23 // pred_check_branch
        %238 = sbr.rel (%p236) target = $region36
      $region35: #{t5_forward.2} parent=23 // pred_region
        %p239 = scmp.lt.s32.totalorder %s20, 1
        %s240 = scalar_select %p239, %s20, 1
        %s241 = smul.addr %s240, 24
        %s242 = smul.addr %s241, 4
        %s243 = scalar_lea.vmem %s3, %s242
      $region36: #{t5_forward.2} parent=23 // pred_fallthru
        _
      // Predicated region
      $region37: #{t5_forward.2} parent=23 // pred_check
        %p244 = pneg %p143
      $region38: #{t5_forward.2} parent=23 // pred_check_branch
        %246 = sbr.rel (%p244) target = $region40
      $region39: #{t5_forward.2} parent=23 // pred_region
        %p247 = scmp.lt.s32.totalorder %s20, 1
        %s248 = scalar_select %p247, %s20, 1
        %s249 = smul.addr %s248, 16
        %s250 = smul.addr %s249, 4
        %s251 = scalar_lea.vmem %s4, %s250
      $region40: #{t5_forward.2} parent=23 // pred_fallthru
        _
    $region24: #{t5_forward.2} parent=5 // pred_fallthru
      _
    %p252 = scmp.le.s32.totalorder 1, %s12
    %p253 = scmp.lt.s32.totalorder %s12, 5
    %p254 = pnand %p252, %p253
    %p255 = pneg %p254
    // Predicated region
    $region41: #{t5_forward.2} parent=5 // pred_check
      _
    $region42: #{t5_forward.2} parent=5 // pred_check_branch
      %257 = sbr.rel (%p254) target = $region44
    $region43: #{t5_forward.2} parent=5 // pred_region
      %s258 = ssub.s32 %s12, 1
      %p259 = scmp.lt.s32.totalorder %s21, 1
      %s260 = scalar_select %p259, %s21, 1
      %s261 = smul.addr %s260, 2
      %s262 = smul.addr %s261, 8
      %s263 = scalar_lea.vmem %s0, %s262
      %p264 = pneg %p50
      %p265 = pneg %p47
      %p266 = pneg %p71
      %p267 = pneg %p68
      %p268 = scmp.lt.s32.totalorder %s22, 1
      %s269 = scalar_select %p268, %s22, 1
      %s270 = smul.addr %s269, 2
      %s271 = scalar_lea.vmem %s2, %s270
      %p272 = pneg %p97
      %p273 = pneg %p94
      %p274 = scmp.lt.s32.totalorder %s22, 1
      %s275 = scalar_select %p274, %s22, 1
      %s276 = smul.addr %s275, 24
      %s277 = smul.addr %s276, 4
      %s278 = scalar_lea.vmem %s3, %s277
      %p279 = pneg %p123
      %p280 = pneg %p120
      %p281 = scmp.lt.s32.totalorder %s22, 1
      %s282 = scalar_select %p281, %s22, 1
      %s283 = smul.addr %s282, 16
      %s284 = smul.addr %s283, 4
      %s285 = scalar_lea.vmem %s4, %s284
      %p286 = pneg %p149
      %p287 = pneg %p146
      %p288 = pneg %p170
      %p289 = pneg %p167
      %p290 = pneg %p196
      %p291 = pneg %p193
      %p292 = scmp.lt.s32.totalorder %s21, 1
      %s293 = scalar_select %p292, %s21, 1
      %s294 = smul.addr %s293, 2
      %s295 = smul.addr %s294, 8
      %s296 = scalar_lea.vmem %s6, %s295
      %p297 = scmp.lt.s32.totalorder %s21, 1
      %s298 = scalar_select %p297, %s21, 1
      %s299 = smul.addr %s298, 2
      %s300 = smul.addr %s299, 8
      %s301 = scalar_lea.vmem %s0, %s300
      %p302 = scmp.lt.s32.totalorder %s22, 1
      %s303 = scalar_select %p302, %s22, 1
      %s304 = smul.addr %s303, 2
      %s305 = scalar_lea.vmem %s2, %s304
      %p306 = scmp.lt.s32.totalorder %s22, 1
      %s307 = scalar_select %p306, %s22, 1
      %s308 = smul.addr %s307, 24
      %s309 = smul.addr %s308, 4
      %s310 = scalar_lea.vmem %s3, %s309
      %p311 = scmp.lt.s32.totalorder %s22, 1
      %s312 = scalar_select %p311, %s22, 1
      %s313 = smul.addr %s312, 16
      %s314 = smul.addr %s313, 4
      %s315 = scalar_lea.vmem %s4, %s314
      %p316 = scmp.lt.s32.totalorder %s21, 1
      %s317 = scalar_select %p316, %s21, 1
      %s318 = smul.addr %s317, 2
      %s319 = smul.addr %s318, 8
      %s320 = scalar_lea.vmem %s6, %s319
      %p322 = scmp.eq.s32.totalorder %s22, 0
      // Predicated region
      $region45: #{t5_forward.2} parent=43 // pred_check
        %p323 = pneg %p322
      $region46: #{t5_forward.2} parent=43 // pred_check_branch
        %325 = sbr.rel (%p323) target = $region48
      $region47: #{t5_forward.2} parent=43 // pred_region
        %v326 = vld [vmem:[%s301] sm:$0xff]
        %v327 = vld [vmem:[%s301 + $0x8] sm:$0xff]
        %vm328 = vcmask 523264
        %329 = vst.msk [vmem:[%s320] sm:$0xff] %vm328, %v326
        %330 = vst.msk [vmem:[%s320 + $0x8] sm:$0xff] %vm328, %v327
      $region48: #{t5_forward.2} parent=43 // pred_fallthru
        _
      %v331 = vld [vmem:[%s320] sm:$0xff]
      %v332 = vld [vmem:[%s320 + $0x8] sm:$0xff]
      %v333 = vld [vmem:[%s305] sm:$0x3]
      %v334 = vld [vmem:[%s310] sm:$0xff]
      %v335 = vld [vmem:[%s310 + $0x8] sm:$0xf]
      %v336 = vld [vmem:[%s310 + $0xc] sm:$0xff]
      %v337 = vld [vmem:[%s310 + $0x14] sm:$0xf]
      %v338 = vld [vmem:[%s310 + $0x18] sm:$0xff]
      %v339 = vld [vmem:[%s310 + $0x20] sm:$0xf]
      %v340 = vld [vmem:[%s310 + $0x24] sm:$0xff]
      %v341 = vld [vmem:[%s310 + $0x2c] sm:$0xf]
      %v342 = vld [vmem:[%s310 + $0x30] sm:$0xff]
      %v343 = vld [vmem:[%s310 + $0x38] sm:$0xf]
      %v344 = vld [vmem:[%s310 + $0x3c] sm:$0xff]
      %v345 = vld [vmem:[%s310 + $0x44] sm:$0xf]
      %v346 = vld [vmem:[%s310 + $0x48] sm:$0xff]
      %v347 = vld [vmem:[%s310 + $0x50] sm:$0xf]
      %v348 = vld [vmem:[%s310 + $0x54] sm:$0xff]
      %v349 = vld [vmem:[%s310 + $0x5c] sm:$0xf]
      %v350 = vmul.f32 %v331, %v331
      %v351 = vmul.f32 %v332, %v332
      %vm352 = vcmask 523264
      %v353 = vsel %vm352, %v350, 0.0
      %354 = vadd.xlane.f32.xlu0 %v353
      %v355 = vpop.xlane.xlu0 %354
      %v356 = vsel %vm352, %v351, 0.0
      %357 = vadd.xlane.f32.xlu0 %v356
      %v358 = vpop.xlane.xlu0 %357
      %v359 = vrcp.pop 64.0
      %v360 = vmul.f32 %v355, %v359
      %v361 = vmul.f32 %v358, %v359
      %v362 = vadd.f32 %v360, 1e-06
      %v363 = vadd.f32 %v361, 1e-06
      %v364 = vrsqrt.pop %v362
      %v365 = vrsqrt.pop %v363
      %v366 = vmul.f32 %v331, %v364
      %v367 = vmul.f32 %v332, %v365
      %v368 = vlaneseq
      %v369 = vshrl.u32 %v368, 7
      %v370 = vsub.s32 0, %v369
      %v371 = vrot.slane %v333, %v370
      %v372 = vmul.f32 %v366, %v371
      %v373 = vmul.f32 %v367, %v371
      %v374 = vpack.c.bf16 %v373, %v372
      %v383 = vunpack.c.l.b16 %v334
      %v384 = vunpack.c.h.b16 %v334
      %v385 = vunpack.c.l.b16 %v336
      %v386 = vunpack.c.h.b16 %v336
      %v387 = vunpack.c.l.b16 %v338
      %v388 = vunpack.c.h.b16 %v338
      %v389 = vunpack.c.l.b16 %v340
      %v390 = vunpack.c.h.b16 %v340
      %v391 = vunpack.c.l.b16 %v342
      %v392 = vunpack.c.h.b16 %v342
      %v393 = vunpack.c.l.b16 %v344
      %v394 = vunpack.c.h.b16 %v344
      %v395 = vunpack.c.l.b16 %v346
      %v396 = vunpack.c.h.b16 %v346
      %v397 = vunpack.c.l.b16 %v348
      %v398 = vunpack.c.h.b16 %v348
      %v399 = vpack.c.b16 %v385, %v383
      %v400 = vpack.c.b16 %v386, %v384
      %v401 = vpack.c.b16 %v389, %v387
      %v402 = vpack.c.b16 %v390, %v388
      %v403 = vpack.c.b16 %v393, %v391
      %v404 = vpack.c.b16 %v394, %v392
      %v405 = vpack.c.b16 %v397, %v395
      %v406 = vpack.c.b16 %v398, %v396
      %v416 = vsel %vm352, %v374, 0
      %418 = vmatprep.subr.bf16.mxu0 0
      %419 = vmatpush1.bf16.msra.mxu0 0
      %420 = vmatprep.subr.bf16.mxu0 0
      %421 = vmatpush1.bf16.msra.mxu0 0
      %422 = vmatprep.subr.bf16.mxu0 0
      %423 = vmatpush1.bf16.msra.mxu0 0
      %424 = vmatprep.subr.bf16.mxu0 0
      %425 = vmatpush1.bf16.msra.mxu0 0
      %426 = vmatprep.subr.bf16.mxu0 %v406
      %427 = vmatpush1.bf16.msra.mxu0 %v405
      %428 = vmatprep.subr.bf16.mxu0 %v404
      %429 = vmatpush1.bf16.msra.mxu0 %v403
      %430 = vmatprep.subr.bf16.mxu0 %v402
      %431 = vmatpush1.bf16.msra.mxu0 %v401
      %432 = vmatprep.subr.bf16.mxu0 %v400
      %433 = vmatpush1.bf16.msra.mxu0 %v399
      %434 = vmatprep.subr.bf16.mxu0 0
      %435 = vmatpush2.bf16.msra.mxu0 0
      %436 = vmatprep.subr.bf16.mxu0 0
      %437 = vmatpush2.bf16.msra.mxu0 0
      %438 = vmatprep.subr.bf16.mxu0 0
      %439 = vmatpush2.bf16.msra.mxu0 0
      %440 = vmatprep.subr.bf16.mxu0 0
      %441 = vmatpush2.bf16.msra.mxu0 0
      %442 = vmatprep.subr.bf16.mxu0 0
      %443 = vmatpush2.bf16.msra.mxu0 0
      %444 = vmatprep.subr.bf16.mxu0 0
      %445 = vmatpush2.bf16.msra.mxu0 0
      %446 = vmatprep.subr.bf16.mxu0 0
      %447 = vmatpush2.bf16.msra.mxu0 0
      %448 = vmatprep.subr.bf16.mxu0 0
      %449 = vmatpush2.bf16.msra.mxu0 0
      %450 = vmatprep.mubr.bf16.mxu0 0
      %451 = vmatmul.mubr.bf16.gmra.mxu0 %v416
      %v452 = vpop.f32.mrf.mxu0
      %v453 = vadd.f32 0.0, %v452
      %v454 = vpop.f32.mrf.mxu0
      %v455 = vadd.f32 0.0, %v454
      %v456 = vpop.f32.mrf.mxu0
      %v457 = vadd.f32 0.0, %v456
      %v458 = vpop.f32.mrf.mxu0
      %v459 = vadd.f32 0.0, %v458
      %460 = vdwg.mxu0
      %v461 = vld [vmem:[%s1] sm:$0xff]
      %v462 = vld [vmem:[%s1 + $0x8] sm:$0xff]
      %v463 = vld [vmem:[%s1 + $0x10] sm:$0xff]
      %v464 = vld [vmem:[%s1 + $0x18] sm:$0xff]
      %v465 = vld [vmem:[%s1 + $0x20] sm:$0xff]
      %v466 = vld [vmem:[%s1 + $0x28] sm:$0xff]
      %v467 = vld [vmem:[%s1 + $0x30] sm:$0xff]
      %v468 = vld [vmem:[%s1 + $0x38] sm:$0xff]
      %471 = vrot.lane.b32.xlu0 %v453, 112
      %v472 = vpop.permute.xlu0 %471
      %473 = vrot.lane.b32.xlu0 %v457, 112
      %v474 = vpop.permute.xlu0 %473
      %477 = vrot.lane.b32.xlu0 %v453, 96
      %v478 = vpop.permute.xlu0 %477
      %479 = vrot.lane.b32.xlu0 %v457, 96
      %v480 = vpop.permute.xlu0 %479
      %483 = vrot.lane.b32.xlu0 %v453, 80
      %v484 = vpop.permute.xlu0 %483
      %485 = vrot.lane.b32.xlu0 %v457, 80
      %v486 = vpop.permute.xlu0 %485
      %v489 = vpack.c.bf16 %v457, %v453
      %v490 = vpack.c.bf16 %v474, %v472
      %v491 = vpack.c.bf16 %v480, %v478
      %v492 = vpack.c.bf16 %v486, %v484
      %495 = vrot.lane.b32.xlu0 %v455, 112
      %v496 = vpop.permute.xlu0 %495
      %497 = vrot.lane.b32.xlu0 %v459, 112
      %v498 = vpop.permute.xlu0 %497
      %501 = vrot.lane.b32.xlu0 %v455, 96
      %v502 = vpop.permute.xlu0 %501
      %503 = vrot.lane.b32.xlu0 %v459, 96
      %v504 = vpop.permute.xlu0 %503
      %507 = vrot.lane.b32.xlu0 %v455, 80
      %v508 = vpop.permute.xlu0 %507
      %509 = vrot.lane.b32.xlu0 %v459, 80
      %v510 = vpop.permute.xlu0 %509
      %v513 = vpack.c.bf16 %v459, %v455
      %v514 = vpack.c.bf16 %v498, %v496
      %v515 = vpack.c.bf16 %v504, %v502
      %v516 = vpack.c.bf16 %v510, %v508
      %521 = vrot.lane.b32.xlu0 %v489, 64
      %v522 = vpop.permute.xlu0 %521
      %523 = vrot.lane.b32.xlu0 %v490, 64
      %v524 = vpop.permute.xlu0 %523
      %525 = vrot.lane.b32.xlu0 %v491, 64
      %v526 = vpop.permute.xlu0 %525
      %527 = vrot.lane.b32.xlu0 %v492, 64
      %v528 = vpop.permute.xlu0 %527
      %vm529 = vcmask 130048
      %v531 = vsel %vm529, %v489, 0
      %v534 = vsel %vm529, %v490, 0
      %v537 = vsel %vm529, %v491, 0
      %v540 = vsel %vm529, %v492, 0
      %v543 = vsel %vm529, %v522, 0
      %v546 = vsel %vm529, %v524, 0
      %v549 = vsel %vm529, %v526, 0
      %v552 = vsel %vm529, %v528, 0
      %554 = vmatprep.subr.bf16.mxu0 0
      %555 = vmatpush1.bf16.xpose.msra.mxu0 0
      %556 = vmatprep.subr.bf16.mxu0 0
      %557 = vmatpush1.bf16.xpose.msra.mxu0 0
      %558 = vmatprep.subr.bf16.mxu0 0
      %559 = vmatpush1.bf16.xpose.msra.mxu0 0
      %560 = vmatprep.subr.bf16.mxu0 0
      %561 = vmatpush1.bf16.xpose.msra.mxu0 0
      %562 = vmatprep.subr.bf16.mxu0 0
      %563 = vmatpush1.bf16.xpose.msra.mxu0 %v552
      %564 = vmatprep.subr.bf16.mxu0 0
      %565 = vmatpush1.bf16.xpose.msra.mxu0 %v549
      %566 = vmatprep.subr.bf16.mxu0 0
      %567 = vmatpush1.bf16.xpose.msra.mxu0 %v546
      %568 = vmatprep.subr.bf16.mxu0 0
      %569 = vmatpush1.bf16.xpose.msra.mxu0 %v543
      %570 = vmatprep.subr.bf16.mxu0 0
      %571 = vmatpush2.bf16.xpose.msra.mxu0 0
      %572 = vmatprep.subr.bf16.mxu0 0
      %573 = vmatpush2.bf16.xpose.msra.mxu0 0
      %574 = vmatprep.subr.bf16.mxu0 0
      %575 = vmatpush2.bf16.xpose.msra.mxu0 0
      %576 = vmatprep.subr.bf16.mxu0 0
      %577 = vmatpush2.bf16.xpose.msra.mxu0 0
      %578 = vmatprep.subr.bf16.mxu0 0
      %579 = vmatpush2.bf16.xpose.msra.mxu0 0
      %580 = vmatprep.subr.bf16.mxu0 0
      %581 = vmatpush2.bf16.xpose.msra.mxu0 0
      %582 = vmatprep.subr.bf16.mxu0 0
      %583 = vmatpush2.bf16.xpose.msra.mxu0 0
      %584 = vmatprep.subr.bf16.mxu0 0
      %585 = vmatpush2.bf16.xpose.msra.mxu0 0
      %586 = vmatprep.mubr.bf16.mxu0 0
      %587 = vmatmul.mubr.bf16.gmra.mxu0 %v531
      %v588 = vpop.f32.mrf.mxu0
      %v589 = vadd.f32 %v461, %v588
      %v590 = vpop.f32.mrf.mxu0
      %v591 = vpop.f32.mrf.mxu0
      %v592 = vadd.f32 %v462, %v591
      %v593 = vpop.f32.mrf.mxu0
      %594 = vmatprep.mubr.bf16.mxu0 0
      %595 = vmatmul.mubr.bf16.gmra.mxu0 %v534
      %v596 = vpop.f32.mrf.mxu0
      %v597 = vadd.f32 %v463, %v596
      %v598 = vpop.f32.mrf.mxu0
      %v599 = vpop.f32.mrf.mxu0
      %v600 = vadd.f32 %v464, %v599
      %v601 = vpop.f32.mrf.mxu0
      %602 = vmatprep.mubr.bf16.mxu0 0
      %603 = vmatmul.mubr.bf16.gmra.mxu0 %v537
      %v604 = vpop.f32.mrf.mxu0
      %v605 = vadd.f32 %v465, %v604
      %v606 = vpop.f32.mrf.mxu0
      %v607 = vpop.f32.mrf.mxu0
      %v608 = vadd.f32 %v466, %v607
      %v609 = vpop.f32.mrf.mxu0
      %610 = vmatprep.mubr.bf16.mxu0 0
      %611 = vmatmul.mubr.bf16.gmra.mxu0 %v540
      %v612 = vpop.f32.mrf.mxu0
      %v613 = vadd.f32 %v467, %v612
      %v614 = vpop.f32.mrf.mxu0
      %v615 = vpop.f32.mrf.mxu0
      %v616 = vadd.f32 %v468, %v615
      %v617 = vpop.f32.mrf.mxu0
      %618 = vdwg.mxu0
      %v619 = vsel %vm352, %v589, -inf
      %620 = vmax.xlane.f32.xlu0 %v619
      %v621 = vpop.xlane.xlu0 %620
      %v622 = vsel %vm352, %v592, -inf
      %623 = vmax.xlane.f32.xlu0 %v622
      %v624 = vpop.xlane.xlu0 %623
      %v625 = vsel %vm352, %v597, -inf
      %626 = vmax.xlane.f32.xlu0 %v625
      %v627 = vpop.xlane.xlu0 %626
      %v628 = vsel %vm352, %v600, -inf
      %629 = vmax.xlane.f32.xlu0 %v628
      %v630 = vpop.xlane.xlu0 %629
      %v631 = vsel %vm352, %v605, -inf
      %632 = vmax.xlane.f32.xlu0 %v631
      %v633 = vpop.xlane.xlu0 %632
      %v634 = vsel %vm352, %v608, -inf
      %635 = vmax.xlane.f32.xlu0 %v634
      %v636 = vpop.xlane.xlu0 %635
      %v637 = vsel %vm352, %v613, -inf
      %638 = vmax.xlane.f32.xlu0 %v637
      %v639 = vpop.xlane.xlu0 %638
      %v640 = vsel %vm352, %v616, -inf
      %641 = vmax.xlane.f32.xlu0 %v640
      %v642 = vpop.xlane.xlu0 %641
      %v643 = vsub.f32 %v589, %v621
      %v644 = vsub.f32 %v592, %v624
      %v645 = vsub.f32 %v597, %v627
      %v646 = vsub.f32 %v600, %v630
      %v647 = vsub.f32 %v605, %v633
      %v648 = vsub.f32 %v608, %v636
      %v649 = vsub.f32 %v613, %v639
      %v650 = vsub.f32 %v616, %v642
      %v651 = vmul.f32 %v643, 1.442695
      %v652 = vpow.pop %v651
      %v653 = vmul.f32 %v644, 1.442695
      %v654 = vpow.pop %v653
      %v655 = vmul.f32 %v645, 1.442695
      %v656 = vpow.pop %v655
      %v657 = vmul.f32 %v646, 1.442695
      %v658 = vpow.pop %v657
      %v659 = vmul.f32 %v647, 1.442695
      %v660 = vpow.pop %v659
      %v661 = vmul.f32 %v648, 1.442695
      %v662 = vpow.pop %v661
      %v663 = vmul.f32 %v649, 1.442695
      %v664 = vpow.pop %v663
      %v665 = vmul.f32 %v650, 1.442695
      %v666 = vpow.pop %v665
      %v667 = vsel %vm352, %v652, 0.0
      %668 = vadd.xlane.f32.xlu0 %v667
      %v669 = vpop.xlane.xlu0 %668
      %v670 = vsel %vm352, %v654, 0.0
      %671 = vadd.xlane.f32.xlu0 %v670
      %v672 = vpop.xlane.xlu0 %671
      %v673 = vsel %vm352, %v656, 0.0
      %674 = vadd.xlane.f32.xlu0 %v673
      %v675 = vpop.xlane.xlu0 %674
      %v676 = vsel %vm352, %v658, 0.0
      %677 = vadd.xlane.f32.xlu0 %v676
      %v678 = vpop.xlane.xlu0 %677
      %v679 = vsel %vm352, %v660, 0.0
      %680 = vadd.xlane.f32.xlu0 %v679
      %v681 = vpop.xlane.xlu0 %680
      %v682 = vsel %vm352, %v662, 0.0
      %683 = vadd.xlane.f32.xlu0 %v682
      %v684 = vpop.xlane.xlu0 %683
      %v685 = vsel %vm352, %v664, 0.0
      %686 = vadd.xlane.f32.xlu0 %v685
      %v687 = vpop.xlane.xlu0 %686
      %v688 = vsel %vm352, %v666, 0.0
      %689 = vadd.xlane.f32.xlu0 %v688
      %v690 = vpop.xlane.xlu0 %689
      %v691 = vrcp.pop %v669
      %v692 = vrcp.pop %v672
      %v693 = vrcp.pop %v675
      %v694 = vrcp.pop %v678
      %v695 = vrcp.pop %v681
      %v696 = vrcp.pop %v684
      %v697 = vrcp.pop %v687
      %v698 = vrcp.pop %v690
      %v699 = vmul.f32 %v652, %v691
      %v700 = vmul.f32 %v654, %v692
      %v701 = vmul.f32 %v656, %v693
      %v702 = vmul.f32 %v658, %v694
      %v703 = vmul.f32 %v660, %v695
      %v704 = vmul.f32 %v662, %v696
      %v705 = vmul.f32 %v664, %v697
      %v706 = vmul.f32 %v666, %v698
      %v707 = vpack.c.bf16 %v700, %v699
      %v708 = vpack.c.bf16 %v702, %v701
      %v709 = vpack.c.bf16 %v704, %v703
      %v710 = vpack.c.bf16 %v706, %v705
      %v712 = vsel %vm352, %v707, 0
      %v715 = vsel %vm352, %v708, 0
      %v718 = vsel %vm352, %v709, 0
      %v721 = vsel %vm352, %v710, 0
      %723 = vmatprep.subr.bf16.mxu0 0
      %724 = vmatpush1.bf16.msra.mxu0 0
      %725 = vmatprep.subr.bf16.mxu0 0
      %726 = vmatpush1.bf16.msra.mxu0 0
      %727 = vmatprep.subr.bf16.mxu0 0
      %728 = vmatpush1.bf16.msra.mxu0 0
      %729 = vmatprep.subr.bf16.mxu0 0
      %730 = vmatpush1.bf16.msra.mxu0 0
      %731 = vmatprep.subr.bf16.mxu0 0
      %732 = vmatpush1.bf16.msra.mxu0 %v516
      %733 = vmatprep.subr.bf16.mxu0 0
      %734 = vmatpush1.bf16.msra.mxu0 %v515
      %735 = vmatprep.subr.bf16.mxu0 0
      %736 = vmatpush1.bf16.msra.mxu0 %v514
      %737 = vmatprep.subr.bf16.mxu0 0
      %738 = vmatpush1.bf16.msra.mxu0 %v513
      %739 = vmatprep.subr.bf16.mxu0 0
      %740 = vmatpush2.bf16.msra.mxu0 0
      %741 = vmatprep.subr.bf16.mxu0 0
      %742 = vmatpush2.bf16.msra.mxu0 0
      %743 = vmatprep.subr.bf16.mxu0 0
      %744 = vmatpush2.bf16.msra.mxu0 0
      %745 = vmatprep.subr.bf16.mxu0 0
      %746 = vmatpush2.bf16.msra.mxu0 0
      %747 = vmatprep.subr.bf16.mxu0 0
      %748 = vmatpush2.bf16.msra.mxu0 0
      %749 = vmatprep.subr.bf16.mxu0 0
      %750 = vmatpush2.bf16.msra.mxu0 0
      %751 = vmatprep.subr.bf16.mxu0 0
      %752 = vmatpush2.bf16.msra.mxu0 0
      %753 = vmatprep.subr.bf16.mxu0 0
      %754 = vmatpush2.bf16.msra.mxu0 0
      %755 = vmatprep.mubr.bf16.mxu0 0
      %756 = vmatmul.mubr.bf16.gmra.mxu0 %v712
      %v757 = vpop.f32.mrf.mxu0
      %v758 = vadd.f32 0.0, %v757
      %v759 = vpop.f32.mrf.mxu0
      %v760 = vpop.f32.mrf.mxu0
      %v761 = vadd.f32 0.0, %v760
      %v762 = vpop.f32.mrf.mxu0
      %763 = vmatprep.mubr.bf16.mxu0 0
      %764 = vmatmul.mubr.bf16.gmra.mxu0 %v715
      %v765 = vpop.f32.mrf.mxu0
      %v766 = vadd.f32 0.0, %v765
      %v767 = vpop.f32.mrf.mxu0
      %v768 = vpop.f32.mrf.mxu0
      %v769 = vadd.f32 0.0, %v768
      %v770 = vpop.f32.mrf.mxu0
      %771 = vmatprep.mubr.bf16.mxu0 0
      %772 = vmatmul.mubr.bf16.gmra.mxu0 %v718
      %v773 = vpop.f32.mrf.mxu0
      %v774 = vadd.f32 0.0, %v773
      %v775 = vpop.f32.mrf.mxu0
      %v776 = vpop.f32.mrf.mxu0
      %v777 = vadd.f32 0.0, %v776
      %v778 = vpop.f32.mrf.mxu0
      %779 = vmatprep.mubr.bf16.mxu0 0
      %780 = vmatmul.mubr.bf16.gmra.mxu0 %v721
      %v781 = vpop.f32.mrf.mxu0
      %v782 = vadd.f32 0.0, %v781
      %v783 = vpop.f32.mrf.mxu0
      %v784 = vpop.f32.mrf.mxu0
      %v785 = vadd.f32 0.0, %v784
      %v786 = vpop.f32.mrf.mxu0
      %787 = vdwg.mxu0
      %790 = vrot.lane.b32.xlu0 %v766, 16
      %v791 = vpop.permute.xlu0 %790
      %792 = vrot.lane.b32.xlu0 %v769, 16
      %v793 = vpop.permute.xlu0 %792
      %798 = vrot.lane.b32.xlu0 %v774, 32
      %v799 = vpop.permute.xlu0 %798
      %800 = vrot.lane.b32.xlu0 %v777, 32
      %v801 = vpop.permute.xlu0 %800
      %806 = vrot.lane.b32.xlu0 %v782, 48
      %v807 = vpop.permute.xlu0 %806
      %808 = vrot.lane.b32.xlu0 %v785, 48
      %v809 = vpop.permute.xlu0 %808
      %v812 = vsel %vm529, %v758, %v791
      %v813 = vsel %vm529, %v761, %v793
      %vm814 = vcmask 261120
      %v815 = vsel %vm814, %v812, %v799
      %v816 = vsel %vm814, %v813, %v801
      %vm817 = vcmask 392192
      %v818 = vsel %vm817, %v815, %v807
      %v819 = vsel %vm817, %v816, %v809
      %v820 = vpack.c.bf16 %v819, %v818
      %821 = vrot.lane.b32.xlu0 %v400, 64
      %v822 = vpop.permute.xlu0 %821
      %823 = vrot.lane.b32.xlu0 %v402, 64
      %v824 = vpop.permute.xlu0 %823
      %825 = vrot.lane.b32.xlu0 %v404, 64
      %v826 = vpop.permute.xlu0 %825
      %827 = vrot.lane.b32.xlu0 %v406, 64
      %v828 = vpop.permute.xlu0 %827
      %v834 = vsel %vm352, %v820, 0
      %836 = vmatprep.subr.bf16.mxu0 0
      %837 = vmatpush1.bf16.msra.mxu0 0
      %838 = vmatprep.subr.bf16.mxu0 0
      %839 = vmatpush1.bf16.msra.mxu0 0
      %840 = vmatprep.subr.bf16.mxu0 0
      %841 = vmatpush1.bf16.msra.mxu0 0
      %842 = vmatprep.subr.bf16.mxu0 0
      %843 = vmatpush1.bf16.msra.mxu0 0
      %844 = vmatprep.subr.bf16.mxu0 0
      %845 = vmatpush1.bf16.msra.mxu0 %v828
      %846 = vmatprep.subr.bf16.mxu0 0
      %847 = vmatpush1.bf16.msra.mxu0 %v826
      %848 = vmatprep.subr.bf16.mxu0 0
      %849 = vmatpush1.bf16.msra.mxu0 %v824
      %850 = vmatprep.subr.bf16.mxu0 0
      %851 = vmatpush1.bf16.msra.mxu0 %v822
      %852 = vmatprep.subr.bf16.mxu0 0
      %853 = vmatpush2.bf16.msra.mxu0 0
      %854 = vmatprep.subr.bf16.mxu0 0
      %855 = vmatpush2.bf16.msra.mxu0 0
      %856 = vmatprep.subr.bf16.mxu0 0
      %857 = vmatpush2.bf16.msra.mxu0 0
      %858 = vmatprep.subr.bf16.mxu0 0
      %859 = vmatpush2.bf16.msra.mxu0 0
      %860 = vmatprep.subr.bf16.mxu0 0
      %861 = vmatpush2.bf16.msra.mxu0 0
      %862 = vmatprep.subr.bf16.mxu0 0
      %863 = vmatpush2.bf16.msra.mxu0 0
      %864 = vmatprep.subr.bf16.mxu0 0
      %865 = vmatpush2.bf16.msra.mxu0 0
      %866 = vmatprep.subr.bf16.mxu0 0
      %867 = vmatpush2.bf16.msra.mxu0 0
      %868 = vmatprep.mubr.bf16.mxu0 0
      %869 = vmatmul.mubr.bf16.gmra.mxu0 %v834
      %v870 = vpop.f32.mrf.mxu0
      %v871 = vadd.f32 0.0, %v870
      %v872 = vpop.f32.mrf.mxu0
      %v873 = vpop.f32.mrf.mxu0
      %v874 = vadd.f32 0.0, %v873
      %v875 = vpop.f32.mrf.mxu0
      %876 = vdwg.mxu0
      %v877 = vadd.f32 %v331, %v871
      %v878 = vadd.f32 %v332, %v874
      %v879 = vmul.f32 %v877, %v877
      %v880 = vmul.f32 %v878, %v878
      %v881 = vsel %vm352, %v879, 0.0
      %882 = vadd.xlane.f32.xlu0 %v881
      %v883 = vpop.xlane.xlu0 %882
      %v884 = vsel %vm352, %v880, 0.0
      %885 = vadd.xlane.f32.xlu0 %v884
      %v886 = vpop.xlane.xlu0 %885
      %v887 = vmul.f32 %v883, %v359
      %v888 = vmul.f32 %v886, %v359
      %v889 = vadd.f32 %v887, 1e-06
      %v890 = vadd.f32 %v888, 1e-06
      %v891 = vrsqrt.pop %v889
      %v892 = vrsqrt.pop %v890
      %v893 = vmul.f32 %v877, %v891
      %v894 = vmul.f32 %v878, %v892
      %v895 = vlaneseq
      %v896 = vshrl.u32 %v895, 7
      %v897 = vsub.s32 1, %v896
      %v898 = vrot.slane %v333, %v897
      %v899 = vmul.f32 %v893, %v898
      %v900 = vmul.f32 %v894, %v898
      %v901 = vpack.c.bf16 %v900, %v899
      %v910 = vunpack.c.l.b16 %v335
      %v911 = vunpack.c.l.b16 %v337
      %v912 = vunpack.c.l.b16 %v339
      %v913 = vunpack.c.l.b16 %v341
      %v914 = vunpack.c.l.b16 %v343
      %v915 = vunpack.c.l.b16 %v345
      %v916 = vunpack.c.l.b16 %v347
      %v917 = vunpack.c.l.b16 %v349
      %v918 = vpack.c.b16 %v911, %v910
      %v919 = vpack.c.b16 %v913, %v912
      %v920 = vpack.c.b16 %v915, %v914
      %v921 = vpack.c.b16 %v917, %v916
      %v927 = vsel %vm352, %v901, 0
      %929 = vmatprep.subr.bf16.mxu0 0
      %930 = vmatpush1.bf16.msra.mxu0 0
      %931 = vmatprep.subr.bf16.mxu0 0
      %932 = vmatpush1.bf16.msra.mxu0 0
      %933 = vmatprep.subr.bf16.mxu0 0
      %934 = vmatpush1.bf16.msra.mxu0 0
      %935 = vmatprep.subr.bf16.mxu0 0
      %936 = vmatpush1.bf16.msra.mxu0 0
      %937 = vmatprep.subr.bf16.mxu0 0
      %938 = vmatpush1.bf16.msra.mxu0 %v921
      %939 = vmatprep.subr.bf16.mxu0 0
      %940 = vmatpush1.bf16.msra.mxu0 %v920
      %941 = vmatprep.subr.bf16.mxu0 0
      %942 = vmatpush1.bf16.msra.mxu0 %v919
      %943 = vmatprep.subr.bf16.mxu0 0
      %944 = vmatpush1.bf16.msra.mxu0 %v918
      %945 = vmatprep.subr.bf16.mxu0 0
      %946 = vmatpush2.bf16.msra.mxu0 0
      %947 = vmatprep.subr.bf16.mxu0 0
      %948 = vmatpush2.bf16.msra.mxu0 0
      %949 = vmatprep.subr.bf16.mxu0 0
      %950 = vmatpush2.bf16.msra.mxu0 0
      %951 = vmatprep.subr.bf16.mxu0 0
      %952 = vmatpush2.bf16.msra.mxu0 0
      %953 = vmatprep.subr.bf16.mxu0 0
      %954 = vmatpush2.bf16.msra.mxu0 0
      %955 = vmatprep.subr.bf16.mxu0 0
      %956 = vmatpush2.bf16.msra.mxu0 0
      %957 = vmatprep.subr.bf16.mxu0 0
      %958 = vmatpush2.bf16.msra.mxu0 0
      %959 = vmatprep.subr.bf16.mxu0 0
      %960 = vmatpush2.bf16.msra.mxu0 0
      %961 = vmatprep.mubr.bf16.mxu0 0
      %962 = vmatmul.mubr.bf16.gmra.mxu0 %v927
      %v963 = vpop.f32.mrf.mxu0
      %v964 = vadd.f32 0.0, %v963
      %v965 = vpop.f32.mrf.mxu0
      %v966 = vpop.f32.mrf.mxu0
      %v967 = vadd.f32 0.0, %v966
      %v968 = vpop.f32.mrf.mxu0
      %969 = vdwg.mxu0
      %v970 = vmax.f32 %v964, 0.0
      %v971 = vmax.f32 %v967, 0.0
      %v972 = vpack.c.bf16 %v971, %v970
      %v973 = vld [vmem:[%s315] sm:$0xf]
      %v974 = vld [vmem:[%s315 + $0x4] sm:$0xf]
      %v975 = vld [vmem:[%s315 + $0x8] sm:$0xf]
      %v976 = vld [vmem:[%s315 + $0xc] sm:$0xf]
      %v977 = vld [vmem:[%s315 + $0x10] sm:$0xf]
      %v978 = vld [vmem:[%s315 + $0x14] sm:$0xf]
      %v979 = vld [vmem:[%s315 + $0x18] sm:$0xf]
      %v980 = vld [vmem:[%s315 + $0x1c] sm:$0xf]
      %v981 = vld [vmem:[%s315 + $0x20] sm:$0xf]
      %v982 = vld [vmem:[%s315 + $0x24] sm:$0xf]
      %v983 = vld [vmem:[%s315 + $0x28] sm:$0xf]
      %v984 = vld [vmem:[%s315 + $0x2c] sm:$0xf]
      %v985 = vld [vmem:[%s315 + $0x30] sm:$0xf]
      %v986 = vld [vmem:[%s315 + $0x34] sm:$0xf]
      %v987 = vld [vmem:[%s315 + $0x38] sm:$0xf]
      %v988 = vld [vmem:[%s315 + $0x3c] sm:$0xf]
      %v1005 = vunpack.c.l.b16 %v973
      %v1006 = vunpack.c.l.b16 %v974
      %v1007 = vunpack.c.l.b16 %v975
      %v1008 = vunpack.c.l.b16 %v976
      %v1009 = vunpack.c.l.b16 %v977
      %v1010 = vunpack.c.l.b16 %v978
      %v1011 = vunpack.c.l.b16 %v979
      %v1012 = vunpack.c.l.b16 %v980
      %v1013 = vunpack.c.l.b16 %v981
      %v1014 = vunpack.c.l.b16 %v982
      %v1015 = vunpack.c.l.b16 %v983
      %v1016 = vunpack.c.l.b16 %v984
      %v1017 = vunpack.c.l.b16 %v985
      %v1018 = vunpack.c.l.b16 %v986
      %v1019 = vunpack.c.l.b16 %v987
      %v1020 = vunpack.c.l.b16 %v988
      %v1021 = vpack.c.b16 %v1006, %v1005
      %v1022 = vpack.c.b16 %v1008, %v1007
      %v1023 = vpack.c.b16 %v1010, %v1009
      %v1024 = vpack.c.b16 %v1012, %v1011
      %v1025 = vpack.c.b16 %v1014, %v1013
      %v1026 = vpack.c.b16 %v1016, %v1015
      %v1027 = vpack.c.b16 %v1018, %v1017
      %v1028 = vpack.c.b16 %v1020, %v1019
      %1037 = vmatprep.subr.bf16.mxu0 0
      %1038 = vmatpush1.bf16.msra.mxu0 %v1028
      %1039 = vmatprep.subr.bf16.mxu0 0
      %1040 = vmatpush1.bf16.msra.mxu0 %v1027
      %1041 = vmatprep.subr.bf16.mxu0 0
      %1042 = vmatpush1.bf16.msra.mxu0 %v1026
      %1043 = vmatprep.subr.bf16.mxu0 0
      %1044 = vmatpush1.bf16.msra.mxu0 %v1025
      %1045 = vmatprep.subr.bf16.mxu0 0
      %1046 = vmatpush1.bf16.msra.mxu0 %v1024
      %1047 = vmatprep.subr.bf16.mxu0 0
      %1048 = vmatpush1.bf16.msra.mxu0 %v1023
      %1049 = vmatprep.subr.bf16.mxu0 0
      %1050 = vmatpush1.bf16.msra.mxu0 %v1022
      %1051 = vmatprep.subr.bf16.mxu0 0
      %1052 = vmatpush1.bf16.msra.mxu0 %v1021
      %1053 = vmatprep.subr.bf16.mxu0 0
      %1054 = vmatpush2.bf16.msra.mxu0 0
      %1055 = vmatprep.subr.bf16.mxu0 0
      %1056 = vmatpush2.bf16.msra.mxu0 0
      %1057 = vmatprep.subr.bf16.mxu0 0
      %1058 = vmatpush2.bf16.msra.mxu0 0
      %1059 = vmatprep.subr.bf16.mxu0 0
      %1060 = vmatpush2.bf16.msra.mxu0 0
      %1061 = vmatprep.subr.bf16.mxu0 0
      %1062 = vmatpush2.bf16.msra.mxu0 0
      %1063 = vmatprep.subr.bf16.mxu0 0
      %1064 = vmatpush2.bf16.msra.mxu0 0
      %1065 = vmatprep.subr.bf16.mxu0 0
      %1066 = vmatpush2.bf16.msra.mxu0 0
      %1067 = vmatprep.subr.bf16.mxu0 0
      %1068 = vmatpush2.bf16.msra.mxu0 0
      %1069 = vmatprep.mubr.bf16.mxu0 0
      %1070 = vmatmul.mubr.bf16.gmra.mxu0 %v972
      %v1071 = vpop.f32.mrf.mxu0
      %v1072 = vadd.f32 0.0, %v1071
      %v1073 = vpop.f32.mrf.mxu0
      %v1074 = vpop.f32.mrf.mxu0
      %v1075 = vadd.f32 0.0, %v1074
      %v1076 = vpop.f32.mrf.mxu0
      %1077 = vdwg.mxu0
      %v1078 = vadd.f32 %v877, %v1072
      %v1079 = vadd.f32 %v878, %v1075
      %p1080 = scmp.eq.s32.totalorder %s22, 1
      // Predicated region
      $region49: #{t5_forward.2} parent=43 // pred_check
        %p1081 = pneg %p1080
      $region50: #{t5_forward.2} parent=43 // pred_check_branch
        %1083 = sbr.rel (%p1081) target = $region52
      $region51: #{t5_forward.2} parent=43 // pred_region
        %v1084 = vld [vmem:[%s5] sm:$0x1]
        %v1085 = vmul.f32 %v1078, %v1078
        %v1086 = vmul.f32 %v1079, %v1079
        %v1087 = vsel %vm352, %v1085, 0.0
        %1088 = vadd.xlane.f32.xlu0 %v1087
        %v1089 = vpop.xlane.xlu0 %1088
        %v1090 = vsel %vm352, %v1086, 0.0
        %1091 = vadd.xlane.f32.xlu0 %v1090
        %v1092 = vpop.xlane.xlu0 %1091
        %v1093 = vmul.f32 %v1089, %v359
        %v1094 = vmul.f32 %v1092, %v359
        %v1095 = vadd.f32 %v1093, 1e-06
        %v1096 = vadd.f32 %v1094, 1e-06
        %v1097 = vrsqrt.pop %v1095
        %v1098 = vrsqrt.pop %v1096
        %v1099 = vmul.f32 %v1078, %v1097
        %v1100 = vmul.f32 %v1079, %v1098
        %v1102 = vlaneseq
        %v1103 = vshrl.u32 %v1102, 7
        %v1104 = vsub.s32 0, %v1103
        %v1105 = vrot.slane %v1084, %v1104
        %v1107 = vmul.f32 %v1099, %v1105
        %v1108 = vmul.f32 %v1100, %v1105
        %1109 = vst.msk [vmem:[%s320] sm:$0xff] %vm352, %v1107
        %1110 = vst.msk [vmem:[%s320 + $0x8] sm:$0xff] %vm352, %v1108
      $region52: #{t5_forward.2} parent=43 // pred_fallthru
        _
      %p1111 = scmp.lt.s32.totalorder %s22, 1
      // Predicated region
      $region53: #{t5_forward.2} parent=43 // pred_check
        %p1112 = pneg %p1111
      $region54: #{t5_forward.2} parent=43 // pred_check_branch
        %1114 = sbr.rel (%p1112) target = $region56
      $region55: #{t5_forward.2} parent=43 // pred_region
        %1115 = vst.msk [vmem:[%s320] sm:$0xff] %vm352, %v1078
        %1116 = vst.msk [vmem:[%s320 + $0x8] sm:$0xff] %vm352, %v1079
      $region56: #{t5_forward.2} parent=43 // pred_fallthru
        _
      %p1117 = scmp.lt.s32.totalorder %s21, 1
      %s1118 = scalar_select %p1117, %s21, 1
      %s1119 = smul.addr %s1118, 2
      %s1120 = smul.addr %s1119, 8
      %s1121 = scalar_lea.vmem %s6, %s1120
      // Predicated region
      $region57: #{t5_forward.2} parent=43 // pred_check
        %p1122 = pneg %p193
      $region58: #{t5_forward.2} parent=43 // pred_check_branch
        %1124 = sbr.rel (%p1122) target = $region60
      $region59: #{t5_forward.2} parent=43 // pred_region
        _
      $region60: #{t5_forward.2} parent=43 // pred_fallthru
        _
    $region44: #{t5_forward.2} parent=5 // pred_fallthru
      _
    %p1125 = scmp.le.s32.totalorder 2, %s12
    // Predicated region
    $region61: #{t5_forward.2} parent=5 // pred_check
      %p1126 = pneg %p1125
    $region62: #{t5_forward.2} parent=5 // pred_check_branch
      %1128 = sbr.rel (%p1126) target = $region64
    $region63: #{t5_forward.2} parent=5 // pred_region
      %s1129 = ssub.s32 %s12, 2
      // Predicated region
      $region65: #{t5_forward.2} parent=63 // pred_check
        %p1130 = pneg %p199
      $region66: #{t5_forward.2} parent=63 // pred_check_branch
        %1132 = sbr.rel (%p1130) target = $region68
      $region67: #{t5_forward.2} parent=63 // pred_region
        %p1133 = scmp.lt.s32.totalorder %s23, 1
        %s1134 = scalar_select %p1133, %s23, 1
        %s1135 = smul.addr %s1134, 2
        %s1136 = smul.addr %s1135, 8
        %s1137 = scalar_lea.vmem %s6, %s1136
      $region68: #{t5_forward.2} parent=63 // pred_fallthru
        _
    $region64: #{t5_forward.2} parent=5 // pred_fallthru
      _
  $region6: #{t5_forward.2} parent=0 // loop_footer
    %s16 = sadd.s32 1, %s12
  $region7: #{t5_forward.2} parent=0 // loop_footer_branch
    %11 = sbr.rel target = $region3
  $region8: #{t5_forward.2} parent=0 // loop_exit
    _

// kernel: t5_forward.3
$region0: #{t5_forward.3}
  #allocation0 [shape = 'u32[]', space=smem, size = 0x4, offset = 0x4, fixed_abs, tag = 'smem constant byte address 0x4 - core index']
  #allocation1 [shape = 'u32[144,128]{1,0:T(1,128)}', space=vmem, size = 0x12000, scoped, tag = 'internal scratch']
  %s0 = inlined_call_operand.vmem [shape: f32[2,16,64], index: 0, kind: input, shape index: {}]
  %s1 = inlined_call_operand.vmem [shape: f32[1,64,64], index: 1, kind: input, shape index: {}]
  %s2 = inlined_call_operand.vmem [shape: f32[2,16,64], index: 2, kind: input, shape index: {}]
  %s3 = inlined_call_operand.vmem [shape: f32[1,64,64], index: 3, kind: input, shape index: {}]
  %s4 = inlined_call_operand.vmem [shape: f32[2,3,64], index: 4, kind: input, shape index: {}]
  %s5 = inlined_call_operand.vmem [shape: bf16[2,64,640], index: 5, kind: input, shape index: {}]
  %s6 = inlined_call_operand.vmem [shape: bf16[2,128,64], index: 6, kind: input, shape index: {}]
  %s7 = inlined_call_operand.vmem [shape: f32[1,64], index: 7, kind: input, shape index: {}]
  %s8 = inlined_call_operand.vmem [shape: bf16[64,256], index: 8, kind: input, shape index: {}]
  %s9 = inlined_call_operand.hbm [shape: f32[2,16,64], index: 9, kind: output, shape index: {0}]
  %s10 = inlined_call_operand.hbm [shape: f32[2,16,256], index: 10, kind: output, shape index: {1}]
  %11 = xla_tuple %s9, %s10
  %s12 = sld [smem:[#allocation0]]
  $region85: #{t5_forward.3} parent=0
    _
  %s14 = ssub.s32 1, %s12
  %s15 = scalar_select 0, %s14, %s12
  $region1: #{t5_forward.3} parent=0
    #allocation2 [shape = 'u8[16384]{0}', space=vmem, size = 0x4000, scoped, tag = 'output window, operand 0']
    #allocation3 [shape = 's32[2]{0}', space=sflag, size = 0x8, scoped, tag = 'scoped memory for t5_forward.3']
    #allocation4 [shape = 'u8[32768]{0}', space=vmem, size = 0x8000, scoped, tag = 'output window, operand 1']
    #allocation5 [shape = 's32[2]{0}', space=sflag, size = 0x8, scoped, tag = 'scoped memory for t5_forward.3']
    %16 = vsyncpa [#allocation3], 0
    %s17 = scalar_lea.sflag [#allocation3], 1
    %18 = vsyncpa %s17, 0
    %19 = vsyncpa [#allocation5], 0
    %s20 = scalar_lea.sflag [#allocation5], 1
    %21 = vsyncpa %s20, 0
    loop: start=0, step=1, limit=6
    $region2: #{t5_forward.3} parent=1 // loop_pre_header
      _
    $region3: #{t5_forward.3} parent=1 // loop_header
      %s23 = sphi 0, %s27
      %p24 = scmp.ge.s32.totalorder %s23, 6
      %s30 = sphi 0, %s42
      %s31 = sphi 0, %s38
      %s32 = sphi 0, %s30
      %s33 = sphi 0, %s31
      %s34 = sphi 0, %s32
      %s35 = sphi 0, %s33
      %s45 = sphi 0, %s47
      %s48 = sphi 0, %s45
      %s49 = sphi 0, %s48
      %s65 = sphi 0, %s49
      %s69 = sphi 0, %s69
      %s71 = sphi 0, %s69
      %s72 = sphi 0, %s71
      %s86 = sphi 0, %s72
      %s92 = sphi 0, %s94
      %s95 = sphi 0, %s92
      %s96 = sphi 0, %s95
      %s112 = sphi 0, %s96
      %s116 = sphi 0, %s116
      %s118 = sphi 0, %s116
      %s119 = sphi 0, %s118
      %s133 = sphi 0, %s119
      %s139 = sphi 0, %s141
      %s142 = sphi 0, %s139
      %s143 = sphi 0, %s142
      %s159 = sphi 0, %s143
      %s165 = sphi 0, %s167
      %s168 = sphi 0, %s165
      %s169 = sphi 0, %s168
      %s185 = sphi 0, %s169
      %s191 = sphi 0, %s193
      %s194 = sphi 0, %s191
      %s195 = sphi 0, %s194
      %s211 = sphi 0, %s195
      %s215 = sphi 0, %s215
      %s217 = sphi 0, %s215
      %s218 = sphi 0, %s217
      %s232 = sphi 0, %s218
      %s236 = sphi 0, %s236
      %s238 = sphi 0, %s236
      %s239 = sphi 0, %s238
      %s253 = sphi 0, %s239
      %s259 = sphi 0, %s261
      %s262 = sphi 0, %s259
      %s263 = sphi 0, %s262
      %s279 = sphi 0, %s263
      %s285 = sphi 0, %s287
      %s288 = sphi 0, %s285
      %s289 = sphi 0, %s288
      %s305 = sphi 0, %s289
    $region4: #{t5_forward.3} parent=1 // loop_header_branch
      %26 = sbr.rel (%p24) target = $region8
    $region5: #{t5_forward.3} parent=1 // loop_body
      %s28 = ssub.s32 %s23, 1
      %s29 = ssub.s32 %s23, 2
      %s36 = sadd.s32 1, %s31
      %p37 = scmp.ge.s32.totalorder %s36, 2
      %s38 = scalar_select %p37, 0, %s36
      %s39 = sadd.s32 1, %s30
      %s40 = scalar_select %p37, %s39, %s30
      %p41 = scmp.ge.s32.totalorder %s40, 2
      %s42 = scalar_select %p41, 0, %s40
      %s43 = ssub.s32 %s30, %s42
      %p44 = scmp.eq.s32.totalorder %s43, 0
      %s46 = sadd.s32 %s45, 1
      %s47 = scalar_select %p44, %s45, %s46
      %p50 = pneg %p44
      %p51 = scmp.eq.s32.totalorder %s23, 3
      %p52 = por %p50, %p51
      %p53 = scmp.ne.s32.totalorder %s45, %s48
      %p54 = scmp.eq.s32.totalorder %s23, 0
      %p55 = por %p53, %p54
      %p56 = scmp.ne.s32.totalorder %s45, %s48
      %p57 = scmp.eq.s32.totalorder %s28, 3
      %p58 = por %p56, %p57
      %p59 = scmp.ne.s32.totalorder %s48, %s49
      %p60 = scmp.eq.s32.totalorder %s28, 0
      %p61 = por %p59, %p60
      %p62 = scmp.ne.s32.totalorder %s48, %s49
      %p63 = scmp.eq.s32.totalorder %s29, 3
      %p64 = por %p62, %p63
      %p66 = scmp.ne.s32.totalorder %s49, %s65
      %p67 = scmp.eq.s32.totalorder %s29, 0
      %p68 = por %p66, %p67
      %s70 = sadd.s32 %s69, 1
      %p73 = scmp.eq.s32.totalorder %s23, 3
      %p74 = scmp.ne.s32.totalorder %s69, %s71
      %p75 = scmp.eq.s32.totalorder %s23, 0
      %p76 = por %p74, %p75
      %p77 = scmp.ne.s32.totalorder %s69, %s71
      %p78 = scmp.eq.s32.totalorder %s28, 3
      %p79 = por %p77, %p78
      %p80 = scmp.ne.s32.totalorder %s71, %s72
      %p81 = scmp.eq.s32.totalorder %s28, 0
      %p82 = por %p80, %p81
      %p83 = scmp.ne.s32.totalorder %s71, %s72
      %p84 = scmp.eq.s32.totalorder %s29, 3
      %p85 = por %p83, %p84
      %p87 = scmp.ne.s32.totalorder %s72, %s86
      %p88 = scmp.eq.s32.totalorder %s29, 0
      %p89 = por %p87, %p88
      %s90 = ssub.s32 %s30, %s42
      %p91 = scmp.eq.s32.totalorder %s90, 0
      %s93 = sadd.s32 %s92, 1
      %s94 = scalar_select %p91, %s92, %s93
      %p97 = pneg %p91
      %p98 = scmp.eq.s32.totalorder %s23, 3
      %p99 = por %p97, %p98
      %p100 = scmp.ne.s32.totalorder %s92, %s95
      %p101 = scmp.eq.s32.totalorder %s23, 0
      %p102 = por %p100, %p101
      %p103 = scmp.ne.s32.totalorder %s92, %s95
      %p104 = scmp.eq.s32.totalorder %s28, 3
      %p105 = por %p103, %p104
      %p106 = scmp.ne.s32.totalorder %s95, %s96
      %p107 = scmp.eq.s32.totalorder %s28, 0
      %p108 = por %p106, %p107
      %p109 = scmp.ne.s32.totalorder %s95, %s96
      %p110 = scmp.eq.s32.totalorder %s29, 3
      %p111 = por %p109, %p110
      %p113 = scmp.ne.s32.totalorder %s96, %s112
      %p114 = scmp.eq.s32.totalorder %s29, 0
      %p115 = por %p113, %p114
      %s117 = sadd.s32 %s116, 1
      %p120 = scmp.eq.s32.totalorder %s23, 3
      %p121 = scmp.ne.s32.totalorder %s116, %s118
      %p122 = scmp.eq.s32.totalorder %s23, 0
      %p123 = por %p121, %p122
      %p124 = scmp.ne.s32.totalorder %s116, %s118
      %p125 = scmp.eq.s32.totalorder %s28, 3
      %p126 = por %p124, %p125
      %p127 = scmp.ne.s32.totalorder %s118, %s119
      %p128 = scmp.eq.s32.totalorder %s28, 0
      %p129 = por %p127, %p128
      %p130 = scmp.ne.s32.totalorder %s118, %s119
      %p131 = scmp.eq.s32.totalorder %s29, 3
      %p132 = por %p130, %p131
      %p134 = scmp.ne.s32.totalorder %s119, %s133
      %p135 = scmp.eq.s32.totalorder %s29, 0
      %p136 = por %p134, %p135
      %s137 = ssub.s32 %s31, %s38
      %p138 = scmp.eq.s32.totalorder %s137, 0
      %s140 = sadd.s32 %s139, 1
      %s141 = scalar_select %p138, %s139, %s140
      %p144 = pneg %p138
      %p145 = scmp.eq.s32.totalorder %s23, 3
      %p146 = por %p144, %p145
      %p147 = scmp.ne.s32.totalorder %s139, %s142
      %p148 = scmp.eq.s32.totalorder %s23, 0
      %p149 = por %p147, %p148
      %p150 = scmp.ne.s32.totalorder %s139, %s142
      %p151 = scmp.eq.s32.totalorder %s28, 3
      %p152 = por %p150, %p151
      %p153 = scmp.ne.s32.totalorder %s142, %s143
      %p154 = scmp.eq.s32.totalorder %s28, 0
      %p155 = por %p153, %p154
      %p156 = scmp.ne.s32.totalorder %s142, %s143
      %p157 = scmp.eq.s32.totalorder %s29, 3
      %p158 = por %p156, %p157
      %p160 = scmp.ne.s32.totalorder %s143, %s159
      %p161 = scmp.eq.s32.totalorder %s29, 0
      %p162 = por %p160, %p161
      %s163 = ssub.s32 %s31, %s38
      %p164 = scmp.eq.s32.totalorder %s163, 0
      %s166 = sadd.s32 %s165, 1
      %s167 = scalar_select %p164, %s165, %s166
      %p170 = pneg %p164
      %p171 = scmp.eq.s32.totalorder %s23, 3
      %p172 = por %p170, %p171
      %p173 = scmp.ne.s32.totalorder %s165, %s168
      %p174 = scmp.eq.s32.totalorder %s23, 0
      %p175 = por %p173, %p174
      %p176 = scmp.ne.s32.totalorder %s165, %s168
      %p177 = scmp.eq.s32.totalorder %s28, 3
      %p178 = por %p176, %p177
      %p179 = scmp.ne.s32.totalorder %s168, %s169
      %p180 = scmp.eq.s32.totalorder %s28, 0
      %p181 = por %p179, %p180
      %p182 = scmp.ne.s32.totalorder %s168, %s169
      %p183 = scmp.eq.s32.totalorder %s29, 3
      %p184 = por %p182, %p183
      %p186 = scmp.ne.s32.totalorder %s169, %s185
      %p187 = scmp.eq.s32.totalorder %s29, 0
      %p188 = por %p186, %p187
      %s189 = ssub.s32 %s31, %s38
      %p190 = scmp.eq.s32.totalorder %s189, 0
      %s192 = sadd.s32 %s191, 1
      %s193 = scalar_select %p190, %s191, %s192
      %p196 = pneg %p190
      %p197 = scmp.eq.s32.totalorder %s23, 3
      %p198 = por %p196, %p197
      %p199 = scmp.ne.s32.totalorder %s191, %s194
      %p200 = scmp.eq.s32.totalorder %s23, 0
      %p201 = por %p199, %p200
      %p202 = scmp.ne.s32.totalorder %s191, %s194
      %p203 = scmp.eq.s32.totalorder %s28, 3
      %p204 = por %p202, %p203
      %p205 = scmp.ne.s32.totalorder %s194, %s195
      %p206 = scmp.eq.s32.totalorder %s28, 0
      %p207 = por %p205, %p206
      %p208 = scmp.ne.s32.totalorder %s194, %s195
      %p209 = scmp.eq.s32.totalorder %s29, 3
      %p210 = por %p208, %p209
      %p212 = scmp.ne.s32.totalorder %s195, %s211
      %p213 = scmp.eq.s32.totalorder %s29, 0
      %p214 = por %p212, %p213
      %s216 = sadd.s32 %s215, 1
      %p219 = scmp.eq.s32.totalorder %s23, 3
      %p220 = scmp.ne.s32.totalorder %s215, %s217
      %p221 = scmp.eq.s32.totalorder %s23, 0
      %p222 = por %p220, %p221
      %p223 = scmp.ne.s32.totalorder %s215, %s217
      %p224 = scmp.eq.s32.totalorder %s28, 3
      %p225 = por %p223, %p224
      %p226 = scmp.ne.s32.totalorder %s217, %s218
      %p227 = scmp.eq.s32.totalorder %s28, 0
      %p228 = por %p226, %p227
      %p229 = scmp.ne.s32.totalorder %s217, %s218
      %p230 = scmp.eq.s32.totalorder %s29, 3
      %p231 = por %p229, %p230
      %p233 = scmp.ne.s32.totalorder %s218, %s232
      %p234 = scmp.eq.s32.totalorder %s29, 0
      %p235 = por %p233, %p234
      %s237 = sadd.s32 %s236, 1
      %p240 = scmp.eq.s32.totalorder %s23, 3
      %p241 = scmp.ne.s32.totalorder %s236, %s238
      %p242 = scmp.eq.s32.totalorder %s23, 0
      %p243 = por %p241, %p242
      %p244 = scmp.ne.s32.totalorder %s236, %s238
      %p245 = scmp.eq.s32.totalorder %s28, 3
      %p246 = por %p244, %p245
      %p247 = scmp.ne.s32.totalorder %s238, %s239
      %p248 = scmp.eq.s32.totalorder %s28, 0
      %p249 = por %p247, %p248
      %p250 = scmp.ne.s32.totalorder %s238, %s239
      %p251 = scmp.eq.s32.totalorder %s29, 3
      %p252 = por %p250, %p251
      %p254 = scmp.ne.s32.totalorder %s239, %s253
      %p255 = scmp.eq.s32.totalorder %s29, 0
      %p256 = por %p254, %p255
      %s257 = ssub.s32 %s30, %s42
      %p258 = scmp.eq.s32.totalorder %s257, 0
      %s260 = sadd.s32 %s259, 1
      %s261 = scalar_select %p258, %s259, %s260
      %p264 = pneg %p258
      %p265 = scmp.eq.s32.totalorder %s23, 3
      %p266 = por %p264, %p265
      %p267 = scmp.ne.s32.totalorder %s259, %s262
      %p268 = scmp.eq.s32.totalorder %s23, 0
      %p269 = por %p267, %p268
      %p270 = scmp.ne.s32.totalorder %s259, %s262
      %p271 = scmp.eq.s32.totalorder %s28, 3
      %p272 = por %p270, %p271
      %p273 = scmp.ne.s32.totalorder %s262, %s263
      %p274 = scmp.eq.s32.totalorder %s28, 0
      %p275 = por %p273, %p274
      %p276 = scmp.ne.s32.totalorder %s262, %s263
      %p277 = scmp.eq.s32.totalorder %s29, 3
      %p278 = por %p276, %p277
      %p280 = scmp.ne.s32.totalorder %s263, %s279
      %p281 = scmp.eq.s32.totalorder %s29, 0
      %p282 = por %p280, %p281
      %s283 = ssub.s32 %s30, %s42
      %p284 = scmp.eq.s32.totalorder %s283, 0
      %s286 = sadd.s32 %s285, 1
      %s287 = scalar_select %p284, %s285, %s286
      %p290 = pneg %p284
      %p291 = scmp.eq.s32.totalorder %s23, 3
      %p292 = por %p290, %p291
      %p293 = scmp.ne.s32.totalorder %s285, %s288
      %p294 = scmp.eq.s32.totalorder %s23, 0
      %p295 = por %p293, %p294
      %p296 = scmp.ne.s32.totalorder %s285, %s288
      %p297 = scmp.eq.s32.totalorder %s28, 3
      %p298 = por %p296, %p297
      %p299 = scmp.ne.s32.totalorder %s288, %s289
      %p300 = scmp.eq.s32.totalorder %s28, 0
      %p301 = por %p299, %p300
      %p302 = scmp.ne.s32.totalorder %s288, %s289
      %p303 = scmp.eq.s32.totalorder %s29, 3
      %p304 = por %p302, %p303
      %p306 = scmp.ne.s32.totalorder %s289, %s305
      %p307 = scmp.eq.s32.totalorder %s29, 0
      %p308 = por %p306, %p307
      %p309 = scmp.le.s32.totalorder 1, %s23
      %p310 = scmp.lt.s32.totalorder %s23, 5
      %p311 = pnand %p309, %p310
      %p312 = pneg %p311
      // Predicated region
      $region9: #{t5_forward.3} parent=5 // pred_check
        _
      $region10: #{t5_forward.3} parent=5 // pred_check_branch
        %314 = sbr.rel (%p311) target = $region12
      $region11: #{t5_forward.3} parent=5 // pred_region
        %s315 = ssub.s32 %s23, 1
        // Predicated region
        $region13: #{t5_forward.3} parent=11 // pred_check
          %p316 = pneg %p82
        $region14: #{t5_forward.3} parent=11 // pred_check_branch
          %318 = sbr.rel (%p316) target = $region16
        $region15: #{t5_forward.3} parent=11 // pred_region
          _
        $region16: #{t5_forward.3} parent=11 // pred_fallthru
          _
        // Predicated region
        $region17: #{t5_forward.3} parent=11 // pred_check
          %p319 = pneg %p129
        $region18: #{t5_forward.3} parent=11 // pred_check_branch
          %321 = sbr.rel (%p319) target = $region20
        $region19: #{t5_forward.3} parent=11 // pred_region
          _
        $region20: #{t5_forward.3} parent=11 // pred_fallthru
          _
        // Predicated region
        $region21: #{t5_forward.3} parent=11 // pred_check
          %p322 = pneg %p228
        $region22: #{t5_forward.3} parent=11 // pred_check_branch
          %324 = sbr.rel (%p322) target = $region24
        $region23: #{t5_forward.3} parent=11 // pred_region
          _
        $region24: #{t5_forward.3} parent=11 // pred_fallthru
          _
        // Predicated region
        $region25: #{t5_forward.3} parent=11 // pred_check
          %p325 = pneg %p249
        $region26: #{t5_forward.3} parent=11 // pred_check_branch
          %327 = sbr.rel (%p325) target = $region28
        $region27: #{t5_forward.3} parent=11 // pred_region
          _
        $region28: #{t5_forward.3} parent=11 // pred_fallthru
          _
      $region12: #{t5_forward.3} parent=5 // pred_fallthru
        _
      %p328 = scmp.lt.s32.totalorder %s23, 4
      // Predicated region
      $region29: #{t5_forward.3} parent=5 // pred_check
        %p329 = pneg %p328
      $region30: #{t5_forward.3} parent=5 // pred_check_branch
        %331 = sbr.rel (%p329) target = $region32
      $region31: #{t5_forward.3} parent=5 // pred_region
        // Predicated region
        $region33: #{t5_forward.3} parent=31 // pred_check
          %p332 = pneg %p55
        $region34: #{t5_forward.3} parent=31 // pred_check_branch
          %334 = sbr.rel (%p332) target = $region36
        $region35: #{t5_forward.3} parent=31 // pred_region
          %p335 = scmp.lt.s32.totalorder %s30, 1
          %s336 = scalar_select %p335, %s30, 1
          %s337 = smul.addr %s336, 2
          %s338 = smul.addr %s337, 8
          %s339 = scalar_lea.vmem %s0, %s338
        $region36: #{t5_forward.3} parent=31 // pred_fallthru
          _
        // Predicated region
        $region37: #{t5_forward.3} parent=31 // pred_check
          %p340 = pneg %p102
        $region38: #{t5_forward.3} parent=31 // pred_check_branch
          %342 = sbr.rel (%p340) target = $region40
        $region39: #{t5_forward.3} parent=31 // pred_region
          %p343 = scmp.lt.s32.totalorder %s30, 1
          %s344 = scalar_select %p343, %s30, 1
          %s345 = smul.addr %s344, 2
          %s346 = smul.addr %s345, 8
          %s347 = scalar_lea.vmem %s2, %s346
        $region40: #{t5_forward.3} parent=31 // pred_fallthru
          _
        // Predicated region
        $region41: #{t5_forward.3} parent=31 // pred_check
          %p348 = pneg %p149
        $region42: #{t5_forward.3} parent=31 // pred_check_branch
          %350 = sbr.rel (%p348) target = $region44
        $region43: #{t5_forward.3} parent=31 // pred_region
          %p351 = scmp.lt.s32.totalorder %s31, 1
          %s352 = scalar_select %p351, %s31, 1
          %s353 = smul.addr %s352, 4
          %s354 = scalar_lea.vmem %s4, %s353
        $region44: #{t5_forward.3} parent=31 // pred_fallthru
          _
        // Predicated region
        $region45: #{t5_forward.3} parent=31 // pred_check
          %p355 = pneg %p175
        $region46: #{t5_forward.3} parent=31 // pred_check_branch
          %357 = sbr.rel (%p355) target = $region48
        $region47: #{t5_forward.3} parent=31 // pred_region
          %p358 = scmp.lt.s32.totalorder %s31, 1
          %s359 = scalar_select %p358, %s31, 1
          %s360 = smul.addr %s359, 40
          %s361 = smul.addr %s360, 4
          %s362 = scalar_lea.vmem %s5, %s361
        $region48: #{t5_forward.3} parent=31 // pred_fallthru
          _
        // Predicated region
        $region49: #{t5_forward.3} parent=31 // pred_check
          %p363 = pneg %p201
        $region50: #{t5_forward.3} parent=31 // pred_check_branch
          %365 = sbr.rel (%p363) target = $region52
        $region51: #{t5_forward.3} parent=31 // pred_region
          %p366 = scmp.lt.s32.totalorder %s31, 1
          %s367 = scalar_select %p366, %s31, 1
          %s368 = smul.addr %s367, 16
          %s369 = smul.addr %s368, 4
          %s370 = scalar_lea.vmem %s6, %s369
        $region52: #{t5_forward.3} parent=31 // pred_fallthru
          _
      $region32: #{t5_forward.3} parent=5 // pred_fallthru
        _
      %p371 = scmp.le.s32.totalorder 1, %s23
      %p372 = scmp.lt.s32.totalorder %s23, 5
      %p373 = pnand %p371, %p372
      %p374 = pneg %p373
      // Predicated region
      $region53: #{t5_forward.3} parent=5 // pred_check
        _
      $region54: #{t5_forward.3} parent=5 // pred_check_branch
        %376 = sbr.rel (%p373) target = $region56
      $region55: #{t5_forward.3} parent=5 // pred_region
        %s377 = ssub.s32 %s23, 1
        %p378 = scmp.lt.s32.totalorder %s32, 1
        %s379 = scalar_select %p378, %s32, 1
        %s380 = smul.addr %s379, 2
        %s381 = smul.addr %s380, 8
        %s382 = scalar_lea.vmem %s0, %s381
        %p383 = pneg %p61
        %p384 = pneg %p58
        %p385 = pneg %p82
        %p386 = pneg %p79
        %p387 = scmp.lt.s32.totalorder %s32, 1
        %s388 = scalar_select %p387, %s32, 1
        %s389 = smul.addr %s388, 2
        %s390 = smul.addr %s389, 8
        %s391 = scalar_lea.vmem %s2, %s390
        %p392 = pneg %p108
        %p393 = pneg %p105
        %p394 = pneg %p129
        %p395 = pneg %p126
        %p396 = scmp.lt.s32.totalorder %s33, 1
        %s397 = scalar_select %p396, %s33, 1
        %s398 = smul.addr %s397, 4
        %s399 = scalar_lea.vmem %s4, %s398
        %p400 = pneg %p155
        %p401 = pneg %p152
        %p402 = scmp.lt.s32.totalorder %s33, 1
        %s403 = scalar_select %p402, %s33, 1
        %s404 = smul.addr %s403, 40
        %s405 = smul.addr %s404, 4
        %s406 = scalar_lea.vmem %s5, %s405
        %p407 = pneg %p181
        %p408 = pneg %p178
        %p409 = scmp.lt.s32.totalorder %s33, 1
        %s410 = scalar_select %p409, %s33, 1
        %s411 = smul.addr %s410, 16
        %s412 = smul.addr %s411, 4
        %s413 = scalar_lea.vmem %s6, %s412
        %p414 = pneg %p207
        %p415 = pneg %p204
        %p416 = pneg %p228
        %p417 = pneg %p225
        %p418 = pneg %p249
        %p419 = pneg %p246
        %p420 = pneg %p275
        %p421 = pneg %p272
        %s422 = sand.u32 %s262, 1
        %s423 = scalar_lea.sflag [#allocation3], %s422
        %s424 = sand.u32 %s262, 1
        %s425 = smul.addr %s424, 16
        %s426 = scalar_lea.vmem [#allocation2], %s425
        %p427 = pneg %p301
        %p428 = pneg %p298
        %s429 = sand.u32 %s288, 1
        %s430 = scalar_lea.sflag [#allocation5], %s429
        %s431 = sand.u32 %s288, 1
        %s432 = smul.addr %s431, 32
        %s433 = scalar_lea.vmem [#allocation4], %s432
        %p434 = scmp.lt.s32.totalorder %s32, 1
        %s435 = scalar_select %p434, %s32, 1
        %s436 = smul.addr %s435, 2
        %s437 = smul.addr %s436, 8
        %s438 = scalar_lea.vmem %s0, %s437
        %p439 = scmp.lt.s32.totalorder %s32, 1
        %s440 = scalar_select %p439, %s32, 1
        %s441 = smul.addr %s440, 2
        %s442 = smul.addr %s441, 8
        %s443 = scalar_lea.vmem %s2, %s442
        %p444 = scmp.lt.s32.totalorder %s33, 1
        %s445 = scalar_select %p444, %s33, 1
        %s446 = smul.addr %s445, 4
        %s447 = scalar_lea.vmem %s4, %s446
        %p448 = scmp.lt.s32.totalorder %s33, 1
        %s449 = scalar_select %p448, %s33, 1
        %s450 = smul.addr %s449, 40
        %s451 = smul.addr %s450, 4
        %s452 = scalar_lea.vmem %s5, %s451
        %p453 = scmp.lt.s32.totalorder %s33, 1
        %s454 = scalar_select %p453, %s33, 1
        %s455 = smul.addr %s454, 16
        %s456 = smul.addr %s455, 4
        %s457 = scalar_lea.vmem %s6, %s456
        %p459 = scmp.eq.s32.totalorder %s33, 0
        // Predicated region
        $region57: #{t5_forward.3} parent=55 // pred_check
          %p460 = pneg %p459
        $region58: #{t5_forward.3} parent=55 // pred_check_branch
          %462 = sbr.rel (%p460) target = $region60
        $region59: #{t5_forward.3} parent=55 // pred_region
          %v463 = vld [vmem:[%s438] sm:$0xff]
          %v464 = vld [vmem:[%s438 + $0x8] sm:$0xff]
          %vm465 = vcmask 523264
          %466 = vst.msk [vmem:[%s426] sm:$0xff] %vm465, %v463
          %467 = vst.msk [vmem:[%s426 + $0x8] sm:$0xff] %vm465, %v464
        $region60: #{t5_forward.3} parent=55 // pred_fallthru
          _
        %v468 = vld [vmem:[%s426] sm:$0xff]
        %v469 = vld [vmem:[%s426 + $0x8] sm:$0xff]
        %v470 = vld [vmem:[%s447] sm:$0x7]
        %v471 = vld [vmem:[%s452] sm:$0xff]
        %v472 = vld [vmem:[%s452 + $0x8] sm:$0xff]
        %v473 = vld [vmem:[%s452 + $0x10] sm:$0xf]
        %v474 = vld [vmem:[%s452 + $0x14] sm:$0xff]
        %v475 = vld [vmem:[%s452 + $0x1c] sm:$0xff]
        %v476 = vld [vmem:[%s452 + $0x24] sm:$0xf]
        %v477 = vld [vmem:[%s452 + $0x28] sm:$0xff]
        %v478 = vld [vmem:[%s452 + $0x30] sm:$0xff]
        %v479 = vld [vmem:[%s452 + $0x38] sm:$0xf]
        %v480 = vld [vmem:[%s452 + $0x3c] sm:$0xff]
        %v481 = vld [vmem:[%s452 + $0x44] sm:$0xff]
        %v482 = vld [vmem:[%s452 + $0x4c] sm:$0xf]
        %v483 = vld [vmem:[%s452 + $0x50] sm:$0xff]
        %v484 = vld [vmem:[%s452 + $0x58] sm:$0xff]
        %v485 = vld [vmem:[%s452 + $0x60] sm:$0xf]
        %v486 = vld [vmem:[%s452 + $0x64] sm:$0xff]
        %v487 = vld [vmem:[%s452 + $0x6c] sm:$0xff]
        %v488 = vld [vmem:[%s452 + $0x74] sm:$0xf]
        %v489 = vld [vmem:[%s452 + $0x78] sm:$0xff]
        %v490 = vld [vmem:[%s452 + $0x80] sm:$0xff]
        %v491 = vld [vmem:[%s452 + $0x88] sm:$0xf]
        %v492 = vld [vmem:[%s452 + $0x8c] sm:$0xff]
        %v493 = vld [vmem:[%s452 + $0x94] sm:$0xff]
        %v494 = vld [vmem:[%s452 + $0x9c] sm:$0xf]
        %v495 = vmul.f32 %v468, %v468
        %v496 = vmul.f32 %v469, %v469
        %vm497 = vcmask 523264
        %v498 = vsel %vm497, %v495, 0.0
        %499 = vadd.xlane.f32.xlu0 %v498
        %v500 = vpop.xlane.xlu0 %499
        %v501 = vsel %vm497, %v496, 0.0
        %502 = vadd.xlane.f32.xlu0 %v501
        %v503 = vpop.xlane.xlu0 %502
        %v504 = vrcp.pop 64.0
        %v505 = vmul.f32 %v500, %v504
        %v506 = vmul.f32 %v503, %v504
        %v507 = vadd.f32 %v505, 1e-06
        %v508 = vadd.f32 %v506, 1e-06
        %v509 = vrsqrt.pop %v507
        %v510 = vrsqrt.pop %v508
        %v511 = vmul.f32 %v468, %v509
        %v512 = vmul.f32 %v469, %v510
        %v513 = vlaneseq
        %v514 = vshrl.u32 %v513, 7
        %v515 = vsub.s32 0, %v514
        %v516 = vrot.slane %v470, %v515
        %v517 = vmul.f32 %v511, %v516
        %v518 = vmul.f32 %v512, %v516
        %v519 = vpack.c.bf16 %v518, %v517
        %v528 = vunpack.c.l.b16 %v471
        %v529 = vunpack.c.h.b16 %v471
        %v530 = vunpack.c.l.b16 %v474
        %v531 = vunpack.c.h.b16 %v474
        %v532 = vunpack.c.l.b16 %v477
        %v533 = vunpack.c.h.b16 %v477
        %v534 = vunpack.c.l.b16 %v480
        %v535 = vunpack.c.h.b16 %v480
        %v536 = vunpack.c.l.b16 %v483
        %v537 = vunpack.c.h.b16 %v483
        %v538 = vunpack.c.l.b16 %v486
        %v539 = vunpack.c.h.b16 %v486
        %v540 = vunpack.c.l.b16 %v489
        %v541 = vunpack.c.h.b16 %v489
        %v542 = vunpack.c.l.b16 %v492
        %v543 = vunpack.c.h.b16 %v492
        %v544 = vpack.c.b16 %v530, %v528
        %v545 = vpack.c.b16 %v531, %v529
        %v546 = vpack.c.b16 %v534, %v532
        %v547 = vpack.c.b16 %v535, %v533
        %v548 = vpack.c.b16 %v538, %v536
        %v549 = vpack.c.b16 %v539, %v537
        %v550 = vpack.c.b16 %v542, %v540
        %v551 = vpack.c.b16 %v543, %v541
        %v561 = vsel %vm497, %v519, 0
        %563 = vmatprep.subr.bf16.mxu0 0
        %564 = vmatpush1.bf16.msra.mxu0 0
        %565 = vmatprep.subr.bf16.mxu0 0
        %566 = vmatpush1.bf16.msra.mxu0 0
        %567 = vmatprep.subr.bf16.mxu0 0
        %568 = vmatpush1.bf16.msra.mxu0 0
        %569 = vmatprep.subr.bf16.mxu0 0
        %570 = vmatpush1.bf16.msra.mxu0 0
        %571 = vmatprep.subr.bf16.mxu0 %v551
        %572 = vmatpush1.bf16.msra.mxu0 %v550
        %573 = vmatprep.subr.bf16.mxu0 %v549
        %574 = vmatpush1.bf16.msra.mxu0 %v548
        %575 = vmatprep.subr.bf16.mxu0 %v547
        %576 = vmatpush1.bf16.msra.mxu0 %v546
        %577 = vmatprep.subr.bf16.mxu0 %v545
        %578 = vmatpush1.bf16.msra.mxu0 %v544
        %579 = vmatprep.subr.bf16.mxu0 0
        %580 = vmatpush2.bf16.msra.mxu0 0
        %581 = vmatprep.subr.bf16.mxu0 0
        %582 = vmatpush2.bf16.msra.mxu0 0
        %583 = vmatprep.subr.bf16.mxu0 0
        %584 = vmatpush2.bf16.msra.mxu0 0
        %585 = vmatprep.subr.bf16.mxu0 0
        %586 = vmatpush2.bf16.msra.mxu0 0
        %587 = vmatprep.subr.bf16.mxu0 0
        %588 = vmatpush2.bf16.msra.mxu0 0
        %589 = vmatprep.subr.bf16.mxu0 0
        %590 = vmatpush2.bf16.msra.mxu0 0
        %591 = vmatprep.subr.bf16.mxu0 0
        %592 = vmatpush2.bf16.msra.mxu0 0
        %593 = vmatprep.subr.bf16.mxu0 0
        %594 = vmatpush2.bf16.msra.mxu0 0
        %595 = vmatprep.mubr.bf16.mxu0 0
        %596 = vmatmul.mubr.bf16.gmra.mxu0 %v561
        %v597 = vpop.f32.mrf.mxu0
        %v598 = vadd.f32 0.0, %v597
        %v599 = vpop.f32.mrf.mxu0
        %v600 = vadd.f32 0.0, %v599
        %v601 = vpop.f32.mrf.mxu0
        %v602 = vadd.f32 0.0, %v601
        %v603 = vpop.f32.mrf.mxu0
        %v604 = vadd.f32 0.0, %v603
        %605 = vdwg.mxu0
        %v606 = vld [vmem:[%s1] sm:$0xff]
        %v607 = vld [vmem:[%s1 + $0x8] sm:$0xff]
        %v608 = vld [vmem:[%s1 + $0x10] sm:$0xff]
        %v609 = vld [vmem:[%s1 + $0x18] sm:$0xff]
        %v610 = vld [vmem:[%s1 + $0x20] sm:$0xff]
        %v611 = vld [vmem:[%s1 + $0x28] sm:$0xff]
        %v612 = vld [vmem:[%s1 + $0x30] sm:$0xff]
        %v613 = vld [vmem:[%s1 + $0x38] sm:$0xff]
        %616 = vrot.lane.b32.xlu0 %v598, 112
        %v617 = vpop.permute.xlu0 %616
        %618 = vrot.lane.b32.xlu0 %v602, 112
        %v619 = vpop.permute.xlu0 %618
        %622 = vrot.lane.b32.xlu0 %v598, 96
        %v623 = vpop.permute.xlu0 %622
        %624 = vrot.lane.b32.xlu0 %v602, 96
        %v625 = vpop.permute.xlu0 %624
        %628 = vrot.lane.b32.xlu0 %v598, 80
        %v629 = vpop.permute.xlu0 %628
        %630 = vrot.lane.b32.xlu0 %v602, 80
        %v631 = vpop.permute.xlu0 %630
        %v634 = vpack.c.bf16 %v602, %v598
        %v635 = vpack.c.bf16 %v619, %v617
        %v636 = vpack.c.bf16 %v625, %v623
        %v637 = vpack.c.bf16 %v631, %v629
        %640 = vrot.lane.b32.xlu0 %v600, 112
        %v641 = vpop.permute.xlu0 %640
        %642 = vrot.lane.b32.xlu0 %v604, 112
        %v643 = vpop.permute.xlu0 %642
        %646 = vrot.lane.b32.xlu0 %v600, 96
        %v647 = vpop.permute.xlu0 %646
        %648 = vrot.lane.b32.xlu0 %v604, 96
        %v649 = vpop.permute.xlu0 %648
        %652 = vrot.lane.b32.xlu0 %v600, 80
        %v653 = vpop.permute.xlu0 %652
        %654 = vrot.lane.b32.xlu0 %v604, 80
        %v655 = vpop.permute.xlu0 %654
        %v658 = vpack.c.bf16 %v604, %v600
        %v659 = vpack.c.bf16 %v643, %v641
        %v660 = vpack.c.bf16 %v649, %v647
        %v661 = vpack.c.bf16 %v655, %v653
        %666 = vrot.lane.b32.xlu0 %v634, 64
        %v667 = vpop.permute.xlu0 %666
        %668 = vrot.lane.b32.xlu0 %v635, 64
        %v669 = vpop.permute.xlu0 %668
        %670 = vrot.lane.b32.xlu0 %v636, 64
        %v671 = vpop.permute.xlu0 %670
        %672 = vrot.lane.b32.xlu0 %v637, 64
        %v673 = vpop.permute.xlu0 %672
        %vm674 = vcmask 130048
        %v676 = vsel %vm674, %v634, 0
        %v679 = vsel %vm674, %v635, 0
        %v682 = vsel %vm674, %v636, 0
        %v685 = vsel %vm674, %v637, 0
        %v688 = vsel %vm674, %v667, 0
        %v691 = vsel %vm674, %v669, 0
        %v694 = vsel %vm674, %v671, 0
        %v697 = vsel %vm674, %v673, 0
        %699 = vmatprep.subr.bf16.mxu0 0
        %700 = vmatpush1.bf16.xpose.msra.mxu0 0
        %701 = vmatprep.subr.bf16.mxu0 0
        %702 = vmatpush1.bf16.xpose.msra.mxu0 0
        %703 = vmatprep.subr.bf16.mxu0 0
        %704 = vmatpush1.bf16.xpose.msra.mxu0 0
        %705 = vmatprep.subr.bf16.mxu0 0
        %706 = vmatpush1.bf16.xpose.msra.mxu0 0
        %707 = vmatprep.subr.bf16.mxu0 0
        %708 = vmatpush1.bf16.xpose.msra.mxu0 %v697
        %709 = vmatprep.subr.bf16.mxu0 0
        %710 = vmatpush1.bf16.xpose.msra.mxu0 %v694
        %711 = vmatprep.subr.bf16.mxu0 0
        %712 = vmatpush1.bf16.xpose.msra.mxu0 %v691
        %713 = vmatprep.subr.bf16.mxu0 0
        %714 = vmatpush1.bf16.xpose.msra.mxu0 %v688
        %715 = vmatprep.subr.bf16.mxu0 0
        %716 = vmatpush2.bf16.xpose.msra.mxu0 0
        %717 = vmatprep.subr.bf16.mxu0 0
        %718 = vmatpush2.bf16.xpose.msra.mxu0 0
        %719 = vmatprep.subr.bf16.mxu0 0
        %720 = vmatpush2.bf16.xpose.msra.mxu0 0
        %721 = vmatprep.subr.bf16.mxu0 0
        %722 = vmatpush2.bf16.xpose.msra.mxu0 0
        %723 = vmatprep.subr.bf16.mxu0 0
        %724 = vmatpush2.bf16.xpose.msra.mxu0 0
        %725 = vmatprep.subr.bf16.mxu0 0
        %726 = vmatpush2.bf16.xpose.msra.mxu0 0
        %727 = vmatprep.subr.bf16.mxu0 0
        %728 = vmatpush2.bf16.xpose.msra.mxu0 0
        %729 = vmatprep.subr.bf16.mxu0 0
        %730 = vmatpush2.bf16.xpose.msra.mxu0 0
        %731 = vmatprep.mubr.bf16.mxu0 0
        %732 = vmatmul.mubr.bf16.gmra.mxu0 %v676
        %v733 = vpop.f32.mrf.mxu0
        %v734 = vadd.f32 %v606, %v733
        %v735 = vpop.f32.mrf.mxu0
        %v736 = vpop.f32.mrf.mxu0
        %v737 = vadd.f32 %v607, %v736
        %v738 = vpop.f32.mrf.mxu0
        %739 = vmatprep.mubr.bf16.mxu0 0
        %740 = vmatmul.mubr.bf16.gmra.mxu0 %v679
        %v741 = vpop.f32.mrf.mxu0
        %v742 = vadd.f32 %v608, %v741
        %v743 = vpop.f32.mrf.mxu0
        %v744 = vpop.f32.mrf.mxu0
        %v745 = vadd.f32 %v609, %v744
        %v746 = vpop.f32.mrf.mxu0
        %747 = vmatprep.mubr.bf16.mxu0 0
        %748 = vmatmul.mubr.bf16.gmra.mxu0 %v682
        %v749 = vpop.f32.mrf.mxu0
        %v750 = vadd.f32 %v610, %v749
        %v751 = vpop.f32.mrf.mxu0
        %v752 = vpop.f32.mrf.mxu0
        %v753 = vadd.f32 %v611, %v752
        %v754 = vpop.f32.mrf.mxu0
        %755 = vmatprep.mubr.bf16.mxu0 0
        %756 = vmatmul.mubr.bf16.gmra.mxu0 %v685
        %v757 = vpop.f32.mrf.mxu0
        %v758 = vadd.f32 %v612, %v757
        %v759 = vpop.f32.mrf.mxu0
        %v760 = vpop.f32.mrf.mxu0
        %v761 = vadd.f32 %v613, %v760
        %v762 = vpop.f32.mrf.mxu0
        %763 = vdwg.mxu0
        %v764 = vsel %vm497, %v734, -inf
        %765 = vmax.xlane.f32.xlu0 %v764
        %v766 = vpop.xlane.xlu0 %765
        %v767 = vsel %vm497, %v737, -inf
        %768 = vmax.xlane.f32.xlu0 %v767
        %v769 = vpop.xlane.xlu0 %768
        %v770 = vsel %vm497, %v742, -inf
        %771 = vmax.xlane.f32.xlu0 %v770
        %v772 = vpop.xlane.xlu0 %771
        %v773 = vsel %vm497, %v745, -inf
        %774 = vmax.xlane.f32.xlu0 %v773
        %v775 = vpop.xlane.xlu0 %774
        %v776 = vsel %vm497, %v750, -inf
        %777 = vmax.xlane.f32.xlu0 %v776
        %v778 = vpop.xlane.xlu0 %777
        %v779 = vsel %vm497, %v753, -inf
        %780 = vmax.xlane.f32.xlu0 %v779
        %v781 = vpop.xlane.xlu0 %780
        %v782 = vsel %vm497, %v758, -inf
        %783 = vmax.xlane.f32.xlu0 %v782
        %v784 = vpop.xlane.xlu0 %783
        %v785 = vsel %vm497, %v761, -inf
        %786 = vmax.xlane.f32.xlu0 %v785
        %v787 = vpop.xlane.xlu0 %786
        %v788 = vsub.f32 %v734, %v766
        %v789 = vsub.f32 %v737, %v769
        %v790 = vsub.f32 %v742, %v772
        %v791 = vsub.f32 %v745, %v775
        %v792 = vsub.f32 %v750, %v778
        %v793 = vsub.f32 %v753, %v781
        %v794 = vsub.f32 %v758, %v784
        %v795 = vsub.f32 %v761, %v787
        %v796 = vmul.f32 %v788, 1.442695
        %v797 = vpow.pop %v796
        %v798 = vmul.f32 %v789, 1.442695
        %v799 = vpow.pop %v798
        %v800 = vmul.f32 %v790, 1.442695
        %v801 = vpow.pop %v800
        %v802 = vmul.f32 %v791, 1.442695
        %v803 = vpow.pop %v802
        %v804 = vmul.f32 %v792, 1.442695
        %v805 = vpow.pop %v804
        %v806 = vmul.f32 %v793, 1.442695
        %v807 = vpow.pop %v806
        %v808 = vmul.f32 %v794, 1.442695
        %v809 = vpow.pop %v808
        %v810 = vmul.f32 %v795, 1.442695
        %v811 = vpow.pop %v810
        %v812 = vsel %vm497, %v797, 0.0
        %813 = vadd.xlane.f32.xlu0 %v812
        %v814 = vpop.xlane.xlu0 %813
        %v815 = vsel %vm497, %v799, 0.0
        %816 = vadd.xlane.f32.xlu0 %v815
        %v817 = vpop.xlane.xlu0 %816
        %v818 = vsel %vm497, %v801, 0.0
        %819 = vadd.xlane.f32.xlu0 %v818
        %v820 = vpop.xlane.xlu0 %819
        %v821 = vsel %vm497, %v803, 0.0
        %822 = vadd.xlane.f32.xlu0 %v821
        %v823 = vpop.xlane.xlu0 %822
        %v824 = vsel %vm497, %v805, 0.0
        %825 = vadd.xlane.f32.xlu0 %v824
        %v826 = vpop.xlane.xlu0 %825
        %v827 = vsel %vm497, %v807, 0.0
        %828 = vadd.xlane.f32.xlu0 %v827
        %v829 = vpop.xlane.xlu0 %828
        %v830 = vsel %vm497, %v809, 0.0
        %831 = vadd.xlane.f32.xlu0 %v830
        %v832 = vpop.xlane.xlu0 %831
        %v833 = vsel %vm497, %v811, 0.0
        %834 = vadd.xlane.f32.xlu0 %v833
        %v835 = vpop.xlane.xlu0 %834
        %v836 = vrcp.pop %v814
        %v837 = vrcp.pop %v817
        %v838 = vrcp.pop %v820
        %v839 = vrcp.pop %v823
        %v840 = vrcp.pop %v826
        %v841 = vrcp.pop %v829
        %v842 = vrcp.pop %v832
        %v843 = vrcp.pop %v835
        %v844 = vmul.f32 %v797, %v836
        %v845 = vmul.f32 %v799, %v837
        %v846 = vmul.f32 %v801, %v838
        %v847 = vmul.f32 %v803, %v839
        %v848 = vmul.f32 %v805, %v840
        %v849 = vmul.f32 %v807, %v841
        %v850 = vmul.f32 %v809, %v842
        %v851 = vmul.f32 %v811, %v843
        %v852 = vpack.c.bf16 %v845, %v844
        %v853 = vpack.c.bf16 %v847, %v846
        %v854 = vpack.c.bf16 %v849, %v848
        %v855 = vpack.c.bf16 %v851, %v850
        %v857 = vsel %vm497, %v852, 0
        %v860 = vsel %vm497, %v853, 0
        %v863 = vsel %vm497, %v854, 0
        %v866 = vsel %vm497, %v855, 0
        %868 = vmatprep.subr.bf16.mxu0 0
        %869 = vmatpush1.bf16.msra.mxu0 0
        %870 = vmatprep.subr.bf16.mxu0 0
        %871 = vmatpush1.bf16.msra.mxu0 0
        %872 = vmatprep.subr.bf16.mxu0 0
        %873 = vmatpush1.bf16.msra.mxu0 0
        %874 = vmatprep.subr.bf16.mxu0 0
        %875 = vmatpush1.bf16.msra.mxu0 0
        %876 = vmatprep.subr.bf16.mxu0 0
        %877 = vmatpush1.bf16.msra.mxu0 %v661
        %878 = vmatprep.subr.bf16.mxu0 0
        %879 = vmatpush1.bf16.msra.mxu0 %v660
        %880 = vmatprep.subr.bf16.mxu0 0
        %881 = vmatpush1.bf16.msra.mxu0 %v659
        %882 = vmatprep.subr.bf16.mxu0 0
        %883 = vmatpush1.bf16.msra.mxu0 %v658
        %884 = vmatprep.subr.bf16.mxu0 0
        %885 = vmatpush2.bf16.msra.mxu0 0
        %886 = vmatprep.subr.bf16.mxu0 0
        %887 = vmatpush2.bf16.msra.mxu0 0
        %888 = vmatprep.subr.bf16.mxu0 0
        %889 = vmatpush2.bf16.msra.mxu0 0
        %890 = vmatprep.subr.bf16.mxu0 0
        %891 = vmatpush2.bf16.msra.mxu0 0
        %892 = vmatprep.subr.bf16.mxu0 0
        %893 = vmatpush2.bf16.msra.mxu0 0
        %894 = vmatprep.subr.bf16.mxu0 0
        %895 = vmatpush2.bf16.msra.mxu0 0
        %896 = vmatprep.subr.bf16.mxu0 0
        %897 = vmatpush2.bf16.msra.mxu0 0
        %898 = vmatprep.subr.bf16.mxu0 0
        %899 = vmatpush2.bf16.msra.mxu0 0
        %900 = vmatprep.mubr.bf16.mxu0 0
        %901 = vmatmul.mubr.bf16.gmra.mxu0 %v857
        %v902 = vpop.f32.mrf.mxu0
        %v903 = vadd.f32 0.0, %v902
        %v904 = vpop.f32.mrf.mxu0
        %v905 = vpop.f32.mrf.mxu0
        %v906 = vadd.f32 0.0, %v905
        %v907 = vpop.f32.mrf.mxu0
        %908 = vmatprep.mubr.bf16.mxu0 0
        %909 = vmatmul.mubr.bf16.gmra.mxu0 %v860
        %v910 = vpop.f32.mrf.mxu0
        %v911 = vadd.f32 0.0, %v910
        %v912 = vpop.f32.mrf.mxu0
        %v913 = vpop.f32.mrf.mxu0
        %v914 = vadd.f32 0.0, %v913
        %v915 = vpop.f32.mrf.mxu0
        %916 = vmatprep.mubr.bf16.mxu0 0
        %917 = vmatmul.mubr.bf16.gmra.mxu0 %v863
        %v918 = vpop.f32.mrf.mxu0
        %v919 = vadd.f32 0.0, %v918
        %v920 = vpop.f32.mrf.mxu0
        %v921 = vpop.f32.mrf.mxu0
        %v922 = vadd.f32 0.0, %v921
        %v923 = vpop.f32.mrf.mxu0
        %924 = vmatprep.mubr.bf16.mxu0 0
        %925 = vmatmul.mubr.bf16.gmra.mxu0 %v866
        %v926 = vpop.f32.mrf.mxu0
        %v927 = vadd.f32 0.0, %v926
        %v928 = vpop.f32.mrf.mxu0
        %v929 = vpop.f32.mrf.mxu0
        %v930 = vadd.f32 0.0, %v929
        %v931 = vpop.f32.mrf.mxu0
        %932 = vdwg.mxu0
        %935 = vrot.lane.b32.xlu0 %v911, 16
        %v936 = vpop.permute.xlu0 %935
        %937 = vrot.lane.b32.xlu0 %v914, 16
        %v938 = vpop.permute.xlu0 %937
        %943 = vrot.lane.b32.xlu0 %v919, 32
        %v944 = vpop.permute.xlu0 %943
        %945 = vrot.lane.b32.xlu0 %v922, 32
        %v946 = vpop.permute.xlu0 %945
        %951 = vrot.lane.b32.xlu0 %v927, 48
        %v952 = vpop.permute.xlu0 %951
        %953 = vrot.lane.b32.xlu0 %v930, 48
        %v954 = vpop.permute.xlu0 %953
        %v957 = vsel %vm674, %v903, %v936
        %v958 = vsel %vm674, %v906, %v938
        %vm959 = vcmask 261120
        %v960 = vsel %vm959, %v957, %v944
        %v961 = vsel %vm959, %v958, %v946
        %vm962 = vcmask 392192
        %v963 = vsel %vm962, %v960, %v952
        %v964 = vsel %vm962, %v961, %v954
        %v965 = vpack.c.bf16 %v964, %v963
        %966 = vrot.lane.b32.xlu0 %v545, 64
        %v967 = vpop.permute.xlu0 %966
        %968 = vrot.lane.b32.xlu0 %v547, 64
        %v969 = vpop.permute.xlu0 %968
        %970 = vrot.lane.b32.xlu0 %v549, 64
        %v971 = vpop.permute.xlu0 %970
        %972 = vrot.lane.b32.xlu0 %v551, 64
        %v973 = vpop.permute.xlu0 %972
        %v979 = vsel %vm497, %v965, 0
        %981 = vmatprep.subr.bf16.mxu0 0
        %982 = vmatpush1.bf16.msra.mxu0 0
        %983 = vmatprep.subr.bf16.mxu0 0
        %984 = vmatpush1.bf16.msra.mxu0 0
        %985 = vmatprep.subr.bf16.mxu0 0
        %986 = vmatpush1.bf16.msra.mxu0 0
        %987 = vmatprep.subr.bf16.mxu0 0
        %988 = vmatpush1.bf16.msra.mxu0 0
        %989 = vmatprep.subr.bf16.mxu0 0
        %990 = vmatpush1.bf16.msra.mxu0 %v973
        %991 = vmatprep.subr.bf16.mxu0 0
        %992 = vmatpush1.bf16.msra.mxu0 %v971
        %993 = vmatprep.subr.bf16.mxu0 0
        %994 = vmatpush1.bf16.msra.mxu0 %v969
        %995 = vmatprep.subr.bf16.mxu0 0
        %996 = vmatpush1.bf16.msra.mxu0 %v967
        %997 = vmatprep.subr.bf16.mxu0 0
        %998 = vmatpush2.bf16.msra.mxu0 0
        %999 = vmatprep.subr.bf16.mxu0 0
        %1000 = vmatpush2.bf16.msra.mxu0 0
        %1001 = vmatprep.subr.bf16.mxu0 0
        %1002 = vmatpush2.bf16.msra.mxu0 0
        %1003 = vmatprep.subr.bf16.mxu0 0
        %1004 = vmatpush2.bf16.msra.mxu0 0
        %1005 = vmatprep.subr.bf16.mxu0 0
        %1006 = vmatpush2.bf16.msra.mxu0 0
        %1007 = vmatprep.subr.bf16.mxu0 0
        %1008 = vmatpush2.bf16.msra.mxu0 0
        %1009 = vmatprep.subr.bf16.mxu0 0
        %1010 = vmatpush2.bf16.msra.mxu0 0
        %1011 = vmatprep.subr.bf16.mxu0 0
        %1012 = vmatpush2.bf16.msra.mxu0 0
        %1013 = vmatprep.mubr.bf16.mxu0 0
        %1014 = vmatmul.mubr.bf16.gmra.mxu0 %v979
        %v1015 = vpop.f32.mrf.mxu0
        %v1016 = vadd.f32 0.0, %v1015
        %v1017 = vpop.f32.mrf.mxu0
        %v1018 = vpop.f32.mrf.mxu0
        %v1019 = vadd.f32 0.0, %v1018
        %v1020 = vpop.f32.mrf.mxu0
        %1021 = vdwg.mxu0
        %v1022 = vadd.f32 %v468, %v1016
        %v1023 = vadd.f32 %v469, %v1019
        %v1024 = vmul.f32 %v1022, %v1022
        %v1025 = vmul.f32 %v1023, %v1023
        %v1026 = vsel %vm497, %v1024, 0.0
        %1027 = vadd.xlane.f32.xlu0 %v1026
        %v1028 = vpop.xlane.xlu0 %1027
        %v1029 = vsel %vm497, %v1025, 0.0
        %1030 = vadd.xlane.f32.xlu0 %v1029
        %v1031 = vpop.xlane.xlu0 %1030
        %v1032 = vmul.f32 %v1028, %v504
        %v1033 = vmul.f32 %v1031, %v504
        %v1034 = vadd.f32 %v1032, 1e-06
        %v1035 = vadd.f32 %v1033, 1e-06
        %v1036 = vrsqrt.pop %v1034
        %v1037 = vrsqrt.pop %v1035
        %v1038 = vmul.f32 %v1022, %v1036
        %v1039 = vmul.f32 %v1023, %v1037
        %v1040 = vlaneseq
        %v1041 = vshrl.u32 %v1040, 7
        %v1042 = vsub.s32 1, %v1041
        %v1043 = vrot.slane %v470, %v1042
        %v1044 = vmul.f32 %v1038, %v1043
        %v1045 = vmul.f32 %v1039, %v1043
        %v1046 = vpack.c.bf16 %v1045, %v1044
        %v1055 = vunpack.c.l.b16 %v472
        %v1056 = vunpack.c.l.b16 %v475
        %v1057 = vunpack.c.l.b16 %v478
        %v1058 = vunpack.c.l.b16 %v481
        %v1059 = vunpack.c.l.b16 %v484
        %v1060 = vunpack.c.l.b16 %v487
        %v1061 = vunpack.c.l.b16 %v490
        %v1062 = vunpack.c.l.b16 %v493
        %v1063 = vpack.c.b16 %v1056, %v1055
        %v1064 = vpack.c.b16 %v1058, %v1057
        %v1065 = vpack.c.b16 %v1060, %v1059
        %v1066 = vpack.c.b16 %v1062, %v1061
        %v1072 = vsel %vm497, %v1046, 0
        %1074 = vmatprep.subr.bf16.mxu0 0
        %1075 = vmatpush1.bf16.msra.mxu0 0
        %1076 = vmatprep.subr.bf16.mxu0 0
        %1077 = vmatpush1.bf16.msra.mxu0 0
        %1078 = vmatprep.subr.bf16.mxu0 0
        %1079 = vmatpush1.bf16.msra.mxu0 0
        %1080 = vmatprep.subr.bf16.mxu0 0
        %1081 = vmatpush1.bf16.msra.mxu0 0
        %1082 = vmatprep.subr.bf16.mxu0 0
        %1083 = vmatpush1.bf16.msra.mxu0 %v1066
        %1084 = vmatprep.subr.bf16.mxu0 0
        %1085 = vmatpush1.bf16.msra.mxu0 %v1065
        %1086 = vmatprep.subr.bf16.mxu0 0
        %1087 = vmatpush1.bf16.msra.mxu0 %v1064
        %1088 = vmatprep.subr.bf16.mxu0 0
        %1089 = vmatpush1.bf16.msra.mxu0 %v1063
        %1090 = vmatprep.subr.bf16.mxu0 0
        %1091 = vmatpush2.bf16.msra.mxu0 0
        %1092 = vmatprep.subr.bf16.mxu0 0
        %1093 = vmatpush2.bf16.msra.mxu0 0
        %1094 = vmatprep.subr.bf16.mxu0 0
        %1095 = vmatpush2.bf16.msra.mxu0 0
        %1096 = vmatprep.subr.bf16.mxu0 0
        %1097 = vmatpush2.bf16.msra.mxu0 0
        %1098 = vmatprep.subr.bf16.mxu0 0
        %1099 = vmatpush2.bf16.msra.mxu0 0
        %1100 = vmatprep.subr.bf16.mxu0 0
        %1101 = vmatpush2.bf16.msra.mxu0 0
        %1102 = vmatprep.subr.bf16.mxu0 0
        %1103 = vmatpush2.bf16.msra.mxu0 0
        %1104 = vmatprep.subr.bf16.mxu0 0
        %1105 = vmatpush2.bf16.msra.mxu0 0
        %1106 = vmatprep.mubr.bf16.mxu0 0
        %1107 = vmatmul.mubr.bf16.gmra.mxu0 %v1072
        %v1108 = vpop.f32.mrf.mxu0
        %v1109 = vadd.f32 0.0, %v1108
        %v1110 = vpop.f32.mrf.mxu0
        %v1111 = vpop.f32.mrf.mxu0
        %v1112 = vadd.f32 0.0, %v1111
        %v1113 = vpop.f32.mrf.mxu0
        %1114 = vdwg.mxu0
        %v1115 = vld [vmem:[%s443] sm:$0xff]
        %v1116 = vld [vmem:[%s443 + $0x8] sm:$0xff]
        %v1117 = vpack.c.bf16 %v1116, %v1115
        %v1118 = vunpack.c.h.b16 %v472
        %v1119 = vunpack.c.h.b16 %v475
        %v1120 = vunpack.c.h.b16 %v478
        %v1121 = vunpack.c.h.b16 %v481
        %v1122 = vunpack.c.h.b16 %v484
        %v1123 = vunpack.c.h.b16 %v487
        %v1124 = vunpack.c.h.b16 %v490
        %v1125 = vunpack.c.h.b16 %v493
        %v1126 = vpack.c.b16 %v1119, %v1118
        %v1127 = vpack.c.b16 %v1121, %v1120
        %v1128 = vpack.c.b16 %v1123, %v1122
        %v1129 = vpack.c.b16 %v1125, %v1124
        %1130 = vrot.lane.b32.xlu0 %v1063, 64
        %v1131 = vpop.permute.xlu0 %1130
        %1132 = vrot.lane.b32.xlu0 %v1126, 64
        %v1133 = vpop.permute.xlu0 %1132
        %1134 = vrot.lane.b32.xlu0 %v1064, 64
        %v1135 = vpop.permute.xlu0 %1134
        %1136 = vrot.lane.b32.xlu0 %v1127, 64
        %v1137 = vpop.permute.xlu0 %1136
        %1138 = vrot.lane.b32.xlu0 %v1065, 64
        %v1139 = vpop.permute.xlu0 %1138
        %1140 = vrot.lane.b32.xlu0 %v1128, 64
        %v1141 = vpop.permute.xlu0 %1140
        %1142 = vrot.lane.b32.xlu0 %v1066, 64
        %v1143 = vpop.permute.xlu0 %1142
        %1144 = vrot.lane.b32.xlu0 %v1129, 64
        %v1145 = vpop.permute.xlu0 %1144
        %vm1146 = vcmask 523264
        %v1147 = vsel %vm1146, %v1131, %v1133
        %v1148 = vsel %vm1146, %v1135, %v1137
        %v1149 = vsel %vm1146, %v1139, %v1141
        %v1150 = vsel %vm1146, %v1143, %v1145
        %v1156 = vsel %vm497, %v1117, 0
        %1158 = vmatprep.subr.bf16.mxu0 0
        %1159 = vmatpush1.bf16.msra.mxu0 0
        %1160 = vmatprep.subr.bf16.mxu0 0
        %1161 = vmatpush1.bf16.msra.mxu0 0
        %1162 = vmatprep.subr.bf16.mxu0 0
        %1163 = vmatpush1.bf16.msra.mxu0 0
        %1164 = vmatprep.subr.bf16.mxu0 0
        %1165 = vmatpush1.bf16.msra.mxu0 0
        %1166 = vmatprep.subr.bf16.mxu0 0
        %1167 = vmatpush1.bf16.msra.mxu0 %v1150
        %1168 = vmatprep.subr.bf16.mxu0 0
        %1169 = vmatpush1.bf16.msra.mxu0 %v1149
        %1170 = vmatprep.subr.bf16.mxu0 0
        %1171 = vmatpush1.bf16.msra.mxu0 %v1148
        %1172 = vmatprep.subr.bf16.mxu0 0
        %1173 = vmatpush1.bf16.msra.mxu0 %v1147
        %1174 = vmatprep.subr.bf16.mxu0 0
        %1175 = vmatpush2.bf16.msra.mxu0 0
        %1176 = vmatprep.subr.bf16.mxu0 0
        %1177 = vmatpush2.bf16.msra.mxu0 0
        %1178 = vmatprep.subr.bf16.mxu0 0
        %1179 = vmatpush2.bf16.msra.mxu0 0
        %1180 = vmatprep.subr.bf16.mxu0 0
        %1181 = vmatpush2.bf16.msra.mxu0 0
        %1182 = vmatprep.subr.bf16.mxu0 0
        %1183 = vmatpush2.bf16.msra.mxu0 0
        %1184 = vmatprep.subr.bf16.mxu0 0
        %1185 = vmatpush2.bf16.msra.mxu0 0
        %1186 = vmatprep.subr.bf16.mxu0 0
        %1187 = vmatpush2.bf16.msra.mxu0 0
        %1188 = vmatprep.subr.bf16.mxu0 0
        %1189 = vmatpush2.bf16.msra.mxu0 0
        %1190 = vmatprep.mubr.bf16.mxu0 0
        %1191 = vmatmul.mubr.bf16.gmra.mxu0 %v1156
        %v1192 = vpop.f32.mrf.mxu0
        %v1193 = vadd.f32 0.0, %v1192
        %v1194 = vpop.f32.mrf.mxu0
        %v1195 = vpop.f32.mrf.mxu0
        %v1196 = vadd.f32 0.0, %v1195
        %v1197 = vpop.f32.mrf.mxu0
        %1198 = vdwg.mxu0
        %v1199 = vld [vmem:[%s3] sm:$0xff]
        %v1200 = vld [vmem:[%s3 + $0x8] sm:$0xff]
        %v1201 = vld [vmem:[%s3 + $0x10] sm:$0xff]
        %v1202 = vld [vmem:[%s3 + $0x18] sm:$0xff]
        %v1203 = vld [vmem:[%s3 + $0x20] sm:$0xff]
        %v1204 = vld [vmem:[%s3 + $0x28] sm:$0xff]
        %v1205 = vld [vmem:[%s3 + $0x30] sm:$0xff]
        %v1206 = vld [vmem:[%s3 + $0x38] sm:$0xff]
        %1209 = vrot.lane.b32.xlu0 %v1109, 112
        %v1210 = vpop.permute.xlu0 %1209
        %1211 = vrot.lane.b32.xlu0 %v1112, 112
        %v1212 = vpop.permute.xlu0 %1211
        %1215 = vrot.lane.b32.xlu0 %v1109, 96
        %v1216 = vpop.permute.xlu0 %1215
        %1217 = vrot.lane.b32.xlu0 %v1112, 96
        %v1218 = vpop.permute.xlu0 %1217
        %1221 = vrot.lane.b32.xlu0 %v1109, 80
        %v1222 = vpop.permute.xlu0 %1221
        %1223 = vrot.lane.b32.xlu0 %v1112, 80
        %v1224 = vpop.permute.xlu0 %1223
        %v1227 = vpack.c.bf16 %v1112, %v1109
        %v1228 = vpack.c.bf16 %v1212, %v1210
        %v1229 = vpack.c.bf16 %v1218, %v1216
        %v1230 = vpack.c.bf16 %v1224, %v1222
        %1233 = vrot.lane.b32.xlu0 %v1193, 112
        %v1234 = vpop.permute.xlu0 %1233
        %1235 = vrot.lane.b32.xlu0 %v1196, 112
        %v1236 = vpop.permute.xlu0 %1235
        %1239 = vrot.lane.b32.xlu0 %v1193, 96
        %v1240 = vpop.permute.xlu0 %1239
        %1241 = vrot.lane.b32.xlu0 %v1196, 96
        %v1242 = vpop.permute.xlu0 %1241
        %1245 = vrot.lane.b32.xlu0 %v1193, 80
        %v1246 = vpop.permute.xlu0 %1245
        %1247 = vrot.lane.b32.xlu0 %v1196, 80
        %v1248 = vpop.permute.xlu0 %1247
        %v1251 = vpack.c.bf16 %v1196, %v1193
        %v1252 = vpack.c.bf16 %v1236, %v1234
        %v1253 = vpack.c.bf16 %v1242, %v1240
        %v1254 = vpack.c.bf16 %v1248, %v1246
        %v1256 = vsel %vm674, %v1227, 0
        %v1259 = vsel %vm674, %v1228, 0
        %v1262 = vsel %vm674, %v1229, 0
        %v1265 = vsel %vm674, %v1230, 0
        %v1268 = vsel %vm674, %v1251, 0
        %v1271 = vsel %vm674, %v1252, 0
        %v1274 = vsel %vm674, %v1253, 0
        %v1277 = vsel %vm674, %v1254, 0
        %1279 = vmatprep.subr.bf16.mxu0 0
        %1280 = vmatpush1.bf16.xpose.msra.mxu0 0
        %1281 = vmatprep.subr.bf16.mxu0 0
        %1282 = vmatpush1.bf16.xpose.msra.mxu0 0
        %1283 = vmatprep.subr.bf16.mxu0 0
        %1284 = vmatpush1.bf16.xpose.msra.mxu0 0
        %1285 = vmatprep.subr.bf16.mxu0 0
        %1286 = vmatpush1.bf16.xpose.msra.mxu0 0
        %1287 = vmatprep.subr.bf16.mxu0 0
        %1288 = vmatpush1.bf16.xpose.msra.mxu0 %v1277
        %1289 = vmatprep.subr.bf16.mxu0 0
        %1290 = vmatpush1.bf16.xpose.msra.mxu0 %v1274
        %1291 = vmatprep.subr.bf16.mxu0 0
        %1292 = vmatpush1.bf16.xpose.msra.mxu0 %v1271
        %1293 = vmatprep.subr.bf16.mxu0 0
        %1294 = vmatpush1.bf16.xpose.msra.mxu0 %v1268
        %1295 = vmatprep.subr.bf16.mxu0 0
        %1296 = vmatpush2.bf16.xpose.msra.mxu0 0
        %1297 = vmatprep.subr.bf16.mxu0 0
        %1298 = vmatpush2.bf16.xpose.msra.mxu0 0
        %1299 = vmatprep.subr.bf16.mxu0 0
        %1300 = vmatpush2.bf16.xpose.msra.mxu0 0
        %1301 = vmatprep.subr.bf16.mxu0 0
        %1302 = vmatpush2.bf16.xpose.msra.mxu0 0
        %1303 = vmatprep.subr.bf16.mxu0 0
        %1304 = vmatpush2.bf16.xpose.msra.mxu0 0
        %1305 = vmatprep.subr.bf16.mxu0 0
        %1306 = vmatpush2.bf16.xpose.msra.mxu0 0
        %1307 = vmatprep.subr.bf16.mxu0 0
        %1308 = vmatpush2.bf16.xpose.msra.mxu0 0
        %1309 = vmatprep.subr.bf16.mxu0 0
        %1310 = vmatpush2.bf16.xpose.msra.mxu0 0
        %1311 = vmatprep.mubr.bf16.mxu0 0
        %1312 = vmatmul.mubr.bf16.gmra.mxu0 %v1256
        %v1313 = vpop.f32.mrf.mxu0
        %v1314 = vadd.f32 %v1199, %v1313
        %v1315 = vpop.f32.mrf.mxu0
        %v1316 = vpop.f32.mrf.mxu0
        %v1317 = vadd.f32 %v1200, %v1316
        %v1318 = vpop.f32.mrf.mxu0
        %1319 = vmatprep.mubr.bf16.mxu0 0
        %1320 = vmatmul.mubr.bf16.gmra.mxu0 %v1259
        %v1321 = vpop.f32.mrf.mxu0
        %v1322 = vadd.f32 %v1201, %v1321
        %v1323 = vpop.f32.mrf.mxu0
        %v1324 = vpop.f32.mrf.mxu0
        %v1325 = vadd.f32 %v1202, %v1324
        %v1326 = vpop.f32.mrf.mxu0
        %1327 = vmatprep.mubr.bf16.mxu0 0
        %1328 = vmatmul.mubr.bf16.gmra.mxu0 %v1262
        %v1329 = vpop.f32.mrf.mxu0
        %v1330 = vadd.f32 %v1203, %v1329
        %v1331 = vpop.f32.mrf.mxu0
        %v1332 = vpop.f32.mrf.mxu0
        %v1333 = vadd.f32 %v1204, %v1332
        %v1334 = vpop.f32.mrf.mxu0
        %1335 = vmatprep.mubr.bf16.mxu0 0
        %1336 = vmatmul.mubr.bf16.gmra.mxu0 %v1265
        %v1337 = vpop.f32.mrf.mxu0
        %v1338 = vadd.f32 %v1205, %v1337
        %v1339 = vpop.f32.mrf.mxu0
        %v1340 = vpop.f32.mrf.mxu0
        %v1341 = vadd.f32 %v1206, %v1340
        %v1342 = vpop.f32.mrf.mxu0
        %1343 = vdwg.mxu0
        %v1344 = vsel %vm497, %v1314, -inf
        %1345 = vmax.xlane.f32.xlu0 %v1344
        %v1346 = vpop.xlane.xlu0 %1345
        %v1347 = vsel %vm497, %v1317, -inf
        %1348 = vmax.xlane.f32.xlu0 %v1347
        %v1349 = vpop.xlane.xlu0 %1348
        %v1350 = vsel %vm497, %v1322, -inf
        %1351 = vmax.xlane.f32.xlu0 %v1350
        %v1352 = vpop.xlane.xlu0 %1351
        %v1353 = vsel %vm497, %v1325, -inf
        %1354 = vmax.xlane.f32.xlu0 %v1353
        %v1355 = vpop.xlane.xlu0 %1354
        %v1356 = vsel %vm497, %v1330, -inf
        %1357 = vmax.xlane.f32.xlu0 %v1356
        %v1358 = vpop.xlane.xlu0 %1357
        %v1359 = vsel %vm497, %v1333, -inf
        %1360 = vmax.xlane.f32.xlu0 %v1359
        %v1361 = vpop.xlane.xlu0 %1360
        %v1362 = vsel %vm497, %v1338, -inf
        %1363 = vmax.xlane.f32.xlu0 %v1362
        %v1364 = vpop.xlane.xlu0 %1363
        %v1365 = vsel %vm497, %v1341, -inf
        %1366 = vmax.xlane.f32.xlu0 %v1365
        %v1367 = vpop.xlane.xlu0 %1366
        %v1368 = vsub.f32 %v1314, %v1346
        %v1369 = vsub.f32 %v1317, %v1349
        %v1370 = vsub.f32 %v1322, %v1352
        %v1371 = vsub.f32 %v1325, %v1355
        %v1372 = vsub.f32 %v1330, %v1358
        %v1373 = vsub.f32 %v1333, %v1361
        %v1374 = vsub.f32 %v1338, %v1364
        %v1375 = vsub.f32 %v1341, %v1367
        %v1376 = vmul.f32 %v1368, 1.442695
        %v1377 = vpow.pop %v1376
        %v1378 = vmul.f32 %v1369, 1.442695
        %v1379 = vpow.pop %v1378
        %v1380 = vmul.f32 %v1370, 1.442695
        %v1381 = vpow.pop %v1380
        %v1382 = vmul.f32 %v1371, 1.442695
        %v1383 = vpow.pop %v1382
        %v1384 = vmul.f32 %v1372, 1.442695
        %v1385 = vpow.pop %v1384
        %v1386 = vmul.f32 %v1373, 1.442695
        %v1387 = vpow.pop %v1386
        %v1388 = vmul.f32 %v1374, 1.442695
        %v1389 = vpow.pop %v1388
        %v1390 = vmul.f32 %v1375, 1.442695
        %v1391 = vpow.pop %v1390
        %v1392 = vsel %vm497, %v1377, 0.0
        %1393 = vadd.xlane.f32.xlu0 %v1392
        %v1394 = vpop.xlane.xlu0 %1393
        %v1395 = vsel %vm497, %v1379, 0.0
        %1396 = vadd.xlane.f32.xlu0 %v1395
        %v1397 = vpop.xlane.xlu0 %1396
        %v1398 = vsel %vm497, %v1381, 0.0
        %1399 = vadd.xlane.f32.xlu0 %v1398
        %v1400 = vpop.xlane.xlu0 %1399
        %v1401 = vsel %vm497, %v1383, 0.0
        %1402 = vadd.xlane.f32.xlu0 %v1401
        %v1403 = vpop.xlane.xlu0 %1402
        %v1404 = vsel %vm497, %v1385, 0.0
        %1405 = vadd.xlane.f32.xlu0 %v1404
        %v1406 = vpop.xlane.xlu0 %1405
        %v1407 = vsel %vm497, %v1387, 0.0
        %1408 = vadd.xlane.f32.xlu0 %v1407
        %v1409 = vpop.xlane.xlu0 %1408
        %v1410 = vsel %vm497, %v1389, 0.0
        %1411 = vadd.xlane.f32.xlu0 %v1410
        %v1412 = vpop.xlane.xlu0 %1411
        %v1413 = vsel %vm497, %v1391, 0.0
        %1414 = vadd.xlane.f32.xlu0 %v1413
        %v1415 = vpop.xlane.xlu0 %1414
        %v1416 = vrcp.pop %v1394
        %v1417 = vrcp.pop %v1397
        %v1418 = vrcp.pop %v1400
        %v1419 = vrcp.pop %v1403
        %v1420 = vrcp.pop %v1406
        %v1421 = vrcp.pop %v1409
        %v1422 = vrcp.pop %v1412
        %v1423 = vrcp.pop %v1415
        %v1424 = vmul.f32 %v1377, %v1416
        %v1425 = vmul.f32 %v1379, %v1417
        %v1426 = vmul.f32 %v1381, %v1418
        %v1427 = vmul.f32 %v1383, %v1419
        %v1428 = vmul.f32 %v1385, %v1420
        %v1429 = vmul.f32 %v1387, %v1421
        %v1430 = vmul.f32 %v1389, %v1422
        %v1431 = vmul.f32 %v1391, %v1423
        %v1432 = vpack.c.bf16 %v1425, %v1424
        %v1433 = vpack.c.bf16 %v1427, %v1426
        %v1434 = vpack.c.bf16 %v1429, %v1428
        %v1435 = vpack.c.bf16 %v1431, %v1430
        %1440 = vrot.lane.b32.xlu0 %v1251, 64
        %v1441 = vpop.permute.xlu0 %1440
        %1442 = vrot.lane.b32.xlu0 %v1252, 64
        %v1443 = vpop.permute.xlu0 %1442
        %1444 = vrot.lane.b32.xlu0 %v1253, 64
        %v1445 = vpop.permute.xlu0 %1444
        %1446 = vrot.lane.b32.xlu0 %v1254, 64
        %v1447 = vpop.permute.xlu0 %1446
        %v1453 = vsel %vm497, %v1432, 0
        %v1456 = vsel %vm497, %v1433, 0
        %v1459 = vsel %vm497, %v1434, 0
        %v1462 = vsel %vm497, %v1435, 0
        %1464 = vmatprep.subr.bf16.mxu0 0
        %1465 = vmatpush1.bf16.msra.mxu0 0
        %1466 = vmatprep.subr.bf16.mxu0 0
        %1467 = vmatpush1.bf16.msra.mxu0 0
        %1468 = vmatprep.subr.bf16.mxu0 0
        %1469 = vmatpush1.bf16.msra.mxu0 0
        %1470 = vmatprep.subr.bf16.mxu0 0
        %1471 = vmatpush1.bf16.msra.mxu0 0
        %1472 = vmatprep.subr.bf16.mxu0 0
        %1473 = vmatpush1.bf16.msra.mxu0 %v1447
        %1474 = vmatprep.subr.bf16.mxu0 0
        %1475 = vmatpush1.bf16.msra.mxu0 %v1445
        %1476 = vmatprep.subr.bf16.mxu0 0
        %1477 = vmatpush1.bf16.msra.mxu0 %v1443
        %1478 = vmatprep.subr.bf16.mxu0 0
        %1479 = vmatpush1.bf16.msra.mxu0 %v1441
        %1480 = vmatprep.subr.bf16.mxu0 0
        %1481 = vmatpush2.bf16.msra.mxu0 0
        %1482 = vmatprep.subr.bf16.mxu0 0
        %1483 = vmatpush2.bf16.msra.mxu0 0
        %1484 = vmatprep.subr.bf16.mxu0 0
        %1485 = vmatpush2.bf16.msra.mxu0 0
        %1486 = vmatprep.subr.bf16.mxu0 0
        %1487 = vmatpush2.bf16.msra.mxu0 0
        %1488 = vmatprep.subr.bf16.mxu0 0
        %1489 = vmatpush2.bf16.msra.mxu0 0
        %1490 = vmatprep.subr.bf16.mxu0 0
        %1491 = vmatpush2.bf16.msra.mxu0 0
        %1492 = vmatprep.subr.bf16.mxu0 0
        %1493 = vmatpush2.bf16.msra.mxu0 0
        %1494 = vmatprep.subr.bf16.mxu0 0
        %1495 = vmatpush2.bf16.msra.mxu0 0
        %1496 = vmatprep.mubr.bf16.mxu0 0
        %1497 = vmatmul.mubr.bf16.gmra.mxu0 %v1453
        %v1498 = vpop.f32.mrf.mxu0
        %v1499 = vadd.f32 0.0, %v1498
        %v1500 = vpop.f32.mrf.mxu0
        %v1501 = vpop.f32.mrf.mxu0
        %v1502 = vadd.f32 0.0, %v1501
        %v1503 = vpop.f32.mrf.mxu0
        %1504 = vmatprep.mubr.bf16.mxu0 0
        %1505 = vmatmul.mubr.bf16.gmra.mxu0 %v1456
        %v1506 = vpop.f32.mrf.mxu0
        %v1507 = vadd.f32 0.0, %v1506
        %v1508 = vpop.f32.mrf.mxu0
        %v1509 = vpop.f32.mrf.mxu0
        %v1510 = vadd.f32 0.0, %v1509
        %v1511 = vpop.f32.mrf.mxu0
        %1512 = vmatprep.mubr.bf16.mxu0 0
        %1513 = vmatmul.mubr.bf16.gmra.mxu0 %v1459
        %v1514 = vpop.f32.mrf.mxu0
        %v1515 = vadd.f32 0.0, %v1514
        %v1516 = vpop.f32.mrf.mxu0
        %v1517 = vpop.f32.mrf.mxu0
        %v1518 = vadd.f32 0.0, %v1517
        %v1519 = vpop.f32.mrf.mxu0
        %1520 = vmatprep.mubr.bf16.mxu0 0
        %1521 = vmatmul.mubr.bf16.gmra.mxu0 %v1462
        %v1522 = vpop.f32.mrf.mxu0
        %v1523 = vadd.f32 0.0, %v1522
        %v1524 = vpop.f32.mrf.mxu0
        %v1525 = vpop.f32.mrf.mxu0
        %v1526 = vadd.f32 0.0, %v1525
        %v1527 = vpop.f32.mrf.mxu0
        %1528 = vdwg.mxu0
        %1531 = vrot.lane.b32.xlu0 %v1507, 16
        %v1532 = vpop.permute.xlu0 %1531
        %1533 = vrot.lane.b32.xlu0 %v1510, 16
        %v1534 = vpop.permute.xlu0 %1533
        %1539 = vrot.lane.b32.xlu0 %v1515, 32
        %v1540 = vpop.permute.xlu0 %1539
        %1541 = vrot.lane.b32.xlu0 %v1518, 32
        %v1542 = vpop.permute.xlu0 %1541
        %1547 = vrot.lane.b32.xlu0 %v1523, 48
        %v1548 = vpop.permute.xlu0 %1547
        %1549 = vrot.lane.b32.xlu0 %v1526, 48
        %v1550 = vpop.permute.xlu0 %1549
        %v1553 = vsel %vm674, %v1499, %v1532
        %v1554 = vsel %vm674, %v1502, %v1534
        %v1555 = vsel %vm959, %v1553, %v1540
        %v1556 = vsel %vm959, %v1554, %v1542
        %v1557 = vsel %vm962, %v1555, %v1548
        %v1558 = vsel %vm962, %v1556, %v1550
        %v1559 = vpack.c.bf16 %v1558, %v1557
        %v1565 = vsel %vm497, %v1559, 0
        %1567 = vmatprep.subr.bf16.mxu0 0
        %1568 = vmatpush1.bf16.msra.mxu0 0
        %1569 = vmatprep.subr.bf16.mxu0 0
        %1570 = vmatpush1.bf16.msra.mxu0 0
        %1571 = vmatprep.subr.bf16.mxu0 0
        %1572 = vmatpush1.bf16.msra.mxu0 0
        %1573 = vmatprep.subr.bf16.mxu0 0
        %1574 = vmatpush1.bf16.msra.mxu0 0
        %1575 = vmatprep.subr.bf16.mxu0 0
        %1576 = vmatpush1.bf16.msra.mxu0 %v1145
        %1577 = vmatprep.subr.bf16.mxu0 0
        %1578 = vmatpush1.bf16.msra.mxu0 %v1141
        %1579 = vmatprep.subr.bf16.mxu0 0
        %1580 = vmatpush1.bf16.msra.mxu0 %v1137
        %1581 = vmatprep.subr.bf16.mxu0 0
        %1582 = vmatpush1.bf16.msra.mxu0 %v1133
        %1583 = vmatprep.subr.bf16.mxu0 0
        %1584 = vmatpush2.bf16.msra.mxu0 0
        %1585 = vmatprep.subr.bf16.mxu0 0
        %1586 = vmatpush2.bf16.msra.mxu0 0
        %1587 = vmatprep.subr.bf16.mxu0 0
        %1588 = vmatpush2.bf16.msra.mxu0 0
        %1589 = vmatprep.subr.bf16.mxu0 0
        %1590 = vmatpush2.bf16.msra.mxu0 0
        %1591 = vmatprep.subr.bf16.mxu0 0
        %1592 = vmatpush2.bf16.msra.mxu0 0
        %1593 = vmatprep.subr.bf16.mxu0 0
        %1594 = vmatpush2.bf16.msra.mxu0 0
        %1595 = vmatprep.subr.bf16.mxu0 0
        %1596 = vmatpush2.bf16.msra.mxu0 0
        %1597 = vmatprep.subr.bf16.mxu0 0
        %1598 = vmatpush2.bf16.msra.mxu0 0
        %1599 = vmatprep.mubr.bf16.mxu0 0
        %1600 = vmatmul.mubr.bf16.gmra.mxu0 %v1565
        %v1601 = vpop.f32.mrf.mxu0
        %v1602 = vadd.f32 0.0, %v1601
        %v1603 = vpop.f32.mrf.mxu0
        %v1604 = vpop.f32.mrf.mxu0
        %v1605 = vadd.f32 0.0, %v1604
        %v1606 = vpop.f32.mrf.mxu0
        %1607 = vdwg.mxu0
        %v1608 = vadd.f32 %v1022, %v1602
        %v1609 = vadd.f32 %v1023, %v1605
        %v1610 = vmul.f32 %v1608, %v1608
        %v1611 = vmul.f32 %v1609, %v1609
        %v1612 = vsel %vm497, %v1610, 0.0
        %1613 = vadd.xlane.f32.xlu0 %v1612
        %v1614 = vpop.xlane.xlu0 %1613
        %v1615 = vsel %vm497, %v1611, 0.0
        %1616 = vadd.xlane.f32.xlu0 %v1615
        %v1617 = vpop.xlane.xlu0 %1616
        %v1618 = vmul.f32 %v1614, %v504
        %v1619 = vmul.f32 %v1617, %v504
        %v1620 = vadd.f32 %v1618, 1e-06
        %v1621 = vadd.f32 %v1619, 1e-06
        %v1622 = vrsqrt.pop %v1620
        %v1623 = vrsqrt.pop %v1621
        %v1624 = vmul.f32 %v1608, %v1622
        %v1625 = vmul.f32 %v1609, %v1623
        %v1626 = vlaneseq
        %v1627 = vshrl.u32 %v1626, 7
        %v1628 = vsub.s32 2, %v1627
        %v1629 = vrot.slane %v470, %v1628
        %v1630 = vmul.f32 %v1624, %v1629
        %v1631 = vmul.f32 %v1625, %v1629
        %v1632 = vpack.c.bf16 %v1631, %v1630
        %v1641 = vunpack.c.l.b16 %v473
        %v1642 = vunpack.c.l.b16 %v476
        %v1643 = vunpack.c.l.b16 %v479
        %v1644 = vunpack.c.l.b16 %v482
        %v1645 = vunpack.c.l.b16 %v485
        %v1646 = vunpack.c.l.b16 %v488
        %v1647 = vunpack.c.l.b16 %v491
        %v1648 = vunpack.c.l.b16 %v494
        %v1649 = vpack.c.b16 %v1642, %v1641
        %v1650 = vpack.c.b16 %v1644, %v1643
        %v1651 = vpack.c.b16 %v1646, %v1645
        %v1652 = vpack.c.b16 %v1648, %v1647
        %v1658 = vsel %vm497, %v1632, 0
        %1660 = vmatprep.subr.bf16.mxu0 0
        %1661 = vmatpush1.bf16.msra.mxu0 0
        %1662 = vmatprep.subr.bf16.mxu0 0
        %1663 = vmatpush1.bf16.msra.mxu0 0
        %1664 = vmatprep.subr.bf16.mxu0 0
        %1665 = vmatpush1.bf16.msra.mxu0 0
        %1666 = vmatprep.subr.bf16.mxu0 0
        %1667 = vmatpush1.bf16.msra.mxu0 0
        %1668 = vmatprep.subr.bf16.mxu0 0
        %1669 = vmatpush1.bf16.msra.mxu0 %v1652
        %1670 = vmatprep.subr.bf16.mxu0 0
        %1671 = vmatpush1.bf16.msra.mxu0 %v1651
        %1672 = vmatprep.subr.bf16.mxu0 0
        %1673 = vmatpush1.bf16.msra.mxu0 %v1650
        %1674 = vmatprep.subr.bf16.mxu0 0
        %1675 = vmatpush1.bf16.msra.mxu0 %v1649
        %1676 = vmatprep.subr.bf16.mxu0 0
        %1677 = vmatpush2.bf16.msra.mxu0 0
        %1678 = vmatprep.subr.bf16.mxu0 0
        %1679 = vmatpush2.bf16.msra.mxu0 0
        %1680 = vmatprep.subr.bf16.mxu0 0
        %1681 = vmatpush2.bf16.msra.mxu0 0
        %1682 = vmatprep.subr.bf16.mxu0 0
        %1683 = vmatpush2.bf16.msra.mxu0 0
        %1684 = vmatprep.subr.bf16.mxu0 0
        %1685 = vmatpush2.bf16.msra.mxu0 0
        %1686 = vmatprep.subr.bf16.mxu0 0
        %1687 = vmatpush2.bf16.msra.mxu0 0
        %1688 = vmatprep.subr.bf16.mxu0 0
        %1689 = vmatpush2.bf16.msra.mxu0 0
        %1690 = vmatprep.subr.bf16.mxu0 0
        %1691 = vmatpush2.bf16.msra.mxu0 0
        %1692 = vmatprep.mubr.bf16.mxu0 0
        %1693 = vmatmul.mubr.bf16.gmra.mxu0 %v1658
        %v1694 = vpop.f32.mrf.mxu0
        %v1695 = vadd.f32 0.0, %v1694
        %v1696 = vpop.f32.mrf.mxu0
        %v1697 = vpop.f32.mrf.mxu0
        %v1698 = vadd.f32 0.0, %v1697
        %v1699 = vpop.f32.mrf.mxu0
        %1700 = vdwg.mxu0
        %v1701 = vmax.f32 %v1695, 0.0
        %v1702 = vmax.f32 %v1698, 0.0
        %v1703 = vpack.c.bf16 %v1702, %v1701
        %v1704 = vld [vmem:[%s457] sm:$0xf]
        %v1705 = vld [vmem:[%s457 + $0x4] sm:$0xf]
        %v1706 = vld [vmem:[%s457 + $0x8] sm:$0xf]
        %v1707 = vld [vmem:[%s457 + $0xc] sm:$0xf]
        %v1708 = vld [vmem:[%s457 + $0x10] sm:$0xf]
        %v1709 = vld [vmem:[%s457 + $0x14] sm:$0xf]
        %v1710 = vld [vmem:[%s457 + $0x18] sm:$0xf]
        %v1711 = vld [vmem:[%s457 + $0x1c] sm:$0xf]
        %v1712 = vld [vmem:[%s457 + $0x20] sm:$0xf]
        %v1713 = vld [vmem:[%s457 + $0x24] sm:$0xf]
        %v1714 = vld [vmem:[%s457 + $0x28] sm:$0xf]
        %v1715 = vld [vmem:[%s457 + $0x2c] sm:$0xf]
        %v1716 = vld [vmem:[%s457 + $0x30] sm:$0xf]
        %v1717 = vld [vmem:[%s457 + $0x34] sm:$0xf]
        %v1718 = vld [vmem:[%s457 + $0x38] sm:$0xf]
        %v1719 = vld [vmem:[%s457 + $0x3c] sm:$0xf]
        %v1736 = vunpack.c.l.b16 %v1704
        %v1737 = vunpack.c.l.b16 %v1705
        %v1738 = vunpack.c.l.b16 %v1706
        %v1739 = vunpack.c.l.b16 %v1707
        %v1740 = vunpack.c.l.b16 %v1708
        %v1741 = vunpack.c.l.b16 %v1709
        %v1742 = vunpack.c.l.b16 %v1710
        %v1743 = vunpack.c.l.b16 %v1711
        %v1744 = vunpack.c.l.b16 %v1712
        %v1745 = vunpack.c.l.b16 %v1713
        %v1746 = vunpack.c.l.b16 %v1714
        %v1747 = vunpack.c.l.b16 %v1715
        %v1748 = vunpack.c.l.b16 %v1716
        %v1749 = vunpack.c.l.b16 %v1717
        %v1750 = vunpack.c.l.b16 %v1718
        %v1751 = vunpack.c.l.b16 %v1719
        %v1752 = vpack.c.b16 %v1737, %v1736
        %v1753 = vpack.c.b16 %v1739, %v1738
        %v1754 = vpack.c.b16 %v1741, %v1740
        %v1755 = vpack.c.b16 %v1743, %v1742
        %v1756 = vpack.c.b16 %v1745, %v1744
        %v1757 = vpack.c.b16 %v1747, %v1746
        %v1758 = vpack.c.b16 %v1749, %v1748
        %v1759 = vpack.c.b16 %v1751, %v1750
        %1768 = vmatprep.subr.bf16.mxu0 0
        %1769 = vmatpush1.bf16.msra.mxu0 %v1759
        %1770 = vmatprep.subr.bf16.mxu0 0
        %1771 = vmatpush1.bf16.msra.mxu0 %v1758
        %1772 = vmatprep.subr.bf16.mxu0 0
        %1773 = vmatpush1.bf16.msra.mxu0 %v1757
        %1774 = vmatprep.subr.bf16.mxu0 0
        %1775 = vmatpush1.bf16.msra.mxu0 %v1756
        %1776 = vmatprep.subr.bf16.mxu0 0
        %1777 = vmatpush1.bf16.msra.mxu0 %v1755
        %1778 = vmatprep.subr.bf16.mxu0 0
        %1779 = vmatpush1.bf16.msra.mxu0 %v1754
        %1780 = vmatprep.subr.bf16.mxu0 0
        %1781 = vmatpush1.bf16.msra.mxu0 %v1753
        %1782 = vmatprep.subr.bf16.mxu0 0
        %1783 = vmatpush1.bf16.msra.mxu0 %v1752
        %1784 = vmatprep.subr.bf16.mxu0 0
        %1785 = vmatpush2.bf16.msra.mxu0 0
        %1786 = vmatprep.subr.bf16.mxu0 0
        %1787 = vmatpush2.bf16.msra.mxu0 0
        %1788 = vmatprep.subr.bf16.mxu0 0
        %1789 = vmatpush2.bf16.msra.mxu0 0
        %1790 = vmatprep.subr.bf16.mxu0 0
        %1791 = vmatpush2.bf16.msra.mxu0 0
        %1792 = vmatprep.subr.bf16.mxu0 0
        %1793 = vmatpush2.bf16.msra.mxu0 0
        %1794 = vmatprep.subr.bf16.mxu0 0
        %1795 = vmatpush2.bf16.msra.mxu0 0
        %1796 = vmatprep.subr.bf16.mxu0 0
        %1797 = vmatpush2.bf16.msra.mxu0 0
        %1798 = vmatprep.subr.bf16.mxu0 0
        %1799 = vmatpush2.bf16.msra.mxu0 0
        %1800 = vmatprep.mubr.bf16.mxu0 0
        %1801 = vmatmul.mubr.bf16.gmra.mxu0 %v1703
        %v1802 = vpop.f32.mrf.mxu0
        %v1803 = vadd.f32 0.0, %v1802
        %v1804 = vpop.f32.mrf.mxu0
        %v1805 = vpop.f32.mrf.mxu0
        %v1806 = vadd.f32 0.0, %v1805
        %v1807 = vpop.f32.mrf.mxu0
        %1808 = vdwg.mxu0
        %v1809 = vadd.f32 %v1608, %v1803
        %v1810 = vadd.f32 %v1609, %v1806
        %1811 = vst.msk [vmem:[%s426] sm:$0xff] %vm497, %v1809
        %1812 = vst.msk [vmem:[%s426 + $0x8] sm:$0xff] %vm497, %v1810
        %p1813 = scmp.eq.s32.totalorder %s33, 1
        // Predicated region
        $region61: #{t5_forward.3} parent=55 // pred_check
          %p1814 = pneg %p1813
        $region62: #{t5_forward.3} parent=55 // pred_check_branch
          %1816 = sbr.rel (%p1814) target = $region64
        $region63: #{t5_forward.3} parent=55 // pred_region
          %v1817 = vld [vmem:[%s7] sm:$0x1]
          %v1818 = vmul.f32 %v1809, %v1809
          %v1819 = vmul.f32 %v1810, %v1810
          %v1820 = vsel %vm497, %v1818, 0.0
          %1821 = vadd.xlane.f32.xlu0 %v1820
          %v1822 = vpop.xlane.xlu0 %1821
          %v1823 = vsel %vm497, %v1819, 0.0
          %1824 = vadd.xlane.f32.xlu0 %v1823
          %v1825 = vpop.xlane.xlu0 %1824
          %v1826 = vmul.f32 %v1822, %v504
          %v1827 = vmul.f32 %v1825, %v504
          %v1828 = vadd.f32 %v1826, 1e-06
          %v1829 = vadd.f32 %v1827, 1e-06
          %v1830 = vrsqrt.pop %v1828
          %v1831 = vrsqrt.pop %v1829
          %v1832 = vmul.f32 %v1809, %v1830
          %v1833 = vmul.f32 %v1810, %v1831
          %v1835 = vlaneseq
          %v1836 = vshrl.u32 %v1835, 7
          %v1837 = vsub.s32 0, %v1836
          %v1838 = vrot.slane %v1817, %v1837
          %v1840 = vmul.f32 %v1832, %v1838
          %v1841 = vmul.f32 %v1833, %v1838
          %v1842 = vpack.c.bf16 %v1841, %v1840
          %v1843 = vld [vmem:[%s8] sm:$0xff]
          %v1844 = vld [vmem:[%s8 + $0x8] sm:$0xff]
          %v1845 = vld [vmem:[%s8 + $0x10] sm:$0xff]
          %v1846 = vld [vmem:[%s8 + $0x18] sm:$0xff]
          %v1847 = vld [vmem:[%s8 + $0x20] sm:$0xff]
          %v1848 = vld [vmem:[%s8 + $0x28] sm:$0xff]
          %v1849 = vld [vmem:[%s8 + $0x30] sm:$0xff]
          %v1850 = vld [vmem:[%s8 + $0x38] sm:$0xff]
          %v1859 = vunpack.c.l.b16 %v1843
          %v1860 = vunpack.c.h.b16 %v1843
          %v1861 = vunpack.c.l.b16 %v1844
          %v1862 = vunpack.c.h.b16 %v1844
          %v1863 = vunpack.c.l.b16 %v1845
          %v1864 = vunpack.c.h.b16 %v1845
          %v1865 = vunpack.c.l.b16 %v1846
          %v1866 = vunpack.c.h.b16 %v1846
          %v1867 = vunpack.c.l.b16 %v1847
          %v1868 = vunpack.c.h.b16 %v1847
          %v1869 = vunpack.c.l.b16 %v1848
          %v1870 = vunpack.c.h.b16 %v1848
          %v1871 = vunpack.c.l.b16 %v1849
          %v1872 = vunpack.c.h.b16 %v1849
          %v1873 = vunpack.c.l.b16 %v1850
          %v1874 = vunpack.c.h.b16 %v1850
          %v1875 = vpack.c.b16 %v1861, %v1859
          %v1876 = vpack.c.b16 %v1862, %v1860
          %v1877 = vpack.c.b16 %v1865, %v1863
          %v1878 = vpack.c.b16 %v1866, %v1864
          %v1879 = vpack.c.b16 %v1869, %v1867
          %v1880 = vpack.c.b16 %v1870, %v1868
          %v1881 = vpack.c.b16 %v1873, %v1871
          %v1882 = vpack.c.b16 %v1874, %v1872
          %v1892 = vsel %vm497, %v1842, 0
          %1894 = vmatprep.subr.bf16.mxu0 0
          %1895 = vmatpush1.bf16.msra.mxu0 0
          %1896 = vmatprep.subr.bf16.mxu0 0
          %1897 = vmatpush1.bf16.msra.mxu0 0
          %1898 = vmatprep.subr.bf16.mxu0 0
          %1899 = vmatpush1.bf16.msra.mxu0 0
          %1900 = vmatprep.subr.bf16.mxu0 0
          %1901 = vmatpush1.bf16.msra.mxu0 0
          %1902 = vmatprep.subr.bf16.mxu0 %v1882
          %1903 = vmatpush1.bf16.msra.mxu0 %v1881
          %1904 = vmatprep.subr.bf16.mxu0 %v1880
          %1905 = vmatpush1.bf16.msra.mxu0 %v1879
          %1906 = vmatprep.subr.bf16.mxu0 %v1878
          %1907 = vmatpush1.bf16.msra.mxu0 %v1877
          %1908 = vmatprep.subr.bf16.mxu0 %v1876
          %1909 = vmatpush1.bf16.msra.mxu0 %v1875
          %1910 = vmatprep.subr.bf16.mxu0 0
          %1911 = vmatpush2.bf16.msra.mxu0 0
          %1912 = vmatprep.subr.bf16.mxu0 0
          %1913 = vmatpush2.bf16.msra.mxu0 0
          %1914 = vmatprep.subr.bf16.mxu0 0
          %1915 = vmatpush2.bf16.msra.mxu0 0
          %1916 = vmatprep.subr.bf16.mxu0 0
          %1917 = vmatpush2.bf16.msra.mxu0 0
          %1918 = vmatprep.subr.bf16.mxu0 0
          %1919 = vmatpush2.bf16.msra.mxu0 0
          %1920 = vmatprep.subr.bf16.mxu0 0
          %1921 = vmatpush2.bf16.msra.mxu0 0
          %1922 = vmatprep.subr.bf16.mxu0 0
          %1923 = vmatpush2.bf16.msra.mxu0 0
          %1924 = vmatprep.subr.bf16.mxu0 0
          %1925 = vmatpush2.bf16.msra.mxu0 0
          %1926 = vmatprep.mubr.bf16.mxu0 0
          %1927 = vmatmul.mubr.bf16.gmra.mxu0 %v1892
          %v1928 = vpop.f32.mrf.mxu0
          %v1929 = vadd.f32 0.0, %v1928
          %v1930 = vpop.f32.mrf.mxu0
          %v1931 = vadd.f32 0.0, %v1930
          %v1932 = vpop.f32.mrf.mxu0
          %v1933 = vadd.f32 0.0, %v1932
          %v1934 = vpop.f32.mrf.mxu0
          %v1935 = vadd.f32 0.0, %v1934
          %1936 = vdwg.mxu0
          %1937 = vst [vmem:[%s433] sm:$0xff] %v1929
          %1938 = vst [vmem:[%s433 + $0x8] sm:$0xff] %v1931
          %1939 = vst [vmem:[%s433 + $0x10] sm:$0xff] %v1933
          %1940 = vst [vmem:[%s433 + $0x18] sm:$0xff] %v1935
        $region64: #{t5_forward.3} parent=55 // pred_fallthru
          _
        %s1941 = sand.u32 %s262, 1
        %s1942 = scalar_lea.sflag [#allocation3], %s1941
        %s1943 = sand.u32 %s262, 1
        %s1944 = smul.addr %s1943, 16
        %s1945 = scalar_lea.vmem [#allocation2], %s1944
        %s1946 = sand.u32 %s288, 1
        %s1947 = scalar_lea.sflag [#allocation5], %s1946
        %s1948 = sand.u32 %s288, 1
        %s1949 = smul.addr %s1948, 32
        %s1950 = scalar_lea.vmem [#allocation4], %s1949
        // Predicated region
        $region65: #{t5_forward.3} parent=55 // pred_check
          %p1951 = pneg %p272
        $region66: #{t5_forward.3} parent=55 // pred_check_branch
          %1953 = sbr.rel (%p1951) target = $region68
        $region67: #{t5_forward.3} parent=55 // pred_region
          %s1955 = ssub.s32 256, 256
          %1956 = vsyncadd %s1942, %s1955
          %s1957 = smul.addr %s32, 2
          %s1958 = smul.addr %s1957, 128
          %s1959 = scalar_lea.hbm %s9, %s1958
          %s1960 = sshll.u32 %s1945, 4
          %s1961 = int_to_ptr.vmem [resolvable:$true] %s1960
          %1966 = dma.vmem_to_hbm [thread:$0]  %s1961, 256, %s1959, %s1942, 128, 128, 8
        $region68: #{t5_forward.3} parent=55 // pred_fallthru
          _
        // Predicated region
        $region69: #{t5_forward.3} parent=55 // pred_check
          %p1967 = pneg %p298
        $region70: #{t5_forward.3} parent=55 // pred_check_branch
          %1969 = sbr.rel (%p1967) target = $region72
        $region71: #{t5_forward.3} parent=55 // pred_region
          %s1971 = ssub.s32 512, 512
          %1972 = vsyncadd %s1947, %s1971
          %s1973 = smul.addr %s32, 4
          %s1974 = smul.addr %s1973, 128
          %s1975 = scalar_lea.hbm %s10, %s1974
          %s1976 = sshll.u32 %s1950, 4
          %s1977 = int_to_ptr.vmem [resolvable:$true] %s1976
          %1982 = dma.vmem_to_hbm [thread:$0]  %s1977, 512, %s1975, %s1947, 256, 256, 16
        $region72: #{t5_forward.3} parent=55 // pred_fallthru
          _
      $region56: #{t5_forward.3} parent=5 // pred_fallthru
        _
      %p1983 = scmp.le.s32.totalorder 2, %s23
      // Predicated region
      $region73: #{t5_forward.3} parent=5 // pred_check
        %p1984 = pneg %p1983
      $region74: #{t5_forward.3} parent=5 // pred_check_branch
        %1986 = sbr.rel (%p1984) target = $region76
      $region75: #{t5_forward.3} parent=5 // pred_region
        %s1987 = ssub.s32 %s23, 2
        // Predicated region
        $region77: #{t5_forward.3} parent=75 // pred_check
          %p1988 = pneg %p278
        $region78: #{t5_forward.3} parent=75 // pred_check_branch
          %1990 = sbr.rel (%p1988) target = $region80
        $region79: #{t5_forward.3} parent=75 // pred_region
          %s1991 = sand.u32 %s263, 1
          %s1992 = scalar_lea.sflag [#allocation3], %s1991
          %s1993 = sand.u32 %s263, 1
          %s1994 = smul.addr %s1993, 16
          %s1995 = scalar_lea.vmem [#allocation2], %s1994
          %1996 = dma.done %s1992, 256
        $region80: #{t5_forward.3} parent=75 // pred_fallthru
          _
        // Predicated region
        $region81: #{t5_forward.3} parent=75 // pred_check
          %p1997 = pneg %p304
        $region82: #{t5_forward.3} parent=75 // pred_check_branch
          %1999 = sbr.rel (%p1997) target = $region84
        $region83: #{t5_forward.3} parent=75 // pred_region
          %s2000 = sand.u32 %s289, 1
          %s2001 = scalar_lea.sflag [#allocation5], %s2000
          %s2002 = sand.u32 %s289, 1
          %s2003 = smul.addr %s2002, 32
          %s2004 = scalar_lea.vmem [#allocation4], %s2003
          %2005 = dma.done %s2001, 512
        $region84: #{t5_forward.3} parent=75 // pred_fallthru
          _
      $region76: #{t5_forward.3} parent=5 // pred_fallthru
        _
    $region6: #{t5_forward.3} parent=1 // loop_footer
      %s27 = sadd.s32 1, %s23
    $region7: #{t5_forward.3} parent=1 // loop_footer_branch
      %22 = sbr.rel target = $region3
    $region8: #{t5_forward.3} parent=1 // loop_exit
      _
    %2006 = vsyncpa [#allocation3], 1
    %s2007 = scalar_lea.sflag [#allocation3], 1
    %2008 = vsyncpa %s2007, 1
    %2009 = vsyncpa [#allocation5], 1
    %s2010 = scalar_lea.sflag [#allocation5], 1
    %2011 = vsyncpa %s2010, 1

</llo_original>
